<compile_context>
chip_gen: v7x
topology: tpu7x:2x2x1
jax: 0.10.0
libtpu: 0.0.40
codegen_flags: <defaults>
</compile_context>

<pallas_src>
import functools
import math

import jax
import jax.numpy as jnp
from jax import lax
from jax.experimental import pallas as pl
from jax.experimental.pallas import tpu as pltpu

_COMPILER_PARAMS = pltpu.CompilerParams(
    dimension_semantics=("parallel",),          # batch axis -> megacore sharding on v7x
    vmem_limit_bytes=32 * 1024 * 1024,          # safe on v5e/v6e (128 MiB) and v7x (64 MiB)
)

# Flat per-layer parameter ordering (kernel unpacks the variadic refs with these).
_ENC_NAMES = ("wqkv", "bqkv", "wo", "bo",
              "ff_w1", "ff_b1", "ff_w2", "ff_b2",
              "ln1_g", "ln1_b", "ln2_g", "ln2_b")
_DEC_NAMES = ("self_wqkv", "self_bqkv", "self_wo", "self_bo",
              "cross_wq", "cross_bq", "cross_wkv", "cross_bkv",
              "cross_wo", "cross_bo",
              "ff_w1", "ff_b1", "ff_w2", "ff_b2",
              "ln1_g", "ln1_b", "ln2_g", "ln2_b", "ln3_g", "ln3_b")


# ----------------------------- in-kernel helpers -----------------------------

def _dense(x_f32, w_ref, b_ref):
    """bf16 MXU matmul with f32 accumulation + bias (epilogue fused in-kernel)."""
    return (
        jnp.dot(x_f32.astype(jnp.bfloat16), w_ref[...],
                preferred_element_type=jnp.float32)
        + b_ref[...]
    )


def _layernorm(x, g_ref, b_ref):
    """LN(x) with f32 statistics; `x` already contains the fused residual add."""
    mu = jnp.mean(x, axis=-1, keepdims=True)
    var = jnp.mean(jnp.square(x - mu), axis=-1, keepdims=True)
    return (x - mu) * lax.rsqrt(var + 1e-5) * g_ref[...] + b_ref[...]


def _mha(q, k, v, bias, wo_ref, bo_ref, heads):
    """Multi-head attention + output projection, entirely VMEM-resident.

    q:(Sq,E), k/v:(Sk,E) f32; bias:(1,Sk) additive (finite) or None.
    Heads are processed via static lane slices (no (B,H,S,Dh) transposes); the
    head merge is folded into the output projection by accumulating
    o_h @ wo[h*Dh:(h+1)*Dh, :].
    """
    E = q.shape[-1]
    dh = E // heads
    scale = 1.0 / math.sqrt(dh)
    qb = q.astype(jnp.bfloat16)
    kb = k.astype(jnp.bfloat16)
    vb = v.astype(jnp.bfloat16)
    wo = wo_ref[...]
    out = jnp.zeros((q.shape[0], E), jnp.float32)
    for hh in range(heads):                      # static python loop (heads is small)
        lo, hi = hh * dh, (hh + 1) * dh
        s = jnp.einsum("qd,kd->qk", qb[:, lo:hi], kb[:, lo:hi],
                       preferred_element_type=jnp.float32) * scale
        if bias is not None:
            s = s + bias                         # (1, Sk) broadcast over queries
        m = jnp.max(s, axis=-1, keepdims=True)   # stable softmax, f32 on VPU/EUP
        p = jnp.exp(s - m)
        p = p * pl.reciprocal(jnp.sum(p, axis=-1, keepdims=True), approx=True)
        o_h = jnp.einsum("qk,kd->qd", p.astype(jnp.bfloat16), vb[:, lo:hi],
                         preferred_element_type=jnp.float32)          # (Sq, dh)
        out = out + jnp.dot(o_h.astype(jnp.bfloat16), wo[lo:hi, :],
                            preferred_element_type=jnp.float32)
    return out + bo_ref[...]


def _encoder_layer(x, bias, p, heads):
    E = x.shape[-1]
    qkv = _dense(x, p["wqkv"], p["bqkv"])                # fused (S,E)x(E,3E)
    q, k, v = qkv[:, :E], qkv[:, E:2 * E], qkv[:, 2 * E:]
    a = _mha(q, k, v, bias, p["wo"], p["bo"], heads)
    h1 = _layernorm(x + a, p["ln1_g"], p["ln1_b"])       # fused residual + LN
    f = jnp.maximum(_dense(h1, p["ff_w1"], p["ff_b1"]), 0.0)   # ReLU on VPU
    f = _dense(f, p["ff_w2"], p["ff_b2"])
    return _layernorm(h1 + f, p["ln2_g"], p["ln2_b"])


def _decoder_layer(d, enc, bias, p, heads):
    E = d.shape[-1]
    # --- self attention -------------------------------------------------------
    # TODO(synk): the PyTorch Decoder receives (mask, mask); the self-attention
    # mask length does not match the query sequence here, so the mask is applied
    # only to the cross-attention keys (the encoder tokens).
    qkv = _dense(d, p["self_wqkv"], p["self_bqkv"])
    q, k, v = qkv[:, :E], qkv[:, E:2 * E], qkv[:, 2 * E:]
    a = _mha(q, k, v, None, p["self_wo"], p["self_bo"], heads)
    h1 = _layernorm(d + a, p["ln1_g"], p["ln1_b"])
    # --- cross attention over encoder tokens ----------------------------------
    qc = _dense(h1, p["cross_wq"], p["cross_bq"])        # (Sd, E)
    kv = _dense(enc, p["cross_wkv"], p["cross_bkv"])     # (Se, 2E) fused K|V
    kc, vc = kv[:, :E], kv[:, E:]
    c = _mha(qc, kc, vc, bias, p["cross_wo"], p["cross_bo"], heads)
    h2 = _layernorm(h1 + c, p["ln2_g"], p["ln2_b"])
    # --- feed forward ----------------------------------------------------------
    f = jnp.maximum(_dense(h2, p["ff_w1"], p["ff_b1"]), 0.0)
    f = _dense(f, p["ff_w2"], p["ff_b2"])
    return _layernorm(h2 + f, p["ln3_g"], p["ln3_b"])


# ----------------------------- the single fused kernel ------------------------

def _transformer_kernel(x_ref, d_ref, h_ref, mask_ref, *rest, depth, heads):
    tokens_ref, dec_ref = rest[-2:]
    prm = rest[:-2]
    tok_w, tok_b, qry_w, qry_b = prm[:4]
    off = 4
    enc_layers = []
    for _ in range(depth):
        enc_layers.append(dict(zip(_ENC_NAMES, prm[off:off + len(_ENC_NAMES)])))
        off += len(_ENC_NAMES)
    dec_layers = []
    for _ in range(depth):
        dec_layers.append(dict(zip(_DEC_NAMES, prm[off:off + len(_DEC_NAMES)])))
        off += len(_DEC_NAMES)

    x = x_ref[0]                                       # (Sx, Fin) f32
    h_carry = h_ref[0]                                 # (Sh, E)   f32
    d_in = d_ref[0]                                    # (Sd, Fin) f32
    # mask built in-kernel: no O(S^2) bias tensor in HBM; keep it finite.
    bias = jnp.where(mask_ref[0] > 0.0, 0.0, -1e9)     # (1, Se)

    # tokens = token_embedding(x); tokens = cat((tokens, h), dim=1)  -- all in VMEM
    tok = _dense(x, tok_w, tok_b)                      # (Sx, E)
    tokens = jnp.concatenate([tok, h_carry], axis=0)   # (Se, E)
    tokens_ref[0] = tokens

    # x = encoder(tokens, mask)
    enc = tokens
    for p in enc_layers:
        enc = _encoder_layer(enc, bias, p, heads)

    # d = query_embedding(d); d = decoder(d, x, mask, mask, max_agents_len, False)
    # TODO(synk): max_agents_len / the `False` training flag have no visible
    # effect on the compute path here (dropout is 0.0); passed but unused.
    dq = _dense(d_in, qry_w, qry_b)                    # (Sd, E)
    for p in dec_layers:
        dq = _decoder_layer(dq, enc, bias, p, heads)
    dec_ref[0] = dq


# ------------------------------ pallas wrapper --------------------------------

def transferable_transformer_forward(params, args, x, d, h, mask):
    B, Sx, Fin = x.shape
    Sd = d.shape[1]
    Sh = h.shape[1]
    Se = Sx + Sh
    E = args.emb
    depth = args.depth

    mask3 = jnp.asarray(mask, jnp.float32).reshape(B, 1, Se)   # raw key mask

    flat_params = [params["tok_w"], params["tok_b"], params["qry_w"], params["qry_b"]]
    for lp in params["encoder"]:
        flat_params += [lp[n] for n in _ENC_NAMES]
    for lp in params["decoder"]:
        flat_params += [lp[n] for n in _DEC_NAMES]

    in_specs = [
        pl.BlockSpec((1, Sx, Fin), lambda b: (b, 0, 0)),
        pl.BlockSpec((1, Sd, Fin), lambda b: (b, 0, 0)),
        pl.BlockSpec((1, Sh, E), lambda b: (b, 0, 0)),
        pl.BlockSpec((1, 1, Se), lambda b: (b, 0, 0)),
    ] + [pl.BlockSpec(p.shape, lambda b: (0, 0)) for p in flat_params]  # weights stay resident

    out_shapes = (jax.ShapeDtypeStruct((B, Se, E), jnp.float32),   # tokens
                  jax.ShapeDtypeStruct((B, Sd, E), jnp.float32))   # decoder output
    out_specs = (pl.BlockSpec((1, Se, E), lambda b: (b, 0, 0)),
                 pl.BlockSpec((1, Sd, E), lambda b: (b, 0, 0)))

    tokens, dec_out = pl.pallas_call(
        functools.partial(_transformer_kernel, depth=depth, heads=args.heads),
        out_shape=out_shapes,
        grid=(B,),
        in_specs=in_specs,
        out_specs=out_specs,
        compiler_params=_COMPILER_PARAMS,
    )(x, d, h, mask3, *flat_params)
    return dec_out, tokens


# ----------------------------- parameter creation -----------------------------

def _bf(w):
    return w.astype(jnp.bfloat16)


def _row(b):
    return jnp.asarray(b, jnp.float32).reshape(1, -1)


def _init_linear(key, fan_in, fan_out):
    kw, kb = jax.random.split(key)
    bound = 1.0 / math.sqrt(fan_in)
    w = jax.random.uniform(kw, (fan_in, fan_out), jnp.float32, -bound, bound)
    b = jax.random.uniform(kb, (fan_out,), jnp.float32, -bound, bound)
    return w, b


def _init_attn_fused(key, emb):
    kq, kk, kv, ko = jax.random.split(key, 4)
    wq, bq = _init_linear(kq, emb, emb)
    wk, bk = _init_linear(kk, emb, emb)
    wv, bv = _init_linear(kv, emb, emb)
    wo, bo = _init_linear(ko, emb, emb)
    return {
        "wqkv": _bf(jnp.concatenate([wq, wk, wv], axis=1)),
        "bqkv": _row(jnp.concatenate([bq, bk, bv])),
        "wo": _bf(wo), "bo": _row(bo),
        # raw pieces for the cross-attention variant
        "_wq": wq, "_bq": bq, "_wk": wk, "_bk": bk, "_wv": wv, "_bv": bv,
    }


def _init_ffn_ln(key, emb, ff_hidden, n_ln):
    k1, k2 = jax.random.split(key)
    w1, b1 = _init_linear(k1, emb, ff_hidden)
    w2, b2 = _init_linear(k2, ff_hidden, emb)
    p = {"ff_w1": _bf(w1), "ff_b1": _row(b1), "ff_w2": _bf(w2), "ff_b2": _row(b2)}
    for i in range(1, n_ln + 1):
        p[f"ln{i}_g"] = _row(jnp.ones((emb,), jnp.float32))
        p[f"ln{i}_b"] = _row(jnp.zeros((emb,), jnp.float32))
    return p


def _init_encoder_layer(key, emb, ff_hidden):
    ka, kf = jax.random.split(key)
    attn = _init_attn_fused(ka, emb)
    p = {"wqkv": attn["wqkv"], "bqkv": attn["bqkv"], "wo": attn["wo"], "bo": attn["bo"]}
    p.update(_init_ffn_ln(kf, emb, ff_hidden, 2))
    return p


def _init_decoder_layer(key, emb, ff_hidden):
    ks, kc, kf = jax.random.split(key, 3)
    sa = _init_attn_fused(ks, emb)
    ca = _init_attn_fused(kc, emb)
    p = {
        "self_wqkv": sa["wqkv"], "self_bqkv": sa["bqkv"],
        "self_wo": sa["wo"], "self_bo": sa["bo"],
        "cross_wq": _bf(ca["_wq"]), "cross_bq": _row(ca["_bq"]),
        "cross_wkv": _bf(jnp.concatenate([ca["_wk"], ca["_wv"]], axis=1)),
        "cross_bkv": _row(jnp.concatenate([ca["_bk"], ca["_bv"]])),
        "cross_wo": ca["wo"], "cross_bo": ca["bo"],
    }
    p.update(_init_ffn_ln(kf, emb, ff_hidden, 3))
    return p


class Args:
    def __init__(self, emb, heads, depth, ff_mult, max_agents_len):
        self.emb = emb
        self.heads = heads
        self.depth = depth
        self.ff_mult = ff_mult
        self.max_agents_len = max_agents_len


def init_params(key, args, input_dim, output_dim):
    keys = jax.random.split(key, 3 + 2 * args.depth)
    p = {}
    tw, tb = _init_linear(keys[0], input_dim, args.emb)
    qw, qb = _init_linear(keys[1], input_dim, args.emb)
    p["tok_w"], p["tok_b"] = _bf(tw), _row(tb)
    p["qry_w"], p["qry_b"] = _bf(qw), _row(qb)
    # toprobs is defined in __init__ but never used in forward; kept for parity.
    pw, pb = _init_linear(keys[2], args.emb, output_dim)
    p["toprobs_w"], p["toprobs_b"] = _bf(pw), _row(pb)
    ff_hidden = args.ff_mult * args.emb
    p["encoder"] = [_init_encoder_layer(keys[3 + l], args.emb, ff_hidden)
                    for l in range(args.depth)]
    p["decoder"] = [_init_decoder_layer(keys[3 + args.depth + l], args.emb, ff_hidden)
                    for l in range(args.depth)]
    return p


# ------------------------------------ main -------------------------------------

if __name__ == "__main__":
    args = Args(emb=32, heads=4, depth=1, ff_mult=4, max_agents_len=3)
    input_dim = 10
    output_dim = 5
    B, Sx, Sh, Sd = 2, 6, 2, 3

    key = jax.random.PRNGKey(0)
    kp, kx, kd, kh = jax.random.split(key, 4)
    params = init_params(kp, args, input_dim, output_dim)

    x = jax.random.normal(kx, (B, Sx, input_dim), jnp.float32)
    d = jax.random.normal(kd, (B, Sd, input_dim), jnp.float32)
    h = jax.random.normal(kh, (B, Sh, args.emb), jnp.float32)
    mask = jnp.ones((B, Sx + Sh), jnp.float32)

    fwd = jax.jit(lambda prm, xx, dd, hh, mm:
                  transferable_transformer_forward(prm, args, xx, dd, hh, mm))
    dec_out, tokens = fwd(params, x, d, h, mask)
    jax.block_until_ready((dec_out, tokens))

    assert dec_out.shape == (B, Sd, args.emb)
    assert tokens.shape == (B, Sx + Sh, args.emb)
    assert bool(jnp.all(jnp.isfinite(dec_out))) and bool(jnp.all(jnp.isfinite(tokens)))
    print("KERNEL_OK")
</pallas_src>

<mosaic_0001>
module attributes {stable_mosaic.version = 11 : i64} {
  func.func @_transformer_kernel(%arg0: i32, %arg1: memref<1x6x10xf32, #tpu.memory_space<vmem>>, %arg2: memref<1x3x10xf32, #tpu.memory_space<vmem>>, %arg3: memref<1x2x32xf32, #tpu.memory_space<vmem>>, %arg4: memref<1x1x8xf32, #tpu.memory_space<vmem>>, %arg5: memref<10x32xbf16, #tpu.memory_space<vmem>>, %arg6: memref<1x32xf32, #tpu.memory_space<vmem>>, %arg7: memref<10x32xbf16, #tpu.memory_space<vmem>>, %arg8: memref<1x32xf32, #tpu.memory_space<vmem>>, %arg9: memref<32x96xbf16, #tpu.memory_space<vmem>>, %arg10: memref<1x96xf32, #tpu.memory_space<vmem>>, %arg11: memref<32x32xbf16, #tpu.memory_space<vmem>>, %arg12: memref<1x32xf32, #tpu.memory_space<vmem>>, %arg13: memref<32x128xbf16, #tpu.memory_space<vmem>>, %arg14: memref<1x128xf32, #tpu.memory_space<vmem>>, %arg15: memref<128x32xbf16, #tpu.memory_space<vmem>>, %arg16: memref<1x32xf32, #tpu.memory_space<vmem>>, %arg17: memref<1x32xf32, #tpu.memory_space<vmem>>, %arg18: memref<1x32xf32, #tpu.memory_space<vmem>>, %arg19: memref<1x32xf32, #tpu.memory_space<vmem>>, %arg20: memref<1x32xf32, #tpu.memory_space<vmem>>, %arg21: memref<32x96xbf16, #tpu.memory_space<vmem>>, %arg22: memref<1x96xf32, #tpu.memory_space<vmem>>, %arg23: memref<32x32xbf16, #tpu.memory_space<vmem>>, %arg24: memref<1x32xf32, #tpu.memory_space<vmem>>, %arg25: memref<32x32xbf16, #tpu.memory_space<vmem>>, %arg26: memref<1x32xf32, #tpu.memory_space<vmem>>, %arg27: memref<32x64xbf16, #tpu.memory_space<vmem>>, %arg28: memref<1x64xf32, #tpu.memory_space<vmem>>, %arg29: memref<32x32xbf16, #tpu.memory_space<vmem>>, %arg30: memref<1x32xf32, #tpu.memory_space<vmem>>, %arg31: memref<32x128xbf16, #tpu.memory_space<vmem>>, %arg32: memref<1x128xf32, #tpu.memory_space<vmem>>, %arg33: memref<128x32xbf16, #tpu.memory_space<vmem>>, %arg34: memref<1x32xf32, #tpu.memory_space<vmem>>, %arg35: memref<1x32xf32, #tpu.memory_space<vmem>>, %arg36: memref<1x32xf32, #tpu.memory_space<vmem>>, %arg37: memref<1x32xf32, #tpu.memory_space<vmem>>, %arg38: memref<1x32xf32, #tpu.memory_space<vmem>>, %arg39: memref<1x32xf32, #tpu.memory_space<vmem>>, %arg40: memref<1x32xf32, #tpu.memory_space<vmem>>, %arg41: memref<1x8x32xf32, #tpu.memory_space<vmem>>, %arg42: memref<1x3x32xf32, #tpu.memory_space<vmem>>) attributes {dimension_semantics = [#tpu.dimension_semantics<parallel>], iteration_bounds = array<i64: 2>, scalar_prefetch = 0 : i64, scratch_operands = 0 : i64, tpu.core_type = #tpu.core_type<tc>, window_params = [{transform_indices = @transform_0, window_bounds = array<i64: 1, 6, 10>}, {transform_indices = @transform_1, window_bounds = array<i64: 1, 3, 10>}, {transform_indices = @transform_2, window_bounds = array<i64: 1, 2, 32>}, {transform_indices = @transform_3, window_bounds = array<i64: 1, 1, 8>}, {pipeline_mode = #tpu.pipeline_mode<synchronous>, transform_indices = @transform_4, window_bounds = array<i64: 10, 32>}, {pipeline_mode = #tpu.pipeline_mode<synchronous>, transform_indices = @transform_5, window_bounds = array<i64: 1, 32>}, {pipeline_mode = #tpu.pipeline_mode<synchronous>, transform_indices = @transform_6, window_bounds = array<i64: 10, 32>}, {pipeline_mode = #tpu.pipeline_mode<synchronous>, transform_indices = @transform_7, window_bounds = array<i64: 1, 32>}, {pipeline_mode = #tpu.pipeline_mode<synchronous>, transform_indices = @transform_8, window_bounds = array<i64: 32, 96>}, {pipeline_mode = #tpu.pipeline_mode<synchronous>, transform_indices = @transform_9, window_bounds = array<i64: 1, 96>}, {pipeline_mode = #tpu.pipeline_mode<synchronous>, transform_indices = @transform_10, window_bounds = array<i64: 32, 32>}, {pipeline_mode = #tpu.pipeline_mode<synchronous>, transform_indices = @transform_11, window_bounds = array<i64: 1, 32>}, {pipeline_mode = #tpu.pipeline_mode<synchronous>, transform_indices = @transform_12, window_bounds = array<i64: 32, 128>}, {pipeline_mode = #tpu.pipeline_mode<synchronous>, transform_indices = @transform_13, window_bounds = array<i64: 1, 128>}, {pipeline_mode = #tpu.pipeline_mode<synchronous>, transform_indices = @transform_14, window_bounds = array<i64: 128, 32>}, {pipeline_mode = #tpu.pipeline_mode<synchronous>, transform_indices = @transform_15, window_bounds = array<i64: 1, 32>}, {pipeline_mode = #tpu.pipeline_mode<synchronous>, transform_indices = @transform_16, window_bounds = array<i64: 1, 32>}, {pipeline_mode = #tpu.pipeline_mode<synchronous>, transform_indices = @transform_17, window_bounds = array<i64: 1, 32>}, {pipeline_mode = #tpu.pipeline_mode<synchronous>, transform_indices = @transform_18, window_bounds = array<i64: 1, 32>}, {pipeline_mode = #tpu.pipeline_mode<synchronous>, transform_indices = @transform_19, window_bounds = array<i64: 1, 32>}, {pipeline_mode = #tpu.pipeline_mode<synchronous>, transform_indices = @transform_20, window_bounds = array<i64: 32, 96>}, {pipeline_mode = #tpu.pipeline_mode<synchronous>, transform_indices = @transform_21, window_bounds = array<i64: 1, 96>}, {pipeline_mode = #tpu.pipeline_mode<synchronous>, transform_indices = @transform_22, window_bounds = array<i64: 32, 32>}, {pipeline_mode = #tpu.pipeline_mode<synchronous>, transform_indices = @transform_23, window_bounds = array<i64: 1, 32>}, {pipeline_mode = #tpu.pipeline_mode<synchronous>, transform_indices = @transform_24, window_bounds = array<i64: 32, 32>}, {pipeline_mode = #tpu.pipeline_mode<synchronous>, transform_indices = @transform_25, window_bounds = array<i64: 1, 32>}, {pipeline_mode = #tpu.pipeline_mode<synchronous>, transform_indices = @transform_26, window_bounds = array<i64: 32, 64>}, {pipeline_mode = #tpu.pipeline_mode<synchronous>, transform_indices = @transform_27, window_bounds = array<i64: 1, 64>}, {pipeline_mode = #tpu.pipeline_mode<synchronous>, transform_indices = @transform_28, window_bounds = array<i64: 32, 32>}, {pipeline_mode = #tpu.pipeline_mode<synchronous>, transform_indices = @transform_29, window_bounds = array<i64: 1, 32>}, {pipeline_mode = #tpu.pipeline_mode<synchronous>, transform_indices = @transform_30, window_bounds = array<i64: 32, 128>}, {pipeline_mode = #tpu.pipeline_mode<synchronous>, transform_indices = @transform_31, window_bounds = array<i64: 1, 128>}, {pipeline_mode = #tpu.pipeline_mode<synchronous>, transform_indices = @transform_32, window_bounds = array<i64: 128, 32>}, {pipeline_mode = #tpu.pipeline_mode<synchronous>, transform_indices = @transform_33, window_bounds = array<i64: 1, 32>}, {pipeline_mode = #tpu.pipeline_mode<synchronous>, transform_indices = @transform_34, window_bounds = array<i64: 1, 32>}, {pipeline_mode = #tpu.pipeline_mode<synchronous>, transform_indices = @transform_35, window_bounds = array<i64: 1, 32>}, {pipeline_mode = #tpu.pipeline_mode<synchronous>, transform_indices = @transform_36, window_bounds = array<i64: 1, 32>}, {pipeline_mode = #tpu.pipeline_mode<synchronous>, transform_indices = @transform_37, window_bounds = array<i64: 1, 32>}, {pipeline_mode = #tpu.pipeline_mode<synchronous>, transform_indices = @transform_38, window_bounds = array<i64: 1, 32>}, {pipeline_mode = #tpu.pipeline_mode<synchronous>, transform_indices = @transform_39, window_bounds = array<i64: 1, 32>}, {transform_indices = @transform_40, window_bounds = array<i64: 1, 8, 32>}, {transform_indices = @transform_41, window_bounds = array<i64: 1, 3, 32>}]} {
    %c0 = arith.constant 0 : index
    %c0_0 = arith.constant 0 : index
    %c0_1 = arith.constant 0 : index
    %0 = vector.load %arg1[%c0, %c0_0, %c0_1] : memref<1x6x10xf32, #tpu.memory_space<vmem>>, vector<1x6x10xf32>
    %1 = vector.shape_cast %0 : vector<1x6x10xf32> to vector<6x10xf32>
    %c0_2 = arith.constant 0 : index
    %c0_3 = arith.constant 0 : index
    %c0_4 = arith.constant 0 : index
    %2 = vector.load %arg3[%c0_2, %c0_3, %c0_4] : memref<1x2x32xf32, #tpu.memory_space<vmem>>, vector<1x2x32xf32>
    %3 = vector.shape_cast %2 : vector<1x2x32xf32> to vector<2x32xf32>
    %c0_5 = arith.constant 0 : index
    %c0_6 = arith.constant 0 : index
    %c0_7 = arith.constant 0 : index
    %4 = vector.load %arg2[%c0_5, %c0_6, %c0_7] : memref<1x3x10xf32, #tpu.memory_space<vmem>>, vector<1x3x10xf32>
    %5 = vector.shape_cast %4 : vector<1x3x10xf32> to vector<3x10xf32>
    %c0_8 = arith.constant 0 : index
    %c0_9 = arith.constant 0 : index
    %c0_10 = arith.constant 0 : index
    %6 = vector.load %arg4[%c0_8, %c0_9, %c0_10] : memref<1x1x8xf32, #tpu.memory_space<vmem>>, vector<1x1x8xf32>
    %7 = vector.shape_cast %6 : vector<1x1x8xf32> to vector<1x8xf32>
    %cst = arith.constant 0.000000e+00 : f32
    %8 = vector.broadcast %cst : f32 to vector<1x8xf32>
    %9 = arith.cmpf ogt, %7, %8 : vector<1x8xf32>
    %cst_11 = arith.constant 0.000000e+00 : f32
    %cst_12 = arith.constant -1.000000e+09 : f32
    %10 = vector.broadcast %cst_11 : f32 to vector<1x8xf32>
    %11 = vector.broadcast %cst_12 : f32 to vector<1x8xf32>
    %12 = arith.select %9, %10, %11 : vector<1x8xi1>, vector<1x8xf32>
    %13 = arith.truncf %1 : vector<6x10xf32> to vector<6x10xbf16>
    %c0_13 = arith.constant 0 : index
    %c0_14 = arith.constant 0 : index
    %14 = vector.load %arg5[%c0_13, %c0_14] : memref<10x32xbf16, #tpu.memory_space<vmem>>, vector<10x32xbf16>
    %cst_15 = arith.constant dense<0.000000e+00> : vector<6x32xf32>
    %15 = tpu.matmul %13, %14, %cst_15 {dimension_numbers = #tpu.dot_dimension_numbers<[1], [0], [0], [1], [0, 0, 1, 1], [], []>} : vector<6x10xbf16>, vector<10x32xbf16>, vector<6x32xf32> -> vector<6x32xf32>
    %c0_16 = arith.constant 0 : index
    %c0_17 = arith.constant 0 : index
    %16 = vector.load %arg6[%c0_16, %c0_17] : memref<1x32xf32, #tpu.memory_space<vmem>>, vector<1x32xf32>
    %17 = vector.broadcast %16 : vector<1x32xf32> to vector<6x32xf32>
    %18 = arith.addf %15, %17 : vector<6x32xf32>
    %19 = tpu.concatenate %18, %3 in 0 : vector<6x32xf32>, vector<2x32xf32> -> vector<8x32xf32>
    %c0_18 = arith.constant 0 : index
    %c0_19 = arith.constant 0 : index
    %c0_20 = arith.constant 0 : index
    %20 = vector.load %arg41[%c0_18, %c0_19, %c0_20] : memref<1x8x32xf32, #tpu.memory_space<vmem>>, vector<1x8x32xf32>
    %21 = vector.shape_cast %20 : vector<1x8x32xf32> to vector<8x32xf32>
    %22 = vector.shape_cast %19 : vector<8x32xf32> to vector<1x8x32xf32>
    tpu.vector_store %arg41[%c0_18, %c0_19, %c0_20], %22 {strides = array<i32>} : memref<1x8x32xf32, #tpu.memory_space<vmem>>, vector<1x8x32xf32>,
    %23 = arith.truncf %19 : vector<8x32xf32> to vector<8x32xbf16>
    %c0_21 = arith.constant 0 : index
    %c0_22 = arith.constant 0 : index
    %24 = vector.load %arg9[%c0_21, %c0_22] : memref<32x96xbf16, #tpu.memory_space<vmem>>, vector<32x96xbf16>
    %cst_23 = arith.constant dense<0.000000e+00> : vector<8x96xf32>
    %25 = tpu.matmul %23, %24, %cst_23 {dimension_numbers = #tpu.dot_dimension_numbers<[1], [0], [0], [1], [0, 0, 1, 1], [], []>} : vector<8x32xbf16>, vector<32x96xbf16>, vector<8x96xf32> -> vector<8x96xf32>
    %c0_24 = arith.constant 0 : index
    %c0_25 = arith.constant 0 : index
    %26 = vector.load %arg10[%c0_24, %c0_25] : memref<1x96xf32, #tpu.memory_space<vmem>>, vector<1x96xf32>
    %27 = vector.broadcast %26 : vector<1x96xf32> to vector<8x96xf32>
    %28 = arith.addf %25, %27 : vector<8x96xf32>
    %29 = vector.extract_strided_slice %28 {offsets = [0, 0], sizes = [8, 32], strides = [1, 1]} : vector<8x96xf32> to vector<8x32xf32>
    %30 = vector.extract_strided_slice %28 {offsets = [0, 32], sizes = [8, 32], strides = [1, 1]} : vector<8x96xf32> to vector<8x32xf32>
    %31 = vector.extract_strided_slice %28 {offsets = [0, 64], sizes = [8, 32], strides = [1, 1]} : vector<8x96xf32> to vector<8x32xf32>
    %32 = arith.truncf %29 : vector<8x32xf32> to vector<8x32xbf16>
    %33 = arith.truncf %30 : vector<8x32xf32> to vector<8x32xbf16>
    %34 = arith.truncf %31 : vector<8x32xf32> to vector<8x32xbf16>
    %c0_26 = arith.constant 0 : index
    %c0_27 = arith.constant 0 : index
    %35 = vector.load %arg11[%c0_26, %c0_27] : memref<32x32xbf16, #tpu.memory_space<vmem>>, vector<32x32xbf16>
    %cst_28 = arith.constant 0.000000e+00 : f32
    %36 = vector.broadcast %cst_28 : f32 to vector<8x32xf32>
    %37 = vector.extract_strided_slice %32 {offsets = [0, 0], sizes = [8, 8], strides = [1, 1]} : vector<8x32xbf16> to vector<8x8xbf16>
    %38 = vector.extract_strided_slice %33 {offsets = [0, 0], sizes = [8, 8], strides = [1, 1]} : vector<8x32xbf16> to vector<8x8xbf16>
    "tpu.trace_start"() <{level = 10 : i32, message = "qd,kd->qk"}> : () -> ()
    %cst_29 = arith.constant dense<0.000000e+00> : vector<8x8xf32>
    %39 = tpu.matmul %37, %38, %cst_29 {dimension_numbers = #tpu.dot_dimension_numbers<[1], [1], [0], [0], [0, 0, 1, 0], [], []>} : vector<8x8xbf16>, vector<8x8xbf16>, vector<8x8xf32> -> vector<8x8xf32>
    "tpu.trace_stop"() : () -> ()
    %cst_30 = arith.constant 0.353553385 : f32
    %40 = vector.broadcast %cst_30 : f32 to vector<8x8xf32>
    %41 = arith.mulf %39, %40 : vector<8x8xf32>
    %42 = vector.broadcast %12 : vector<1x8xf32> to vector<8x8xf32>
    %43 = arith.addf %41, %42 : vector<8x8xf32>
    %cst_31 = arith.constant dense<0xFF800000> : vector<8xf32>
    %44 = vector.multi_reduction <maximumf>, %43, %cst_31 [1] : vector<8x8xf32> to vector<8xf32>
    %45 = vector.shape_cast %44 : vector<8xf32> to vector<8x1xf32>
    %46 = vector.broadcast %45 : vector<8x1xf32> to vector<8x8xf32>
    %47 = arith.subf %43, %46 : vector<8x8xf32>
    %48 = math.exp %47 : vector<8x8xf32>
    %cst_32 = arith.constant dense<0.000000e+00> : vector<8xf32>
    %49 = vector.multi_reduction <add>, %48, %cst_32 [1] : vector<8x8xf32> to vector<8xf32>
    %50 = vector.shape_cast %49 : vector<8xf32> to vector<8x1xf32>
    %51 = tpu.reciprocal %50 {approx = true} : vector<8x1xf32> -> vector<8x1xf32>
    %52 = vector.broadcast %51 : vector<8x1xf32> to vector<8x8xf32>
    %53 = arith.mulf %48, %52 : vector<8x8xf32>
    %54 = arith.truncf %53 : vector<8x8xf32> to vector<8x8xbf16>
    %55 = vector.extract_strided_slice %34 {offsets = [0, 0], sizes = [8, 8], strides = [1, 1]} : vector<8x32xbf16> to vector<8x8xbf16>
    "tpu.trace_start"() <{level = 10 : i32, message = "qk,kd->qd"}> : () -> ()
    %cst_33 = arith.constant dense<0.000000e+00> : vector<8x8xf32>
    %56 = tpu.matmul %54, %55, %cst_33 {dimension_numbers = #tpu.dot_dimension_numbers<[1], [0], [0], [1], [0, 0, 1, 1], [], []>} : vector<8x8xbf16>, vector<8x8xbf16>, vector<8x8xf32> -> vector<8x8xf32>
    "tpu.trace_stop"() : () -> ()
    %57 = arith.truncf %56 : vector<8x8xf32> to vector<8x8xbf16>
    %58 = vector.extract_strided_slice %35 {offsets = [0, 0], sizes = [8, 32], strides = [1, 1]} : vector<32x32xbf16> to vector<8x32xbf16>
    %cst_34 = arith.constant dense<0.000000e+00> : vector<8x32xf32>
    %59 = tpu.matmul %57, %58, %cst_34 {dimension_numbers = #tpu.dot_dimension_numbers<[1], [0], [0], [1], [0, 0, 1, 1], [], []>} : vector<8x8xbf16>, vector<8x32xbf16>, vector<8x32xf32> -> vector<8x32xf32>
    %60 = arith.addf %36, %59 : vector<8x32xf32>
    %61 = vector.extract_strided_slice %32 {offsets = [0, 8], sizes = [8, 8], strides = [1, 1]} : vector<8x32xbf16> to vector<8x8xbf16>
    %62 = vector.extract_strided_slice %33 {offsets = [0, 8], sizes = [8, 8], strides = [1, 1]} : vector<8x32xbf16> to vector<8x8xbf16>
    "tpu.trace_start"() <{level = 10 : i32, message = "qd,kd->qk"}> : () -> ()
    %cst_35 = arith.constant dense<0.000000e+00> : vector<8x8xf32>
    %63 = tpu.matmul %61, %62, %cst_35 {dimension_numbers = #tpu.dot_dimension_numbers<[1], [1], [0], [0], [0, 0, 1, 0], [], []>} : vector<8x8xbf16>, vector<8x8xbf16>, vector<8x8xf32> -> vector<8x8xf32>
    "tpu.trace_stop"() : () -> ()
    %cst_36 = arith.constant 0.353553385 : f32
    %64 = vector.broadcast %cst_36 : f32 to vector<8x8xf32>
    %65 = arith.mulf %63, %64 : vector<8x8xf32>
    %66 = vector.broadcast %12 : vector<1x8xf32> to vector<8x8xf32>
    %67 = arith.addf %65, %66 : vector<8x8xf32>
    %cst_37 = arith.constant dense<0xFF800000> : vector<8xf32>
    %68 = vector.multi_reduction <maximumf>, %67, %cst_37 [1] : vector<8x8xf32> to vector<8xf32>
    %69 = vector.shape_cast %68 : vector<8xf32> to vector<8x1xf32>
    %70 = vector.broadcast %69 : vector<8x1xf32> to vector<8x8xf32>
    %71 = arith.subf %67, %70 : vector<8x8xf32>
    %72 = math.exp %71 : vector<8x8xf32>
    %cst_38 = arith.constant dense<0.000000e+00> : vector<8xf32>
    %73 = vector.multi_reduction <add>, %72, %cst_38 [1] : vector<8x8xf32> to vector<8xf32>
    %74 = vector.shape_cast %73 : vector<8xf32> to vector<8x1xf32>
    %75 = tpu.reciprocal %74 {approx = true} : vector<8x1xf32> -> vector<8x1xf32>
    %76 = vector.broadcast %75 : vector<8x1xf32> to vector<8x8xf32>
    %77 = arith.mulf %72, %76 : vector<8x8xf32>
    %78 = arith.truncf %77 : vector<8x8xf32> to vector<8x8xbf16>
    %79 = vector.extract_strided_slice %34 {offsets = [0, 8], sizes = [8, 8], strides = [1, 1]} : vector<8x32xbf16> to vector<8x8xbf16>
    "tpu.trace_start"() <{level = 10 : i32, message = "qk,kd->qd"}> : () -> ()
    %cst_39 = arith.constant dense<0.000000e+00> : vector<8x8xf32>
    %80 = tpu.matmul %78, %79, %cst_39 {dimension_numbers = #tpu.dot_dimension_numbers<[1], [0], [0], [1], [0, 0, 1, 1], [], []>} : vector<8x8xbf16>, vector<8x8xbf16>, vector<8x8xf32> -> vector<8x8xf32>
    "tpu.trace_stop"() : () -> ()
    %81 = arith.truncf %80 : vector<8x8xf32> to vector<8x8xbf16>
    %82 = vector.extract_strided_slice %35 {offsets = [8, 0], sizes = [8, 32], strides = [1, 1]} : vector<32x32xbf16> to vector<8x32xbf16>
    %cst_40 = arith.constant dense<0.000000e+00> : vector<8x32xf32>
    %83 = tpu.matmul %81, %82, %cst_40 {dimension_numbers = #tpu.dot_dimension_numbers<[1], [0], [0], [1], [0, 0, 1, 1], [], []>} : vector<8x8xbf16>, vector<8x32xbf16>, vector<8x32xf32> -> vector<8x32xf32>
    %84 = arith.addf %60, %83 : vector<8x32xf32>
    %85 = vector.extract_strided_slice %32 {offsets = [0, 16], sizes = [8, 8], strides = [1, 1]} : vector<8x32xbf16> to vector<8x8xbf16>
    %86 = vector.extract_strided_slice %33 {offsets = [0, 16], sizes = [8, 8], strides = [1, 1]} : vector<8x32xbf16> to vector<8x8xbf16>
    "tpu.trace_start"() <{level = 10 : i32, message = "qd,kd->qk"}> : () -> ()
    %cst_41 = arith.constant dense<0.000000e+00> : vector<8x8xf32>
    %87 = tpu.matmul %85, %86, %cst_41 {dimension_numbers = #tpu.dot_dimension_numbers<[1], [1], [0], [0], [0, 0, 1, 0], [], []>} : vector<8x8xbf16>, vector<8x8xbf16>, vector<8x8xf32> -> vector<8x8xf32>
    "tpu.trace_stop"() : () -> ()
    %cst_42 = arith.constant 0.353553385 : f32
    %88 = vector.broadcast %cst_42 : f32 to vector<8x8xf32>
    %89 = arith.mulf %87, %88 : vector<8x8xf32>
    %90 = vector.broadcast %12 : vector<1x8xf32> to vector<8x8xf32>
    %91 = arith.addf %89, %90 : vector<8x8xf32>
    %cst_43 = arith.constant dense<0xFF800000> : vector<8xf32>
    %92 = vector.multi_reduction <maximumf>, %91, %cst_43 [1] : vector<8x8xf32> to vector<8xf32>
    %93 = vector.shape_cast %92 : vector<8xf32> to vector<8x1xf32>
    %94 = vector.broadcast %93 : vector<8x1xf32> to vector<8x8xf32>
    %95 = arith.subf %91, %94 : vector<8x8xf32>
    %96 = math.exp %95 : vector<8x8xf32>
    %cst_44 = arith.constant dense<0.000000e+00> : vector<8xf32>
    %97 = vector.multi_reduction <add>, %96, %cst_44 [1] : vector<8x8xf32> to vector<8xf32>
    %98 = vector.shape_cast %97 : vector<8xf32> to vector<8x1xf32>
    %99 = tpu.reciprocal %98 {approx = true} : vector<8x1xf32> -> vector<8x1xf32>
    %100 = vector.broadcast %99 : vector<8x1xf32> to vector<8x8xf32>
    %101 = arith.mulf %96, %100 : vector<8x8xf32>
    %102 = arith.truncf %101 : vector<8x8xf32> to vector<8x8xbf16>
    %103 = vector.extract_strided_slice %34 {offsets = [0, 16], sizes = [8, 8], strides = [1, 1]} : vector<8x32xbf16> to vector<8x8xbf16>
    "tpu.trace_start"() <{level = 10 : i32, message = "qk,kd->qd"}> : () -> ()
    %cst_45 = arith.constant dense<0.000000e+00> : vector<8x8xf32>
    %104 = tpu.matmul %102, %103, %cst_45 {dimension_numbers = #tpu.dot_dimension_numbers<[1], [0], [0], [1], [0, 0, 1, 1], [], []>} : vector<8x8xbf16>, vector<8x8xbf16>, vector<8x8xf32> -> vector<8x8xf32>
    "tpu.trace_stop"() : () -> ()
    %105 = arith.truncf %104 : vector<8x8xf32> to vector<8x8xbf16>
    %106 = vector.extract_strided_slice %35 {offsets = [16, 0], sizes = [8, 32], strides = [1, 1]} : vector<32x32xbf16> to vector<8x32xbf16>
    %cst_46 = arith.constant dense<0.000000e+00> : vector<8x32xf32>
    %107 = tpu.matmul %105, %106, %cst_46 {dimension_numbers = #tpu.dot_dimension_numbers<[1], [0], [0], [1], [0, 0, 1, 1], [], []>} : vector<8x8xbf16>, vector<8x32xbf16>, vector<8x32xf32> -> vector<8x32xf32>
    %108 = arith.addf %84, %107 : vector<8x32xf32>
    %109 = vector.extract_strided_slice %32 {offsets = [0, 24], sizes = [8, 8], strides = [1, 1]} : vector<8x32xbf16> to vector<8x8xbf16>
    %110 = vector.extract_strided_slice %33 {offsets = [0, 24], sizes = [8, 8], strides = [1, 1]} : vector<8x32xbf16> to vector<8x8xbf16>
    "tpu.trace_start"() <{level = 10 : i32, message = "qd,kd->qk"}> : () -> ()
    %cst_47 = arith.constant dense<0.000000e+00> : vector<8x8xf32>
    %111 = tpu.matmul %109, %110, %cst_47 {dimension_numbers = #tpu.dot_dimension_numbers<[1], [1], [0], [0], [0, 0, 1, 0], [], []>} : vector<8x8xbf16>, vector<8x8xbf16>, vector<8x8xf32> -> vector<8x8xf32>
    "tpu.trace_stop"() : () -> ()
    %cst_48 = arith.constant 0.353553385 : f32
    %112 = vector.broadcast %cst_48 : f32 to vector<8x8xf32>
    %113 = arith.mulf %111, %112 : vector<8x8xf32>
    %114 = vector.broadcast %12 : vector<1x8xf32> to vector<8x8xf32>
    %115 = arith.addf %113, %114 : vector<8x8xf32>
    %cst_49 = arith.constant dense<0xFF800000> : vector<8xf32>
    %116 = vector.multi_reduction <maximumf>, %115, %cst_49 [1] : vector<8x8xf32> to vector<8xf32>
    %117 = vector.shape_cast %116 : vector<8xf32> to vector<8x1xf32>
    %118 = vector.broadcast %117 : vector<8x1xf32> to vector<8x8xf32>
    %119 = arith.subf %115, %118 : vector<8x8xf32>
    %120 = math.exp %119 : vector<8x8xf32>
    %cst_50 = arith.constant dense<0.000000e+00> : vector<8xf32>
    %121 = vector.multi_reduction <add>, %120, %cst_50 [1] : vector<8x8xf32> to vector<8xf32>
    %122 = vector.shape_cast %121 : vector<8xf32> to vector<8x1xf32>
    %123 = tpu.reciprocal %122 {approx = true} : vector<8x1xf32> -> vector<8x1xf32>
    %124 = vector.broadcast %123 : vector<8x1xf32> to vector<8x8xf32>
    %125 = arith.mulf %120, %124 : vector<8x8xf32>
    %126 = arith.truncf %125 : vector<8x8xf32> to vector<8x8xbf16>
    %127 = vector.extract_strided_slice %34 {offsets = [0, 24], sizes = [8, 8], strides = [1, 1]} : vector<8x32xbf16> to vector<8x8xbf16>
    "tpu.trace_start"() <{level = 10 : i32, message = "qk,kd->qd"}> : () -> ()
    %cst_51 = arith.constant dense<0.000000e+00> : vector<8x8xf32>
    %128 = tpu.matmul %126, %127, %cst_51 {dimension_numbers = #tpu.dot_dimension_numbers<[1], [0], [0], [1], [0, 0, 1, 1], [], []>} : vector<8x8xbf16>, vector<8x8xbf16>, vector<8x8xf32> -> vector<8x8xf32>
    "tpu.trace_stop"() : () -> ()
    %129 = arith.truncf %128 : vector<8x8xf32> to vector<8x8xbf16>
    %130 = vector.extract_strided_slice %35 {offsets = [24, 0], sizes = [8, 32], strides = [1, 1]} : vector<32x32xbf16> to vector<8x32xbf16>
    %cst_52 = arith.constant dense<0.000000e+00> : vector<8x32xf32>
    %131 = tpu.matmul %129, %130, %cst_52 {dimension_numbers = #tpu.dot_dimension_numbers<[1], [0], [0], [1], [0, 0, 1, 1], [], []>} : vector<8x8xbf16>, vector<8x32xbf16>, vector<8x32xf32> -> vector<8x32xf32>
    %132 = arith.addf %108, %131 : vector<8x32xf32>
    %c0_53 = arith.constant 0 : index
    %c0_54 = arith.constant 0 : index
    %133 = vector.load %arg12[%c0_53, %c0_54] : memref<1x32xf32, #tpu.memory_space<vmem>>, vector<1x32xf32>
    %134 = vector.broadcast %133 : vector<1x32xf32> to vector<8x32xf32>
    %135 = arith.addf %132, %134 : vector<8x32xf32>
    %136 = arith.addf %19, %135 : vector<8x32xf32>
    %cst_55 = arith.constant dense<0.000000e+00> : vector<8xf32>
    %137 = vector.multi_reduction <add>, %136, %cst_55 [1] : vector<8x32xf32> to vector<8xf32>
    %138 = vector.shape_cast %137 : vector<8xf32> to vector<8x1xf32>
    %cst_56 = arith.constant 3.200000e+01 : f32
    %139 = vector.broadcast %cst_56 : f32 to vector<8x1xf32>
    %140 = arith.divf %138, %139 : vector<8x1xf32>
    %141 = vector.broadcast %140 : vector<8x1xf32> to vector<8x32xf32>
    %142 = arith.subf %136, %141 : vector<8x32xf32>
    %143 = arith.mulf %142, %142 : vector<8x32xf32>
    %cst_57 = arith.constant dense<0.000000e+00> : vector<8xf32>
    %144 = vector.multi_reduction <add>, %143, %cst_57 [1] : vector<8x32xf32> to vector<8xf32>
    %145 = vector.shape_cast %144 : vector<8xf32> to vector<8x1xf32>
    %cst_58 = arith.constant 3.200000e+01 : f32
    %146 = vector.broadcast %cst_58 : f32 to vector<8x1xf32>
    %147 = arith.divf %145, %146 : vector<8x1xf32>
    %148 = vector.broadcast %140 : vector<8x1xf32> to vector<8x32xf32>
    %149 = arith.subf %136, %148 : vector<8x32xf32>
    %cst_59 = arith.constant 9.99999974E-6 : f32
    %150 = vector.broadcast %cst_59 : f32 to vector<8x1xf32>
    %151 = arith.addf %147, %150 : vector<8x1xf32>
    %152 = math.rsqrt %151 : vector<8x1xf32>
    %153 = vector.broadcast %152 : vector<8x1xf32> to vector<8x32xf32>
    %154 = arith.mulf %149, %153 : vector<8x32xf32>
    %c0_60 = arith.constant 0 : index
    %c0_61 = arith.constant 0 : index
    %155 = vector.load %arg17[%c0_60, %c0_61] : memref<1x32xf32, #tpu.memory_space<vmem>>, vector<1x32xf32>
    %156 = vector.broadcast %155 : vector<1x32xf32> to vector<8x32xf32>
    %157 = arith.mulf %154, %156 : vector<8x32xf32>
    %c0_62 = arith.constant 0 : index
    %c0_63 = arith.constant 0 : index
    %158 = vector.load %arg18[%c0_62, %c0_63] : memref<1x32xf32, #tpu.memory_space<vmem>>, vector<1x32xf32>
    %159 = vector.broadcast %158 : vector<1x32xf32> to vector<8x32xf32>
    %160 = arith.addf %157, %159 : vector<8x32xf32>
    %161 = arith.truncf %160 : vector<8x32xf32> to vector<8x32xbf16>
    %c0_64 = arith.constant 0 : index
    %c0_65 = arith.constant 0 : index
    %162 = vector.load %arg13[%c0_64, %c0_65] : memref<32x128xbf16, #tpu.memory_space<vmem>>, vector<32x128xbf16>
    %cst_66 = arith.constant dense<0.000000e+00> : vector<8x128xf32>
    %163 = tpu.matmul %161, %162, %cst_66 {dimension_numbers = #tpu.dot_dimension_numbers<[1], [0], [0], [1], [0, 0, 1, 1], [], []>} : vector<8x32xbf16>, vector<32x128xbf16>, vector<8x128xf32> -> vector<8x128xf32>
    %c0_67 = arith.constant 0 : index
    %c0_68 = arith.constant 0 : index
    %164 = vector.load %arg14[%c0_67, %c0_68] : memref<1x128xf32, #tpu.memory_space<vmem>>, vector<1x128xf32>
    %165 = vector.broadcast %164 : vector<1x128xf32> to vector<8x128xf32>
    %166 = arith.addf %163, %165 : vector<8x128xf32>
    %cst_69 = arith.constant 0.000000e+00 : f32
    %167 = vector.broadcast %cst_69 : f32 to vector<8x128xf32>
    %168 = arith.maximumf %166, %167 : vector<8x128xf32>
    %169 = arith.truncf %168 : vector<8x128xf32> to vector<8x128xbf16>
    %c0_70 = arith.constant 0 : index
    %c0_71 = arith.constant 0 : index
    %170 = vector.load %arg15[%c0_70, %c0_71] : memref<128x32xbf16, #tpu.memory_space<vmem>>, vector<128x32xbf16>
    %cst_72 = arith.constant dense<0.000000e+00> : vector<8x32xf32>
    %171 = tpu.matmul %169, %170, %cst_72 {dimension_numbers = #tpu.dot_dimension_numbers<[1], [0], [0], [1], [0, 0, 1, 1], [], []>} : vector<8x128xbf16>, vector<128x32xbf16>, vector<8x32xf32> -> vector<8x32xf32>
    %c0_73 = arith.constant 0 : index
    %c0_74 = arith.constant 0 : index
    %172 = vector.load %arg16[%c0_73, %c0_74] : memref<1x32xf32, #tpu.memory_space<vmem>>, vector<1x32xf32>
    %173 = vector.broadcast %172 : vector<1x32xf32> to vector<8x32xf32>
    %174 = arith.addf %171, %173 : vector<8x32xf32>
    %175 = arith.addf %160, %174 : vector<8x32xf32>
    %cst_75 = arith.constant dense<0.000000e+00> : vector<8xf32>
    %176 = vector.multi_reduction <add>, %175, %cst_75 [1] : vector<8x32xf32> to vector<8xf32>
    %177 = vector.shape_cast %176 : vector<8xf32> to vector<8x1xf32>
    %cst_76 = arith.constant 3.200000e+01 : f32
    %178 = vector.broadcast %cst_76 : f32 to vector<8x1xf32>
    %179 = arith.divf %177, %178 : vector<8x1xf32>
    %180 = vector.broadcast %179 : vector<8x1xf32> to vector<8x32xf32>
    %181 = arith.subf %175, %180 : vector<8x32xf32>
    %182 = arith.mulf %181, %181 : vector<8x32xf32>
    %cst_77 = arith.constant dense<0.000000e+00> : vector<8xf32>
    %183 = vector.multi_reduction <add>, %182, %cst_77 [1] : vector<8x32xf32> to vector<8xf32>
    %184 = vector.shape_cast %183 : vector<8xf32> to vector<8x1xf32>
    %cst_78 = arith.constant 3.200000e+01 : f32
    %185 = vector.broadcast %cst_78 : f32 to vector<8x1xf32>
    %186 = arith.divf %184, %185 : vector<8x1xf32>
    %187 = vector.broadcast %179 : vector<8x1xf32> to vector<8x32xf32>
    %188 = arith.subf %175, %187 : vector<8x32xf32>
    %cst_79 = arith.constant 9.99999974E-6 : f32
    %189 = vector.broadcast %cst_79 : f32 to vector<8x1xf32>
    %190 = arith.addf %186, %189 : vector<8x1xf32>
    %191 = math.rsqrt %190 : vector<8x1xf32>
    %192 = vector.broadcast %191 : vector<8x1xf32> to vector<8x32xf32>
    %193 = arith.mulf %188, %192 : vector<8x32xf32>
    %c0_80 = arith.constant 0 : index
    %c0_81 = arith.constant 0 : index
    %194 = vector.load %arg19[%c0_80, %c0_81] : memref<1x32xf32, #tpu.memory_space<vmem>>, vector<1x32xf32>
    %195 = vector.broadcast %194 : vector<1x32xf32> to vector<8x32xf32>
    %196 = arith.mulf %193, %195 : vector<8x32xf32>
    %c0_82 = arith.constant 0 : index
    %c0_83 = arith.constant 0 : index
    %197 = vector.load %arg20[%c0_82, %c0_83] : memref<1x32xf32, #tpu.memory_space<vmem>>, vector<1x32xf32>
    %198 = vector.broadcast %197 : vector<1x32xf32> to vector<8x32xf32>
    %199 = arith.addf %196, %198 : vector<8x32xf32>
    %200 = arith.truncf %5 : vector<3x10xf32> to vector<3x10xbf16>
    %c0_84 = arith.constant 0 : index
    %c0_85 = arith.constant 0 : index
    %201 = vector.load %arg7[%c0_84, %c0_85] : memref<10x32xbf16, #tpu.memory_space<vmem>>, vector<10x32xbf16>
    %cst_86 = arith.constant dense<0.000000e+00> : vector<3x32xf32>
    %202 = tpu.matmul %200, %201, %cst_86 {dimension_numbers = #tpu.dot_dimension_numbers<[1], [0], [0], [1], [0, 0, 1, 1], [], []>} : vector<3x10xbf16>, vector<10x32xbf16>, vector<3x32xf32> -> vector<3x32xf32>
    %c0_87 = arith.constant 0 : index
    %c0_88 = arith.constant 0 : index
    %203 = vector.load %arg8[%c0_87, %c0_88] : memref<1x32xf32, #tpu.memory_space<vmem>>, vector<1x32xf32>
    %204 = vector.broadcast %203 : vector<1x32xf32> to vector<3x32xf32>
    %205 = arith.addf %202, %204 : vector<3x32xf32>
    %206 = arith.truncf %205 : vector<3x32xf32> to vector<3x32xbf16>
    %c0_89 = arith.constant 0 : index
    %c0_90 = arith.constant 0 : index
    %207 = vector.load %arg21[%c0_89, %c0_90] : memref<32x96xbf16, #tpu.memory_space<vmem>>, vector<32x96xbf16>
    %cst_91 = arith.constant dense<0.000000e+00> : vector<3x96xf32>
    %208 = tpu.matmul %206, %207, %cst_91 {dimension_numbers = #tpu.dot_dimension_numbers<[1], [0], [0], [1], [0, 0, 1, 1], [], []>} : vector<3x32xbf16>, vector<32x96xbf16>, vector<3x96xf32> -> vector<3x96xf32>
    %c0_92 = arith.constant 0 : index
    %c0_93 = arith.constant 0 : index
    %209 = vector.load %arg22[%c0_92, %c0_93] : memref<1x96xf32, #tpu.memory_space<vmem>>, vector<1x96xf32>
    %210 = vector.broadcast %209 : vector<1x96xf32> to vector<3x96xf32>
    %211 = arith.addf %208, %210 : vector<3x96xf32>
    %212 = vector.extract_strided_slice %211 {offsets = [0, 0], sizes = [3, 32], strides = [1, 1]} : vector<3x96xf32> to vector<3x32xf32>
    %213 = vector.extract_strided_slice %211 {offsets = [0, 32], sizes = [3, 32], strides = [1, 1]} : vector<3x96xf32> to vector<3x32xf32>
    %214 = vector.extract_strided_slice %211 {offsets = [0, 64], sizes = [3, 32], strides = [1, 1]} : vector<3x96xf32> to vector<3x32xf32>
    %215 = arith.truncf %212 : vector<3x32xf32> to vector<3x32xbf16>
    %216 = arith.truncf %213 : vector<3x32xf32> to vector<3x32xbf16>
    %217 = arith.truncf %214 : vector<3x32xf32> to vector<3x32xbf16>
    %c0_94 = arith.constant 0 : index
    %c0_95 = arith.constant 0 : index
    %218 = vector.load %arg23[%c0_94, %c0_95] : memref<32x32xbf16, #tpu.memory_space<vmem>>, vector<32x32xbf16>
    %cst_96 = arith.constant 0.000000e+00 : f32
    %219 = vector.broadcast %cst_96 : f32 to vector<3x32xf32>
    %220 = vector.extract_strided_slice %215 {offsets = [0, 0], sizes = [3, 8], strides = [1, 1]} : vector<3x32xbf16> to vector<3x8xbf16>
    %221 = vector.extract_strided_slice %216 {offsets = [0, 0], sizes = [3, 8], strides = [1, 1]} : vector<3x32xbf16> to vector<3x8xbf16>
    "tpu.trace_start"() <{level = 10 : i32, message = "qd,kd->qk"}> : () -> ()
    %cst_97 = arith.constant dense<0.000000e+00> : vector<3x3xf32>
    %222 = tpu.matmul %220, %221, %cst_97 {dimension_numbers = #tpu.dot_dimension_numbers<[1], [1], [0], [0], [0, 0, 1, 0], [], []>} : vector<3x8xbf16>, vector<3x8xbf16>, vector<3x3xf32> -> vector<3x3xf32>
    "tpu.trace_stop"() : () -> ()
    %cst_98 = arith.constant 0.353553385 : f32
    %223 = vector.broadcast %cst_98 : f32 to vector<3x3xf32>
    %224 = arith.mulf %222, %223 : vector<3x3xf32>
    %cst_99 = arith.constant dense<0xFF800000> : vector<3xf32>
    %225 = vector.multi_reduction <maximumf>, %224, %cst_99 [1] : vector<3x3xf32> to vector<3xf32>
    %226 = vector.shape_cast %225 : vector<3xf32> to vector<3x1xf32>
    %227 = vector.broadcast %226 : vector<3x1xf32> to vector<3x3xf32>
    %228 = arith.subf %224, %227 : vector<3x3xf32>
    %229 = math.exp %228 : vector<3x3xf32>
    %cst_100 = arith.constant dense<0.000000e+00> : vector<3xf32>
    %230 = vector.multi_reduction <add>, %229, %cst_100 [1] : vector<3x3xf32> to vector<3xf32>
    %231 = vector.shape_cast %230 : vector<3xf32> to vector<3x1xf32>
    %232 = tpu.reciprocal %231 {approx = true} : vector<3x1xf32> -> vector<3x1xf32>
    %233 = vector.broadcast %232 : vector<3x1xf32> to vector<3x3xf32>
    %234 = arith.mulf %229, %233 : vector<3x3xf32>
    %235 = arith.truncf %234 : vector<3x3xf32> to vector<3x3xbf16>
    %236 = vector.extract_strided_slice %217 {offsets = [0, 0], sizes = [3, 8], strides = [1, 1]} : vector<3x32xbf16> to vector<3x8xbf16>
    "tpu.trace_start"() <{level = 10 : i32, message = "qk,kd->qd"}> : () -> ()
    %cst_101 = arith.constant dense<0.000000e+00> : vector<3x8xf32>
    %237 = tpu.matmul %235, %236, %cst_101 {dimension_numbers = #tpu.dot_dimension_numbers<[1], [0], [0], [1], [0, 0, 1, 1], [], []>} : vector<3x3xbf16>, vector<3x8xbf16>, vector<3x8xf32> -> vector<3x8xf32>
    "tpu.trace_stop"() : () -> ()
    %238 = arith.truncf %237 : vector<3x8xf32> to vector<3x8xbf16>
    %239 = vector.extract_strided_slice %218 {offsets = [0, 0], sizes = [8, 32], strides = [1, 1]} : vector<32x32xbf16> to vector<8x32xbf16>
    %cst_102 = arith.constant dense<0.000000e+00> : vector<3x32xf32>
    %240 = tpu.matmul %238, %239, %cst_102 {dimension_numbers = #tpu.dot_dimension_numbers<[1], [0], [0], [1], [0, 0, 1, 1], [], []>} : vector<3x8xbf16>, vector<8x32xbf16>, vector<3x32xf32> -> vector<3x32xf32>
    %241 = arith.addf %219, %240 : vector<3x32xf32>
    %242 = vector.extract_strided_slice %215 {offsets = [0, 8], sizes = [3, 8], strides = [1, 1]} : vector<3x32xbf16> to vector<3x8xbf16>
    %243 = vector.extract_strided_slice %216 {offsets = [0, 8], sizes = [3, 8], strides = [1, 1]} : vector<3x32xbf16> to vector<3x8xbf16>
    "tpu.trace_start"() <{level = 10 : i32, message = "qd,kd->qk"}> : () -> ()
    %cst_103 = arith.constant dense<0.000000e+00> : vector<3x3xf32>
    %244 = tpu.matmul %242, %243, %cst_103 {dimension_numbers = #tpu.dot_dimension_numbers<[1], [1], [0], [0], [0, 0, 1, 0], [], []>} : vector<3x8xbf16>, vector<3x8xbf16>, vector<3x3xf32> -> vector<3x3xf32>
    "tpu.trace_stop"() : () -> ()
    %cst_104 = arith.constant 0.353553385 : f32
    %245 = vector.broadcast %cst_104 : f32 to vector<3x3xf32>
    %246 = arith.mulf %244, %245 : vector<3x3xf32>
    %cst_105 = arith.constant dense<0xFF800000> : vector<3xf32>
    %247 = vector.multi_reduction <maximumf>, %246, %cst_105 [1] : vector<3x3xf32> to vector<3xf32>
    %248 = vector.shape_cast %247 : vector<3xf32> to vector<3x1xf32>
    %249 = vector.broadcast %248 : vector<3x1xf32> to vector<3x3xf32>
    %250 = arith.subf %246, %249 : vector<3x3xf32>
    %251 = math.exp %250 : vector<3x3xf32>
    %cst_106 = arith.constant dense<0.000000e+00> : vector<3xf32>
    %252 = vector.multi_reduction <add>, %251, %cst_106 [1] : vector<3x3xf32> to vector<3xf32>
    %253 = vector.shape_cast %252 : vector<3xf32> to vector<3x1xf32>
    %254 = tpu.reciprocal %253 {approx = true} : vector<3x1xf32> -> vector<3x1xf32>
    %255 = vector.broadcast %254 : vector<3x1xf32> to vector<3x3xf32>
    %256 = arith.mulf %251, %255 : vector<3x3xf32>
    %257 = arith.truncf %256 : vector<3x3xf32> to vector<3x3xbf16>
    %258 = vector.extract_strided_slice %217 {offsets = [0, 8], sizes = [3, 8], strides = [1, 1]} : vector<3x32xbf16> to vector<3x8xbf16>
    "tpu.trace_start"() <{level = 10 : i32, message = "qk,kd->qd"}> : () -> ()
    %cst_107 = arith.constant dense<0.000000e+00> : vector<3x8xf32>
    %259 = tpu.matmul %257, %258, %cst_107 {dimension_numbers = #tpu.dot_dimension_numbers<[1], [0], [0], [1], [0, 0, 1, 1], [], []>} : vector<3x3xbf16>, vector<3x8xbf16>, vector<3x8xf32> -> vector<3x8xf32>
    "tpu.trace_stop"() : () -> ()
    %260 = arith.truncf %259 : vector<3x8xf32> to vector<3x8xbf16>
    %261 = vector.extract_strided_slice %218 {offsets = [8, 0], sizes = [8, 32], strides = [1, 1]} : vector<32x32xbf16> to vector<8x32xbf16>
    %cst_108 = arith.constant dense<0.000000e+00> : vector<3x32xf32>
    %262 = tpu.matmul %260, %261, %cst_108 {dimension_numbers = #tpu.dot_dimension_numbers<[1], [0], [0], [1], [0, 0, 1, 1], [], []>} : vector<3x8xbf16>, vector<8x32xbf16>, vector<3x32xf32> -> vector<3x32xf32>
    %263 = arith.addf %241, %262 : vector<3x32xf32>
    %264 = vector.extract_strided_slice %215 {offsets = [0, 16], sizes = [3, 8], strides = [1, 1]} : vector<3x32xbf16> to vector<3x8xbf16>
    %265 = vector.extract_strided_slice %216 {offsets = [0, 16], sizes = [3, 8], strides = [1, 1]} : vector<3x32xbf16> to vector<3x8xbf16>
    "tpu.trace_start"() <{level = 10 : i32, message = "qd,kd->qk"}> : () -> ()
    %cst_109 = arith.constant dense<0.000000e+00> : vector<3x3xf32>
    %266 = tpu.matmul %264, %265, %cst_109 {dimension_numbers = #tpu.dot_dimension_numbers<[1], [1], [0], [0], [0, 0, 1, 0], [], []>} : vector<3x8xbf16>, vector<3x8xbf16>, vector<3x3xf32> -> vector<3x3xf32>
    "tpu.trace_stop"() : () -> ()
    %cst_110 = arith.constant 0.353553385 : f32
    %267 = vector.broadcast %cst_110 : f32 to vector<3x3xf32>
    %268 = arith.mulf %266, %267 : vector<3x3xf32>
    %cst_111 = arith.constant dense<0xFF800000> : vector<3xf32>
    %269 = vector.multi_reduction <maximumf>, %268, %cst_111 [1] : vector<3x3xf32> to vector<3xf32>
    %270 = vector.shape_cast %269 : vector<3xf32> to vector<3x1xf32>
    %271 = vector.broadcast %270 : vector<3x1xf32> to vector<3x3xf32>
    %272 = arith.subf %268, %271 : vector<3x3xf32>
    %273 = math.exp %272 : vector<3x3xf32>
    %cst_112 = arith.constant dense<0.000000e+00> : vector<3xf32>
    %274 = vector.multi_reduction <add>, %273, %cst_112 [1] : vector<3x3xf32> to vector<3xf32>
    %275 = vector.shape_cast %274 : vector<3xf32> to vector<3x1xf32>
    %276 = tpu.reciprocal %275 {approx = true} : vector<3x1xf32> -> vector<3x1xf32>
    %277 = vector.broadcast %276 : vector<3x1xf32> to vector<3x3xf32>
    %278 = arith.mulf %273, %277 : vector<3x3xf32>
    %279 = arith.truncf %278 : vector<3x3xf32> to vector<3x3xbf16>
    %280 = vector.extract_strided_slice %217 {offsets = [0, 16], sizes = [3, 8], strides = [1, 1]} : vector<3x32xbf16> to vector<3x8xbf16>
    "tpu.trace_start"() <{level = 10 : i32, message = "qk,kd->qd"}> : () -> ()
    %cst_113 = arith.constant dense<0.000000e+00> : vector<3x8xf32>
    %281 = tpu.matmul %279, %280, %cst_113 {dimension_numbers = #tpu.dot_dimension_numbers<[1], [0], [0], [1], [0, 0, 1, 1], [], []>} : vector<3x3xbf16>, vector<3x8xbf16>, vector<3x8xf32> -> vector<3x8xf32>
    "tpu.trace_stop"() : () -> ()
    %282 = arith.truncf %281 : vector<3x8xf32> to vector<3x8xbf16>
    %283 = vector.extract_strided_slice %218 {offsets = [16, 0], sizes = [8, 32], strides = [1, 1]} : vector<32x32xbf16> to vector<8x32xbf16>
    %cst_114 = arith.constant dense<0.000000e+00> : vector<3x32xf32>
    %284 = tpu.matmul %282, %283, %cst_114 {dimension_numbers = #tpu.dot_dimension_numbers<[1], [0], [0], [1], [0, 0, 1, 1], [], []>} : vector<3x8xbf16>, vector<8x32xbf16>, vector<3x32xf32> -> vector<3x32xf32>
    %285 = arith.addf %263, %284 : vector<3x32xf32>
    %286 = vector.extract_strided_slice %215 {offsets = [0, 24], sizes = [3, 8], strides = [1, 1]} : vector<3x32xbf16> to vector<3x8xbf16>
    %287 = vector.extract_strided_slice %216 {offsets = [0, 24], sizes = [3, 8], strides = [1, 1]} : vector<3x32xbf16> to vector<3x8xbf16>
    "tpu.trace_start"() <{level = 10 : i32, message = "qd,kd->qk"}> : () -> ()
    %cst_115 = arith.constant dense<0.000000e+00> : vector<3x3xf32>
    %288 = tpu.matmul %286, %287, %cst_115 {dimension_numbers = #tpu.dot_dimension_numbers<[1], [1], [0], [0], [0, 0, 1, 0], [], []>} : vector<3x8xbf16>, vector<3x8xbf16>, vector<3x3xf32> -> vector<3x3xf32>
    "tpu.trace_stop"() : () -> ()
    %cst_116 = arith.constant 0.353553385 : f32
    %289 = vector.broadcast %cst_116 : f32 to vector<3x3xf32>
    %290 = arith.mulf %288, %289 : vector<3x3xf32>
    %cst_117 = arith.constant dense<0xFF800000> : vector<3xf32>
    %291 = vector.multi_reduction <maximumf>, %290, %cst_117 [1] : vector<3x3xf32> to vector<3xf32>
    %292 = vector.shape_cast %291 : vector<3xf32> to vector<3x1xf32>
    %293 = vector.broadcast %292 : vector<3x1xf32> to vector<3x3xf32>
    %294 = arith.subf %290, %293 : vector<3x3xf32>
    %295 = math.exp %294 : vector<3x3xf32>
    %cst_118 = arith.constant dense<0.000000e+00> : vector<3xf32>
    %296 = vector.multi_reduction <add>, %295, %cst_118 [1] : vector<3x3xf32> to vector<3xf32>
    %297 = vector.shape_cast %296 : vector<3xf32> to vector<3x1xf32>
    %298 = tpu.reciprocal %297 {approx = true} : vector<3x1xf32> -> vector<3x1xf32>
    %299 = vector.broadcast %298 : vector<3x1xf32> to vector<3x3xf32>
    %300 = arith.mulf %295, %299 : vector<3x3xf32>
    %301 = arith.truncf %300 : vector<3x3xf32> to vector<3x3xbf16>
    %302 = vector.extract_strided_slice %217 {offsets = [0, 24], sizes = [3, 8], strides = [1, 1]} : vector<3x32xbf16> to vector<3x8xbf16>
    "tpu.trace_start"() <{level = 10 : i32, message = "qk,kd->qd"}> : () -> ()
    %cst_119 = arith.constant dense<0.000000e+00> : vector<3x8xf32>
    %303 = tpu.matmul %301, %302, %cst_119 {dimension_numbers = #tpu.dot_dimension_numbers<[1], [0], [0], [1], [0, 0, 1, 1], [], []>} : vector<3x3xbf16>, vector<3x8xbf16>, vector<3x8xf32> -> vector<3x8xf32>
    "tpu.trace_stop"() : () -> ()
    %304 = arith.truncf %303 : vector<3x8xf32> to vector<3x8xbf16>
    %305 = vector.extract_strided_slice %218 {offsets = [24, 0], sizes = [8, 32], strides = [1, 1]} : vector<32x32xbf16> to vector<8x32xbf16>
    %cst_120 = arith.constant dense<0.000000e+00> : vector<3x32xf32>
    %306 = tpu.matmul %304, %305, %cst_120 {dimension_numbers = #tpu.dot_dimension_numbers<[1], [0], [0], [1], [0, 0, 1, 1], [], []>} : vector<3x8xbf16>, vector<8x32xbf16>, vector<3x32xf32> -> vector<3x32xf32>
    %307 = arith.addf %285, %306 : vector<3x32xf32>
    %c0_121 = arith.constant 0 : index
    %c0_122 = arith.constant 0 : index
    %308 = vector.load %arg24[%c0_121, %c0_122] : memref<1x32xf32, #tpu.memory_space<vmem>>, vector<1x32xf32>
    %309 = vector.broadcast %308 : vector<1x32xf32> to vector<3x32xf32>
    %310 = arith.addf %307, %309 : vector<3x32xf32>
    %311 = arith.addf %205, %310 : vector<3x32xf32>
    %cst_123 = arith.constant dense<0.000000e+00> : vector<3xf32>
    %312 = vector.multi_reduction <add>, %311, %cst_123 [1] : vector<3x32xf32> to vector<3xf32>
    %313 = vector.shape_cast %312 : vector<3xf32> to vector<3x1xf32>
    %cst_124 = arith.constant 3.200000e+01 : f32
    %314 = vector.broadcast %cst_124 : f32 to vector<3x1xf32>
    %315 = arith.divf %313, %314 : vector<3x1xf32>
    %316 = vector.broadcast %315 : vector<3x1xf32> to vector<3x32xf32>
    %317 = arith.subf %311, %316 : vector<3x32xf32>
    %318 = arith.mulf %317, %317 : vector<3x32xf32>
    %cst_125 = arith.constant dense<0.000000e+00> : vector<3xf32>
    %319 = vector.multi_reduction <add>, %318, %cst_125 [1] : vector<3x32xf32> to vector<3xf32>
    %320 = vector.shape_cast %319 : vector<3xf32> to vector<3x1xf32>
    %cst_126 = arith.constant 3.200000e+01 : f32
    %321 = vector.broadcast %cst_126 : f32 to vector<3x1xf32>
    %322 = arith.divf %320, %321 : vector<3x1xf32>
    %323 = vector.broadcast %315 : vector<3x1xf32> to vector<3x32xf32>
    %324 = arith.subf %311, %323 : vector<3x32xf32>
    %cst_127 = arith.constant 9.99999974E-6 : f32
    %325 = vector.broadcast %cst_127 : f32 to vector<3x1xf32>
    %326 = arith.addf %322, %325 : vector<3x1xf32>
    %327 = math.rsqrt %326 : vector<3x1xf32>
    %328 = vector.broadcast %327 : vector<3x1xf32> to vector<3x32xf32>
    %329 = arith.mulf %324, %328 : vector<3x32xf32>
    %c0_128 = arith.constant 0 : index
    %c0_129 = arith.constant 0 : index
    %330 = vector.load %arg35[%c0_128, %c0_129] : memref<1x32xf32, #tpu.memory_space<vmem>>, vector<1x32xf32>
    %331 = vector.broadcast %330 : vector<1x32xf32> to vector<3x32xf32>
    %332 = arith.mulf %329, %331 : vector<3x32xf32>
    %c0_130 = arith.constant 0 : index
    %c0_131 = arith.constant 0 : index
    %333 = vector.load %arg36[%c0_130, %c0_131] : memref<1x32xf32, #tpu.memory_space<vmem>>, vector<1x32xf32>
    %334 = vector.broadcast %333 : vector<1x32xf32> to vector<3x32xf32>
    %335 = arith.addf %332, %334 : vector<3x32xf32>
    %336 = arith.truncf %335 : vector<3x32xf32> to vector<3x32xbf16>
    %c0_132 = arith.constant 0 : index
    %c0_133 = arith.constant 0 : index
    %337 = vector.load %arg25[%c0_132, %c0_133] : memref<32x32xbf16, #tpu.memory_space<vmem>>, vector<32x32xbf16>
    %cst_134 = arith.constant dense<0.000000e+00> : vector<3x32xf32>
    %338 = tpu.matmul %336, %337, %cst_134 {dimension_numbers = #tpu.dot_dimension_numbers<[1], [0], [0], [1], [0, 0, 1, 1], [], []>} : vector<3x32xbf16>, vector<32x32xbf16>, vector<3x32xf32> -> vector<3x32xf32>
    %c0_135 = arith.constant 0 : index
    %c0_136 = arith.constant 0 : index
    %339 = vector.load %arg26[%c0_135, %c0_136] : memref<1x32xf32, #tpu.memory_space<vmem>>, vector<1x32xf32>
    %340 = vector.broadcast %339 : vector<1x32xf32> to vector<3x32xf32>
    %341 = arith.addf %338, %340 : vector<3x32xf32>
    %342 = arith.truncf %199 : vector<8x32xf32> to vector<8x32xbf16>
    %c0_137 = arith.constant 0 : index
    %c0_138 = arith.constant 0 : index
    %343 = vector.load %arg27[%c0_137, %c0_138] : memref<32x64xbf16, #tpu.memory_space<vmem>>, vector<32x64xbf16>
    %cst_139 = arith.constant dense<0.000000e+00> : vector<8x64xf32>
    %344 = tpu.matmul %342, %343, %cst_139 {dimension_numbers = #tpu.dot_dimension_numbers<[1], [0], [0], [1], [0, 0, 1, 1], [], []>} : vector<8x32xbf16>, vector<32x64xbf16>, vector<8x64xf32> -> vector<8x64xf32>
    %c0_140 = arith.constant 0 : index
    %c0_141 = arith.constant 0 : index
    %345 = vector.load %arg28[%c0_140, %c0_141] : memref<1x64xf32, #tpu.memory_space<vmem>>, vector<1x64xf32>
    %346 = vector.broadcast %345 : vector<1x64xf32> to vector<8x64xf32>
    %347 = arith.addf %344, %346 : vector<8x64xf32>
    %348 = vector.extract_strided_slice %347 {offsets = [0, 0], sizes = [8, 32], strides = [1, 1]} : vector<8x64xf32> to vector<8x32xf32>
    %349 = vector.extract_strided_slice %347 {offsets = [0, 32], sizes = [8, 32], strides = [1, 1]} : vector<8x64xf32> to vector<8x32xf32>
    %350 = arith.truncf %341 : vector<3x32xf32> to vector<3x32xbf16>
    %351 = arith.truncf %348 : vector<8x32xf32> to vector<8x32xbf16>
    %352 = arith.truncf %349 : vector<8x32xf32> to vector<8x32xbf16>
    %c0_142 = arith.constant 0 : index
    %c0_143 = arith.constant 0 : index
    %353 = vector.load %arg29[%c0_142, %c0_143] : memref<32x32xbf16, #tpu.memory_space<vmem>>, vector<32x32xbf16>
    %cst_144 = arith.constant 0.000000e+00 : f32
    %354 = vector.broadcast %cst_144 : f32 to vector<3x32xf32>
    %355 = vector.extract_strided_slice %350 {offsets = [0, 0], sizes = [3, 8], strides = [1, 1]} : vector<3x32xbf16> to vector<3x8xbf16>
    %356 = vector.extract_strided_slice %351 {offsets = [0, 0], sizes = [8, 8], strides = [1, 1]} : vector<8x32xbf16> to vector<8x8xbf16>
    "tpu.trace_start"() <{level = 10 : i32, message = "qd,kd->qk"}> : () -> ()
    %cst_145 = arith.constant dense<0.000000e+00> : vector<3x8xf32>
    %357 = tpu.matmul %355, %356, %cst_145 {dimension_numbers = #tpu.dot_dimension_numbers<[1], [1], [0], [0], [0, 0, 1, 0], [], []>} : vector<3x8xbf16>, vector<8x8xbf16>, vector<3x8xf32> -> vector<3x8xf32>
    "tpu.trace_stop"() : () -> ()
    %cst_146 = arith.constant 0.353553385 : f32
    %358 = vector.broadcast %cst_146 : f32 to vector<3x8xf32>
    %359 = arith.mulf %357, %358 : vector<3x8xf32>
    %360 = vector.broadcast %12 : vector<1x8xf32> to vector<3x8xf32>
    %361 = arith.addf %359, %360 : vector<3x8xf32>
    %cst_147 = arith.constant dense<0xFF800000> : vector<3xf32>
    %362 = vector.multi_reduction <maximumf>, %361, %cst_147 [1] : vector<3x8xf32> to vector<3xf32>
    %363 = vector.shape_cast %362 : vector<3xf32> to vector<3x1xf32>
    %364 = vector.broadcast %363 : vector<3x1xf32> to vector<3x8xf32>
    %365 = arith.subf %361, %364 : vector<3x8xf32>
    %366 = math.exp %365 : vector<3x8xf32>
    %cst_148 = arith.constant dense<0.000000e+00> : vector<3xf32>
    %367 = vector.multi_reduction <add>, %366, %cst_148 [1] : vector<3x8xf32> to vector<3xf32>
    %368 = vector.shape_cast %367 : vector<3xf32> to vector<3x1xf32>
    %369 = tpu.reciprocal %368 {approx = true} : vector<3x1xf32> -> vector<3x1xf32>
    %370 = vector.broadcast %369 : vector<3x1xf32> to vector<3x8xf32>
    %371 = arith.mulf %366, %370 : vector<3x8xf32>
    %372 = arith.truncf %371 : vector<3x8xf32> to vector<3x8xbf16>
    %373 = vector.extract_strided_slice %352 {offsets = [0, 0], sizes = [8, 8], strides = [1, 1]} : vector<8x32xbf16> to vector<8x8xbf16>
    "tpu.trace_start"() <{level = 10 : i32, message = "qk,kd->qd"}> : () -> ()
    %cst_149 = arith.constant dense<0.000000e+00> : vector<3x8xf32>
    %374 = tpu.matmul %372, %373, %cst_149 {dimension_numbers = #tpu.dot_dimension_numbers<[1], [0], [0], [1], [0, 0, 1, 1], [], []>} : vector<3x8xbf16>, vector<8x8xbf16>, vector<3x8xf32> -> vector<3x8xf32>
    "tpu.trace_stop"() : () -> ()
    %375 = arith.truncf %374 : vector<3x8xf32> to vector<3x8xbf16>
    %376 = vector.extract_strided_slice %353 {offsets = [0, 0], sizes = [8, 32], strides = [1, 1]} : vector<32x32xbf16> to vector<8x32xbf16>
    %cst_150 = arith.constant dense<0.000000e+00> : vector<3x32xf32>
    %377 = tpu.matmul %375, %376, %cst_150 {dimension_numbers = #tpu.dot_dimension_numbers<[1], [0], [0], [1], [0, 0, 1, 1], [], []>} : vector<3x8xbf16>, vector<8x32xbf16>, vector<3x32xf32> -> vector<3x32xf32>
    %378 = arith.addf %354, %377 : vector<3x32xf32>
    %379 = vector.extract_strided_slice %350 {offsets = [0, 8], sizes = [3, 8], strides = [1, 1]} : vector<3x32xbf16> to vector<3x8xbf16>
    %380 = vector.extract_strided_slice %351 {offsets = [0, 8], sizes = [8, 8], strides = [1, 1]} : vector<8x32xbf16> to vector<8x8xbf16>
    "tpu.trace_start"() <{level = 10 : i32, message = "qd,kd->qk"}> : () -> ()
    %cst_151 = arith.constant dense<0.000000e+00> : vector<3x8xf32>
    %381 = tpu.matmul %379, %380, %cst_151 {dimension_numbers = #tpu.dot_dimension_numbers<[1], [1], [0], [0], [0, 0, 1, 0], [], []>} : vector<3x8xbf16>, vector<8x8xbf16>, vector<3x8xf32> -> vector<3x8xf32>
    "tpu.trace_stop"() : () -> ()
    %cst_152 = arith.constant 0.353553385 : f32
    %382 = vector.broadcast %cst_152 : f32 to vector<3x8xf32>
    %383 = arith.mulf %381, %382 : vector<3x8xf32>
    %384 = vector.broadcast %12 : vector<1x8xf32> to vector<3x8xf32>
    %385 = arith.addf %383, %384 : vector<3x8xf32>
    %cst_153 = arith.constant dense<0xFF800000> : vector<3xf32>
    %386 = vector.multi_reduction <maximumf>, %385, %cst_153 [1] : vector<3x8xf32> to vector<3xf32>
    %387 = vector.shape_cast %386 : vector<3xf32> to vector<3x1xf32>
    %388 = vector.broadcast %387 : vector<3x1xf32> to vector<3x8xf32>
    %389 = arith.subf %385, %388 : vector<3x8xf32>
    %390 = math.exp %389 : vector<3x8xf32>
    %cst_154 = arith.constant dense<0.000000e+00> : vector<3xf32>
    %391 = vector.multi_reduction <add>, %390, %cst_154 [1] : vector<3x8xf32> to vector<3xf32>
    %392 = vector.shape_cast %391 : vector<3xf32> to vector<3x1xf32>
    %393 = tpu.reciprocal %392 {approx = true} : vector<3x1xf32> -> vector<3x1xf32>
    %394 = vector.broadcast %393 : vector<3x1xf32> to vector<3x8xf32>
    %395 = arith.mulf %390, %394 : vector<3x8xf32>
    %396 = arith.truncf %395 : vector<3x8xf32> to vector<3x8xbf16>
    %397 = vector.extract_strided_slice %352 {offsets = [0, 8], sizes = [8, 8], strides = [1, 1]} : vector<8x32xbf16> to vector<8x8xbf16>
    "tpu.trace_start"() <{level = 10 : i32, message = "qk,kd->qd"}> : () -> ()
    %cst_155 = arith.constant dense<0.000000e+00> : vector<3x8xf32>
    %398 = tpu.matmul %396, %397, %cst_155 {dimension_numbers = #tpu.dot_dimension_numbers<[1], [0], [0], [1], [0, 0, 1, 1], [], []>} : vector<3x8xbf16>, vector<8x8xbf16>, vector<3x8xf32> -> vector<3x8xf32>
    "tpu.trace_stop"() : () -> ()
    %399 = arith.truncf %398 : vector<3x8xf32> to vector<3x8xbf16>
    %400 = vector.extract_strided_slice %353 {offsets = [8, 0], sizes = [8, 32], strides = [1, 1]} : vector<32x32xbf16> to vector<8x32xbf16>
    %cst_156 = arith.constant dense<0.000000e+00> : vector<3x32xf32>
    %401 = tpu.matmul %399, %400, %cst_156 {dimension_numbers = #tpu.dot_dimension_numbers<[1], [0], [0], [1], [0, 0, 1, 1], [], []>} : vector<3x8xbf16>, vector<8x32xbf16>, vector<3x32xf32> -> vector<3x32xf32>
    %402 = arith.addf %378, %401 : vector<3x32xf32>
    %403 = vector.extract_strided_slice %350 {offsets = [0, 16], sizes = [3, 8], strides = [1, 1]} : vector<3x32xbf16> to vector<3x8xbf16>
    %404 = vector.extract_strided_slice %351 {offsets = [0, 16], sizes = [8, 8], strides = [1, 1]} : vector<8x32xbf16> to vector<8x8xbf16>
    "tpu.trace_start"() <{level = 10 : i32, message = "qd,kd->qk"}> : () -> ()
    %cst_157 = arith.constant dense<0.000000e+00> : vector<3x8xf32>
    %405 = tpu.matmul %403, %404, %cst_157 {dimension_numbers = #tpu.dot_dimension_numbers<[1], [1], [0], [0], [0, 0, 1, 0], [], []>} : vector<3x8xbf16>, vector<8x8xbf16>, vector<3x8xf32> -> vector<3x8xf32>
    "tpu.trace_stop"() : () -> ()
    %cst_158 = arith.constant 0.353553385 : f32
    %406 = vector.broadcast %cst_158 : f32 to vector<3x8xf32>
    %407 = arith.mulf %405, %406 : vector<3x8xf32>
    %408 = vector.broadcast %12 : vector<1x8xf32> to vector<3x8xf32>
    %409 = arith.addf %407, %408 : vector<3x8xf32>
    %cst_159 = arith.constant dense<0xFF800000> : vector<3xf32>
    %410 = vector.multi_reduction <maximumf>, %409, %cst_159 [1] : vector<3x8xf32> to vector<3xf32>
    %411 = vector.shape_cast %410 : vector<3xf32> to vector<3x1xf32>
    %412 = vector.broadcast %411 : vector<3x1xf32> to vector<3x8xf32>
    %413 = arith.subf %409, %412 : vector<3x8xf32>
    %414 = math.exp %413 : vector<3x8xf32>
    %cst_160 = arith.constant dense<0.000000e+00> : vector<3xf32>
    %415 = vector.multi_reduction <add>, %414, %cst_160 [1] : vector<3x8xf32> to vector<3xf32>
    %416 = vector.shape_cast %415 : vector<3xf32> to vector<3x1xf32>
    %417 = tpu.reciprocal %416 {approx = true} : vector<3x1xf32> -> vector<3x1xf32>
    %418 = vector.broadcast %417 : vector<3x1xf32> to vector<3x8xf32>
    %419 = arith.mulf %414, %418 : vector<3x8xf32>
    %420 = arith.truncf %419 : vector<3x8xf32> to vector<3x8xbf16>
    %421 = vector.extract_strided_slice %352 {offsets = [0, 16], sizes = [8, 8], strides = [1, 1]} : vector<8x32xbf16> to vector<8x8xbf16>
    "tpu.trace_start"() <{level = 10 : i32, message = "qk,kd->qd"}> : () -> ()
    %cst_161 = arith.constant dense<0.000000e+00> : vector<3x8xf32>
    %422 = tpu.matmul %420, %421, %cst_161 {dimension_numbers = #tpu.dot_dimension_numbers<[1], [0], [0], [1], [0, 0, 1, 1], [], []>} : vector<3x8xbf16>, vector<8x8xbf16>, vector<3x8xf32> -> vector<3x8xf32>
    "tpu.trace_stop"() : () -> ()
    %423 = arith.truncf %422 : vector<3x8xf32> to vector<3x8xbf16>
    %424 = vector.extract_strided_slice %353 {offsets = [16, 0], sizes = [8, 32], strides = [1, 1]} : vector<32x32xbf16> to vector<8x32xbf16>
    %cst_162 = arith.constant dense<0.000000e+00> : vector<3x32xf32>
    %425 = tpu.matmul %423, %424, %cst_162 {dimension_numbers = #tpu.dot_dimension_numbers<[1], [0], [0], [1], [0, 0, 1, 1], [], []>} : vector<3x8xbf16>, vector<8x32xbf16>, vector<3x32xf32> -> vector<3x32xf32>
    %426 = arith.addf %402, %425 : vector<3x32xf32>
    %427 = vector.extract_strided_slice %350 {offsets = [0, 24], sizes = [3, 8], strides = [1, 1]} : vector<3x32xbf16> to vector<3x8xbf16>
    %428 = vector.extract_strided_slice %351 {offsets = [0, 24], sizes = [8, 8], strides = [1, 1]} : vector<8x32xbf16> to vector<8x8xbf16>
    "tpu.trace_start"() <{level = 10 : i32, message = "qd,kd->qk"}> : () -> ()
    %cst_163 = arith.constant dense<0.000000e+00> : vector<3x8xf32>
    %429 = tpu.matmul %427, %428, %cst_163 {dimension_numbers = #tpu.dot_dimension_numbers<[1], [1], [0], [0], [0, 0, 1, 0], [], []>} : vector<3x8xbf16>, vector<8x8xbf16>, vector<3x8xf32> -> vector<3x8xf32>
    "tpu.trace_stop"() : () -> ()
    %cst_164 = arith.constant 0.353553385 : f32
    %430 = vector.broadcast %cst_164 : f32 to vector<3x8xf32>
    %431 = arith.mulf %429, %430 : vector<3x8xf32>
    %432 = vector.broadcast %12 : vector<1x8xf32> to vector<3x8xf32>
    %433 = arith.addf %431, %432 : vector<3x8xf32>
    %cst_165 = arith.constant dense<0xFF800000> : vector<3xf32>
    %434 = vector.multi_reduction <maximumf>, %433, %cst_165 [1] : vector<3x8xf32> to vector<3xf32>
    %435 = vector.shape_cast %434 : vector<3xf32> to vector<3x1xf32>
    %436 = vector.broadcast %435 : vector<3x1xf32> to vector<3x8xf32>
    %437 = arith.subf %433, %436 : vector<3x8xf32>
    %438 = math.exp %437 : vector<3x8xf32>
    %cst_166 = arith.constant dense<0.000000e+00> : vector<3xf32>
    %439 = vector.multi_reduction <add>, %438, %cst_166 [1] : vector<3x8xf32> to vector<3xf32>
    %440 = vector.shape_cast %439 : vector<3xf32> to vector<3x1xf32>
    %441 = tpu.reciprocal %440 {approx = true} : vector<3x1xf32> -> vector<3x1xf32>
    %442 = vector.broadcast %441 : vector<3x1xf32> to vector<3x8xf32>
    %443 = arith.mulf %438, %442 : vector<3x8xf32>
    %444 = arith.truncf %443 : vector<3x8xf32> to vector<3x8xbf16>
    %445 = vector.extract_strided_slice %352 {offsets = [0, 24], sizes = [8, 8], strides = [1, 1]} : vector<8x32xbf16> to vector<8x8xbf16>
    "tpu.trace_start"() <{level = 10 : i32, message = "qk,kd->qd"}> : () -> ()
    %cst_167 = arith.constant dense<0.000000e+00> : vector<3x8xf32>
    %446 = tpu.matmul %444, %445, %cst_167 {dimension_numbers = #tpu.dot_dimension_numbers<[1], [0], [0], [1], [0, 0, 1, 1], [], []>} : vector<3x8xbf16>, vector<8x8xbf16>, vector<3x8xf32> -> vector<3x8xf32>
    "tpu.trace_stop"() : () -> ()
    %447 = arith.truncf %446 : vector<3x8xf32> to vector<3x8xbf16>
    %448 = vector.extract_strided_slice %353 {offsets = [24, 0], sizes = [8, 32], strides = [1, 1]} : vector<32x32xbf16> to vector<8x32xbf16>
    %cst_168 = arith.constant dense<0.000000e+00> : vector<3x32xf32>
    %449 = tpu.matmul %447, %448, %cst_168 {dimension_numbers = #tpu.dot_dimension_numbers<[1], [0], [0], [1], [0, 0, 1, 1], [], []>} : vector<3x8xbf16>, vector<8x32xbf16>, vector<3x32xf32> -> vector<3x32xf32>
    %450 = arith.addf %426, %449 : vector<3x32xf32>
    %c0_169 = arith.constant 0 : index
    %c0_170 = arith.constant 0 : index
    %451 = vector.load %arg30[%c0_169, %c0_170] : memref<1x32xf32, #tpu.memory_space<vmem>>, vector<1x32xf32>
    %452 = vector.broadcast %451 : vector<1x32xf32> to vector<3x32xf32>
    %453 = arith.addf %450, %452 : vector<3x32xf32>
    %454 = arith.addf %335, %453 : vector<3x32xf32>
    %cst_171 = arith.constant dense<0.000000e+00> : vector<3xf32>
    %455 = vector.multi_reduction <add>, %454, %cst_171 [1] : vector<3x32xf32> to vector<3xf32>
    %456 = vector.shape_cast %455 : vector<3xf32> to vector<3x1xf32>
    %cst_172 = arith.constant 3.200000e+01 : f32
    %457 = vector.broadcast %cst_172 : f32 to vector<3x1xf32>
    %458 = arith.divf %456, %457 : vector<3x1xf32>
    %459 = vector.broadcast %458 : vector<3x1xf32> to vector<3x32xf32>
    %460 = arith.subf %454, %459 : vector<3x32xf32>
    %461 = arith.mulf %460, %460 : vector<3x32xf32>
    %cst_173 = arith.constant dense<0.000000e+00> : vector<3xf32>
    %462 = vector.multi_reduction <add>, %461, %cst_173 [1] : vector<3x32xf32> to vector<3xf32>
    %463 = vector.shape_cast %462 : vector<3xf32> to vector<3x1xf32>
    %cst_174 = arith.constant 3.200000e+01 : f32
    %464 = vector.broadcast %cst_174 : f32 to vector<3x1xf32>
    %465 = arith.divf %463, %464 : vector<3x1xf32>
    %466 = vector.broadcast %458 : vector<3x1xf32> to vector<3x32xf32>
    %467 = arith.subf %454, %466 : vector<3x32xf32>
    %cst_175 = arith.constant 9.99999974E-6 : f32
    %468 = vector.broadcast %cst_175 : f32 to vector<3x1xf32>
    %469 = arith.addf %465, %468 : vector<3x1xf32>
    %470 = math.rsqrt %469 : vector<3x1xf32>
    %471 = vector.broadcast %470 : vector<3x1xf32> to vector<3x32xf32>
    %472 = arith.mulf %467, %471 : vector<3x32xf32>
    %c0_176 = arith.constant 0 : index
    %c0_177 = arith.constant 0 : index
    %473 = vector.load %arg37[%c0_176, %c0_177] : memref<1x32xf32, #tpu.memory_space<vmem>>, vector<1x32xf32>
    %474 = vector.broadcast %473 : vector<1x32xf32> to vector<3x32xf32>
    %475 = arith.mulf %472, %474 : vector<3x32xf32>
    %c0_178 = arith.constant 0 : index
    %c0_179 = arith.constant 0 : index
    %476 = vector.load %arg38[%c0_178, %c0_179] : memref<1x32xf32, #tpu.memory_space<vmem>>, vector<1x32xf32>
    %477 = vector.broadcast %476 : vector<1x32xf32> to vector<3x32xf32>
    %478 = arith.addf %475, %477 : vector<3x32xf32>
    %479 = arith.truncf %478 : vector<3x32xf32> to vector<3x32xbf16>
    %c0_180 = arith.constant 0 : index
    %c0_181 = arith.constant 0 : index
    %480 = vector.load %arg31[%c0_180, %c0_181] : memref<32x128xbf16, #tpu.memory_space<vmem>>, vector<32x128xbf16>
    %cst_182 = arith.constant dense<0.000000e+00> : vector<3x128xf32>
    %481 = tpu.matmul %479, %480, %cst_182 {dimension_numbers = #tpu.dot_dimension_numbers<[1], [0], [0], [1], [0, 0, 1, 1], [], []>} : vector<3x32xbf16>, vector<32x128xbf16>, vector<3x128xf32> -> vector<3x128xf32>
    %c0_183 = arith.constant 0 : index
    %c0_184 = arith.constant 0 : index
    %482 = vector.load %arg32[%c0_183, %c0_184] : memref<1x128xf32, #tpu.memory_space<vmem>>, vector<1x128xf32>
    %483 = vector.broadcast %482 : vector<1x128xf32> to vector<3x128xf32>
    %484 = arith.addf %481, %483 : vector<3x128xf32>
    %cst_185 = arith.constant 0.000000e+00 : f32
    %485 = vector.broadcast %cst_185 : f32 to vector<3x128xf32>
    %486 = arith.maximumf %484, %485 : vector<3x128xf32>
    %487 = arith.truncf %486 : vector<3x128xf32> to vector<3x128xbf16>
    %c0_186 = arith.constant 0 : index
    %c0_187 = arith.constant 0 : index
    %488 = vector.load %arg33[%c0_186, %c0_187] : memref<128x32xbf16, #tpu.memory_space<vmem>>, vector<128x32xbf16>
    %cst_188 = arith.constant dense<0.000000e+00> : vector<3x32xf32>
    %489 = tpu.matmul %487, %488, %cst_188 {dimension_numbers = #tpu.dot_dimension_numbers<[1], [0], [0], [1], [0, 0, 1, 1], [], []>} : vector<3x128xbf16>, vector<128x32xbf16>, vector<3x32xf32> -> vector<3x32xf32>
    %c0_189 = arith.constant 0 : index
    %c0_190 = arith.constant 0 : index
    %490 = vector.load %arg34[%c0_189, %c0_190] : memref<1x32xf32, #tpu.memory_space<vmem>>, vector<1x32xf32>
    %491 = vector.broadcast %490 : vector<1x32xf32> to vector<3x32xf32>
    %492 = arith.addf %489, %491 : vector<3x32xf32>
    %493 = arith.addf %478, %492 : vector<3x32xf32>
    %cst_191 = arith.constant dense<0.000000e+00> : vector<3xf32>
    %494 = vector.multi_reduction <add>, %493, %cst_191 [1] : vector<3x32xf32> to vector<3xf32>
    %495 = vector.shape_cast %494 : vector<3xf32> to vector<3x1xf32>
    %cst_192 = arith.constant 3.200000e+01 : f32
    %496 = vector.broadcast %cst_192 : f32 to vector<3x1xf32>
    %497 = arith.divf %495, %496 : vector<3x1xf32>
    %498 = vector.broadcast %497 : vector<3x1xf32> to vector<3x32xf32>
    %499 = arith.subf %493, %498 : vector<3x32xf32>
    %500 = arith.mulf %499, %499 : vector<3x32xf32>
    %cst_193 = arith.constant dense<0.000000e+00> : vector<3xf32>
    %501 = vector.multi_reduction <add>, %500, %cst_193 [1] : vector<3x32xf32> to vector<3xf32>
    %502 = vector.shape_cast %501 : vector<3xf32> to vector<3x1xf32>
    %cst_194 = arith.constant 3.200000e+01 : f32
    %503 = vector.broadcast %cst_194 : f32 to vector<3x1xf32>
    %504 = arith.divf %502, %503 : vector<3x1xf32>
    %505 = vector.broadcast %497 : vector<3x1xf32> to vector<3x32xf32>
    %506 = arith.subf %493, %505 : vector<3x32xf32>
    %cst_195 = arith.constant 9.99999974E-6 : f32
    %507 = vector.broadcast %cst_195 : f32 to vector<3x1xf32>
    %508 = arith.addf %504, %507 : vector<3x1xf32>
    %509 = math.rsqrt %508 : vector<3x1xf32>
    %510 = vector.broadcast %509 : vector<3x1xf32> to vector<3x32xf32>
    %511 = arith.mulf %506, %510 : vector<3x32xf32>
    %c0_196 = arith.constant 0 : index
    %c0_197 = arith.constant 0 : index
    %512 = vector.load %arg39[%c0_196, %c0_197] : memref<1x32xf32, #tpu.memory_space<vmem>>, vector<1x32xf32>
    %513 = vector.broadcast %512 : vector<1x32xf32> to vector<3x32xf32>
    %514 = arith.mulf %511, %513 : vector<3x32xf32>
    %c0_198 = arith.constant 0 : index
    %c0_199 = arith.constant 0 : index
    %515 = vector.load %arg40[%c0_198, %c0_199] : memref<1x32xf32, #tpu.memory_space<vmem>>, vector<1x32xf32>
    %516 = vector.broadcast %515 : vector<1x32xf32> to vector<3x32xf32>
    %517 = arith.addf %514, %516 : vector<3x32xf32>
    %c0_200 = arith.constant 0 : index
    %c0_201 = arith.constant 0 : index
    %c0_202 = arith.constant 0 : index
    %518 = vector.load %arg42[%c0_200, %c0_201, %c0_202] : memref<1x3x32xf32, #tpu.memory_space<vmem>>, vector<1x3x32xf32>
    %519 = vector.shape_cast %518 : vector<1x3x32xf32> to vector<3x32xf32>
    %520 = vector.shape_cast %517 : vector<3x32xf32> to vector<1x3x32xf32>
    tpu.vector_store %arg42[%c0_200, %c0_201, %c0_202], %520 {strides = array<i32>} : memref<1x3x32xf32, #tpu.memory_space<vmem>>, vector<1x3x32xf32>,
    return
  }
  func.func @transform_0(%arg0: i32) -> (i32, i32, i32) {
    %c0_i32 = arith.constant 0 : i32
    %c0_i32_0 = arith.constant 0 : i32
    %c0_i32_1 = arith.constant 0 : i32
    return %arg0, %c0_i32, %c0_i32_0 : i32, i32, i32
  }
  func.func @transform_1(%arg0: i32) -> (i32, i32, i32) {
    %c0_i32 = arith.constant 0 : i32
    %c0_i32_0 = arith.constant 0 : i32
    %c0_i32_1 = arith.constant 0 : i32
    return %arg0, %c0_i32, %c0_i32_0 : i32, i32, i32
  }
  func.func @transform_2(%arg0: i32) -> (i32, i32, i32) {
    %c0_i32 = arith.constant 0 : i32
    %c0_i32_0 = arith.constant 0 : i32
    %c0_i32_1 = arith.constant 0 : i32
    return %arg0, %c0_i32, %c0_i32_0 : i32, i32, i32
  }
  func.func @transform_3(%arg0: i32) -> (i32, i32, i32) {
    %c0_i32 = arith.constant 0 : i32
    %c0_i32_0 = arith.constant 0 : i32
    %c0_i32_1 = arith.constant 0 : i32
    return %arg0, %c0_i32, %c0_i32_0 : i32, i32, i32
  }
  func.func @transform_4(%arg0: i32) -> (i32, i32) {
    %c0_i32 = arith.constant 0 : i32
    %c0_i32_0 = arith.constant 0 : i32
    %c0_i32_1 = arith.constant 0 : i32
    return %c0_i32, %c0_i32_0 : i32, i32
  }
  func.func @transform_5(%arg0: i32) -> (i32, i32) {
    %c0_i32 = arith.constant 0 : i32
    %c0_i32_0 = arith.constant 0 : i32
    %c0_i32_1 = arith.constant 0 : i32
    return %c0_i32, %c0_i32_0 : i32, i32
  }
  func.func @transform_6(%arg0: i32) -> (i32, i32) {
    %c0_i32 = arith.constant 0 : i32
    %c0_i32_0 = arith.constant 0 : i32
    %c0_i32_1 = arith.constant 0 : i32
    return %c0_i32, %c0_i32_0 : i32, i32
  }
  func.func @transform_7(%arg0: i32) -> (i32, i32) {
    %c0_i32 = arith.constant 0 : i32
    %c0_i32_0 = arith.constant 0 : i32
    %c0_i32_1 = arith.constant 0 : i32
    return %c0_i32, %c0_i32_0 : i32, i32
  }
  func.func @transform_8(%arg0: i32) -> (i32, i32) {
    %c0_i32 = arith.constant 0 : i32
    %c0_i32_0 = arith.constant 0 : i32
    %c0_i32_1 = arith.constant 0 : i32
    return %c0_i32, %c0_i32_0 : i32, i32
  }
  func.func @transform_9(%arg0: i32) -> (i32, i32) {
    %c0_i32 = arith.constant 0 : i32
    %c0_i32_0 = arith.constant 0 : i32
    %c0_i32_1 = arith.constant 0 : i32
    return %c0_i32, %c0_i32_0 : i32, i32
  }
  func.func @transform_10(%arg0: i32) -> (i32, i32) {
    %c0_i32 = arith.constant 0 : i32
    %c0_i32_0 = arith.constant 0 : i32
    %c0_i32_1 = arith.constant 0 : i32
    return %c0_i32, %c0_i32_0 : i32, i32
  }
  func.func @transform_11(%arg0: i32) -> (i32, i32) {
    %c0_i32 = arith.constant 0 : i32
    %c0_i32_0 = arith.constant 0 : i32
    %c0_i32_1 = arith.constant 0 : i32
    return %c0_i32, %c0_i32_0 : i32, i32
  }
  func.func @transform_12(%arg0: i32) -> (i32, i32) {
    %c0_i32 = arith.constant 0 : i32
    %c0_i32_0 = arith.constant 0 : i32
    %c0_i32_1 = arith.constant 0 : i32
    return %c0_i32, %c0_i32_0 : i32, i32
  }
  func.func @transform_13(%arg0: i32) -> (i32, i32) {
    %c0_i32 = arith.constant 0 : i32
    %c0_i32_0 = arith.constant 0 : i32
    %c0_i32_1 = arith.constant 0 : i32
    return %c0_i32, %c0_i32_0 : i32, i32
  }
  func.func @transform_14(%arg0: i32) -> (i32, i32) {
    %c0_i32 = arith.constant 0 : i32
    %c0_i32_0 = arith.constant 0 : i32
    %c0_i32_1 = arith.constant 0 : i32
    return %c0_i32, %c0_i32_0 : i32, i32
  }
  func.func @transform_15(%arg0: i32) -> (i32, i32) {
    %c0_i32 = arith.constant 0 : i32
    %c0_i32_0 = arith.constant 0 : i32
    %c0_i32_1 = arith.constant 0 : i32
    return %c0_i32, %c0_i32_0 : i32, i32
  }
  func.func @transform_16(%arg0: i32) -> (i32, i32) {
    %c0_i32 = arith.constant 0 : i32
    %c0_i32_0 = arith.constant 0 : i32
    %c0_i32_1 = arith.constant 0 : i32
    return %c0_i32, %c0_i32_0 : i32, i32
  }
  func.func @transform_17(%arg0: i32) -> (i32, i32) {
    %c0_i32 = arith.constant 0 : i32
    %c0_i32_0 = arith.constant 0 : i32
    %c0_i32_1 = arith.constant 0 : i32
    return %c0_i32, %c0_i32_0 : i32, i32
  }
  func.func @transform_18(%arg0: i32) -> (i32, i32) {
    %c0_i32 = arith.constant 0 : i32
    %c0_i32_0 = arith.constant 0 : i32
    %c0_i32_1 = arith.constant 0 : i32
    return %c0_i32, %c0_i32_0 : i32, i32
  }
  func.func @transform_19(%arg0: i32) -> (i32, i32) {
    %c0_i32 = arith.constant 0 : i32
    %c0_i32_0 = arith.constant 0 : i32
    %c0_i32_1 = arith.constant 0 : i32
    return %c0_i32, %c0_i32_0 : i32, i32
  }
  func.func @transform_20(%arg0: i32) -> (i32, i32) {
    %c0_i32 = arith.constant 0 : i32
    %c0_i32_0 = arith.constant 0 : i32
    %c0_i32_1 = arith.constant 0 : i32
    return %c0_i32, %c0_i32_0 : i32, i32
  }
  func.func @transform_21(%arg0: i32) -> (i32, i32) {
    %c0_i32 = arith.constant 0 : i32
    %c0_i32_0 = arith.constant 0 : i32
    %c0_i32_1 = arith.constant 0 : i32
    return %c0_i32, %c0_i32_0 : i32, i32
  }
  func.func @transform_22(%arg0: i32) -> (i32, i32) {
    %c0_i32 = arith.constant 0 : i32
    %c0_i32_0 = arith.constant 0 : i32
    %c0_i32_1 = arith.constant 0 : i32
    return %c0_i32, %c0_i32_0 : i32, i32
  }
  func.func @transform_23(%arg0: i32) -> (i32, i32) {
    %c0_i32 = arith.constant 0 : i32
    %c0_i32_0 = arith.constant 0 : i32
    %c0_i32_1 = arith.constant 0 : i32
    return %c0_i32, %c0_i32_0 : i32, i32
  }
  func.func @transform_24(%arg0: i32) -> (i32, i32) {
    %c0_i32 = arith.constant 0 : i32
    %c0_i32_0 = arith.constant 0 : i32
    %c0_i32_1 = arith.constant 0 : i32
    return %c0_i32, %c0_i32_0 : i32, i32
  }
  func.func @transform_25(%arg0: i32) -> (i32, i32) {
    %c0_i32 = arith.constant 0 : i32
    %c0_i32_0 = arith.constant 0 : i32
    %c0_i32_1 = arith.constant 0 : i32
    return %c0_i32, %c0_i32_0 : i32, i32
  }
  func.func @transform_26(%arg0: i32) -> (i32, i32) {
    %c0_i32 = arith.constant 0 : i32
    %c0_i32_0 = arith.constant 0 : i32
    %c0_i32_1 = arith.constant 0 : i32
    return %c0_i32, %c0_i32_0 : i32, i32
  }
  func.func @transform_27(%arg0: i32) -> (i32, i32) {
    %c0_i32 = arith.constant 0 : i32
    %c0_i32_0 = arith.constant 0 : i32
    %c0_i32_1 = arith.constant 0 : i32
    return %c0_i32, %c0_i32_0 : i32, i32
  }
  func.func @transform_28(%arg0: i32) -> (i32, i32) {
    %c0_i32 = arith.constant 0 : i32
    %c0_i32_0 = arith.constant 0 : i32
    %c0_i32_1 = arith.constant 0 : i32
    return %c0_i32, %c0_i32_0 : i32, i32
  }
  func.func @transform_29(%arg0: i32) -> (i32, i32) {
    %c0_i32 = arith.constant 0 : i32
    %c0_i32_0 = arith.constant 0 : i32
    %c0_i32_1 = arith.constant 0 : i32
    return %c0_i32, %c0_i32_0 : i32, i32
  }
  func.func @transform_30(%arg0: i32) -> (i32, i32) {
    %c0_i32 = arith.constant 0 : i32
    %c0_i32_0 = arith.constant 0 : i32
    %c0_i32_1 = arith.constant 0 : i32
    return %c0_i32, %c0_i32_0 : i32, i32
  }
  func.func @transform_31(%arg0: i32) -> (i32, i32) {
    %c0_i32 = arith.constant 0 : i32
    %c0_i32_0 = arith.constant 0 : i32
    %c0_i32_1 = arith.constant 0 : i32
    return %c0_i32, %c0_i32_0 : i32, i32
  }
  func.func @transform_32(%arg0: i32) -> (i32, i32) {
    %c0_i32 = arith.constant 0 : i32
    %c0_i32_0 = arith.constant 0 : i32
    %c0_i32_1 = arith.constant 0 : i32
    return %c0_i32, %c0_i32_0 : i32, i32
  }
  func.func @transform_33(%arg0: i32) -> (i32, i32) {
    %c0_i32 = arith.constant 0 : i32
    %c0_i32_0 = arith.constant 0 : i32
    %c0_i32_1 = arith.constant 0 : i32
    return %c0_i32, %c0_i32_0 : i32, i32
  }
  func.func @transform_34(%arg0: i32) -> (i32, i32) {
    %c0_i32 = arith.constant 0 : i32
    %c0_i32_0 = arith.constant 0 : i32
    %c0_i32_1 = arith.constant 0 : i32
    return %c0_i32, %c0_i32_0 : i32, i32
  }
  func.func @transform_35(%arg0: i32) -> (i32, i32) {
    %c0_i32 = arith.constant 0 : i32
    %c0_i32_0 = arith.constant 0 : i32
    %c0_i32_1 = arith.constant 0 : i32
    return %c0_i32, %c0_i32_0 : i32, i32
  }
  func.func @transform_36(%arg0: i32) -> (i32, i32) {
    %c0_i32 = arith.constant 0 : i32
    %c0_i32_0 = arith.constant 0 : i32
    %c0_i32_1 = arith.constant 0 : i32
    return %c0_i32, %c0_i32_0 : i32, i32
  }
  func.func @transform_37(%arg0: i32) -> (i32, i32) {
    %c0_i32 = arith.constant 0 : i32
    %c0_i32_0 = arith.constant 0 : i32
    %c0_i32_1 = arith.constant 0 : i32
    return %c0_i32, %c0_i32_0 : i32, i32
  }
  func.func @transform_38(%arg0: i32) -> (i32, i32) {
    %c0_i32 = arith.constant 0 : i32
    %c0_i32_0 = arith.constant 0 : i32
    %c0_i32_1 = arith.constant 0 : i32
    return %c0_i32, %c0_i32_0 : i32, i32
  }
  func.func @transform_39(%arg0: i32) -> (i32, i32) {
    %c0_i32 = arith.constant 0 : i32
    %c0_i32_0 = arith.constant 0 : i32
    %c0_i32_1 = arith.constant 0 : i32
    return %c0_i32, %c0_i32_0 : i32, i32
  }
  func.func @transform_40(%arg0: i32) -> (i32, i32, i32) {
    %c0_i32 = arith.constant 0 : i32
    %c0_i32_0 = arith.constant 0 : i32
    %c0_i32_1 = arith.constant 0 : i32
    return %arg0, %c0_i32, %c0_i32_0 : i32, i32, i32
  }
  func.func @transform_41(%arg0: i32) -> (i32, i32, i32) {
    %c0_i32 = arith.constant 0 : i32
    %c0_i32_0 = arith.constant 0 : i32
    %c0_i32_1 = arith.constant 0 : i32
    return %arg0, %c0_i32, %c0_i32_0 : i32, i32, i32
  }
}

</mosaic_0001>

<llo_original>
// kernel: _lambda_.1
$region0: #{_lambda_.1}
  #allocation0 [shape = 'u32[]', space=smem, size = 0x4, offset = 0x4, fixed_abs, tag = 'smem constant byte address 0x4 - core index']
  #allocation1 [shape = 'u32[144,128]{1,0:T(1,128)}', space=vmem, size = 0x12000, scoped, tag = 'internal scratch']
  %s0 = inlined_call_operand.smem [shape: u32[42], index: -1, kind: input, shape index: {}]
  %s1 = sld [smem:[%s0]]
  %s2 = scalar_lea.smem %s0, 1
  %s3 = sld [smem:[%s2]]
  %s4 = scalar_lea.smem %s0, 2
  %s5 = sld [smem:[%s4]]
  %s6 = scalar_lea.smem %s0, 3
  %s7 = sld [smem:[%s6]]
  %s8 = scalar_lea.smem %s0, 4
  %s9 = sld [smem:[%s8]]
  %s10 = scalar_lea.smem %s0, 5
  %s11 = sld [smem:[%s10]]
  %s12 = scalar_lea.smem %s0, 6
  %s13 = sld [smem:[%s12]]
  %s14 = scalar_lea.smem %s0, 7
  %s15 = sld [smem:[%s14]]
  %s16 = scalar_lea.smem %s0, 8
  %s17 = sld [smem:[%s16]]
  %s18 = scalar_lea.smem %s0, 9
  %s19 = sld [smem:[%s18]]
  %s20 = scalar_lea.smem %s0, 10
  %s21 = sld [smem:[%s20]]
  %s22 = scalar_lea.smem %s0, 11
  %s23 = sld [smem:[%s22]]
  %s24 = scalar_lea.smem %s0, 12
  %s25 = sld [smem:[%s24]]
  %s26 = scalar_lea.smem %s0, 13
  %s27 = sld [smem:[%s26]]
  %s28 = scalar_lea.smem %s0, 14
  %s29 = sld [smem:[%s28]]
  %s30 = scalar_lea.smem %s0, 15
  %s31 = sld [smem:[%s30]]
  %s32 = scalar_lea.smem %s0, 16
  %s33 = sld [smem:[%s32]]
  %s34 = scalar_lea.smem %s0, 17
  %s35 = sld [smem:[%s34]]
  %s36 = scalar_lea.smem %s0, 18
  %s37 = sld [smem:[%s36]]
  %s38 = scalar_lea.smem %s0, 19
  %s39 = sld [smem:[%s38]]
  %s40 = scalar_lea.smem %s0, 20
  %s41 = sld [smem:[%s40]]
  %s42 = scalar_lea.smem %s0, 21
  %s43 = sld [smem:[%s42]]
  %s44 = scalar_lea.smem %s0, 22
  %s45 = sld [smem:[%s44]]
  %s46 = scalar_lea.smem %s0, 23
  %s47 = sld [smem:[%s46]]
  %s48 = scalar_lea.smem %s0, 24
  %s49 = sld [smem:[%s48]]
  %s50 = scalar_lea.smem %s0, 25
  %s51 = sld [smem:[%s50]]
  %s52 = scalar_lea.smem %s0, 26
  %s53 = sld [smem:[%s52]]
  %s54 = scalar_lea.smem %s0, 27
  %s55 = sld [smem:[%s54]]
  %s56 = scalar_lea.smem %s0, 28
  %s57 = sld [smem:[%s56]]
  %s58 = scalar_lea.smem %s0, 29
  %s59 = sld [smem:[%s58]]
  %s60 = scalar_lea.smem %s0, 30
  %s61 = sld [smem:[%s60]]
  %s62 = scalar_lea.smem %s0, 31
  %s63 = sld [smem:[%s62]]
  %s64 = scalar_lea.smem %s0, 32
  %s65 = sld [smem:[%s64]]
  %s66 = scalar_lea.smem %s0, 33
  %s67 = sld [smem:[%s66]]
  %s68 = scalar_lea.smem %s0, 34
  %s69 = sld [smem:[%s68]]
  %s70 = scalar_lea.smem %s0, 35
  %s71 = sld [smem:[%s70]]
  %s72 = scalar_lea.smem %s0, 36
  %s73 = sld [smem:[%s72]]
  %s74 = scalar_lea.smem %s0, 37
  %s75 = sld [smem:[%s74]]
  %s76 = scalar_lea.smem %s0, 38
  %s77 = sld [smem:[%s76]]
  %s78 = scalar_lea.smem %s0, 39
  %s79 = sld [smem:[%s78]]
  %s80 = scalar_lea.smem %s0, 40
  %s81 = sld [smem:[%s80]]
  %s82 = scalar_lea.smem %s0, 41
  %s83 = sld [smem:[%s82]]
  %84 = xla_tuple %s81, %s83
  %s85 = sld [smem:[#allocation0]]
  $region217: #{_lambda_.1} parent=0
    _
  %s87 = ssub.s32 1, %s85
  %s88 = scalar_select 0, %s87, %s85
  $region1: #{_lambda_.1} parent=0
    #allocation2 [shape = 'u8[512]{0}', space=vmem, size = 0x400, scoped, tag = 'input window, operand 25, single buffered']
    #allocation3 [shape = 's32[2]{0}', space=sflag, size = 0x8, scoped, tag = 'scoped memory for _lambda_.1']
    #allocation4 [shape = 's32[2]{0}', space=sflag, size = 0x8, scoped, tag = 'scoped memory for _lambda_.1']
    #allocation5 [shape = 'u8[512]{0}', space=vmem, size = 0x400, scoped, tag = 'input window, operand 27, single buffered']
    #allocation6 [shape = 's32[1]{0}', space=sflag, size = 0x4, scoped, tag = 'scoped memory for _lambda_.1']
    #allocation7 [shape = 'u8[512]{0}', space=vmem, size = 0x400, scoped, tag = 'input window, operand 29, single buffered']
    #allocation8 [shape = 'u8[512]{0}', space=vmem, size = 0x400, scoped, tag = 'input window, operand 31, single buffered']
    #allocation9 [shape = 's32[1]{0}', space=sflag, size = 0x4, scoped, tag = 'scoped memory for _lambda_.1']
    #allocation10 [shape = 'u8[8192]{0}', space=vmem, size = 0x2000, scoped, tag = 'output window, operand 0']
    %89 = vsyncpa [#allocation3], 0
    %90 = vsyncpa [#allocation6], 0
    %91 = vsyncpa [#allocation9], 0
    %92 = vsyncpa [#allocation4], 0
    %s93 = scalar_lea.sflag [#allocation4], 1
    %94 = vsyncpa %s93, 0
    loop: start=0, step=1, limit=4
    $region2: #{_lambda_.1} parent=1 // loop_pre_header
      _
    $region3: #{_lambda_.1} parent=1 // loop_header
      %s96 = sphi 0, %s100
      %p97 = scmp.ge.s32.totalorder %s96, 4
      %s106 = sphi 0, %s108
      %s109 = sphi 0, %s106
      %s110 = sphi 0, %s109
      %s126 = sphi 0, %s110
      %s132 = sphi 0, %s134
      %s135 = sphi 0, %s132
      %s136 = sphi 0, %s135
      %s152 = sphi 0, %s136
      %s158 = sphi 0, %s160
      %s161 = sphi 0, %s158
      %s162 = sphi 0, %s161
      %s178 = sphi 0, %s162
      %s184 = sphi 0, %s186
      %s187 = sphi 0, %s184
      %s188 = sphi 0, %s187
      %s204 = sphi 0, %s188
      %s208 = sphi 0, %s208
      %s210 = sphi 0, %s208
      %s211 = sphi 0, %s210
      %s225 = sphi 0, %s211
      %s229 = sphi 0, %s229
      %s231 = sphi 0, %s229
      %s232 = sphi 0, %s231
      %s246 = sphi 0, %s232
      %s250 = sphi 0, %s250
      %s252 = sphi 0, %s250
      %s253 = sphi 0, %s252
      %s267 = sphi 0, %s253
      %s271 = sphi 0, %s271
      %s273 = sphi 0, %s271
      %s274 = sphi 0, %s273
      %s288 = sphi 0, %s274
      %s292 = sphi 0, %s292
      %s294 = sphi 0, %s292
      %s295 = sphi 0, %s294
      %s309 = sphi 0, %s295
      %s313 = sphi 0, %s313
      %s315 = sphi 0, %s313
      %s316 = sphi 0, %s315
      %s330 = sphi 0, %s316
      %s334 = sphi 0, %s334
      %s336 = sphi 0, %s334
      %s337 = sphi 0, %s336
      %s351 = sphi 0, %s337
      %s355 = sphi 0, %s355
      %s357 = sphi 0, %s355
      %s358 = sphi 0, %s357
      %s372 = sphi 0, %s358
      %s376 = sphi 0, %s376
      %s378 = sphi 0, %s376
      %s379 = sphi 0, %s378
      %s393 = sphi 0, %s379
      %s397 = sphi 0, %s397
      %s399 = sphi 0, %s397
      %s400 = sphi 0, %s399
      %s414 = sphi 0, %s400
      %s418 = sphi 0, %s418
      %s420 = sphi 0, %s418
      %s421 = sphi 0, %s420
      %s435 = sphi 0, %s421
      %s439 = sphi 0, %s439
      %s441 = sphi 0, %s439
      %s442 = sphi 0, %s441
      %s456 = sphi 0, %s442
      %s460 = sphi 0, %s460
      %s462 = sphi 0, %s460
      %s463 = sphi 0, %s462
      %s477 = sphi 0, %s463
      %s481 = sphi 0, %s481
      %s483 = sphi 0, %s481
      %s484 = sphi 0, %s483
      %s498 = sphi 0, %s484
      %s502 = sphi 0, %s502
      %s504 = sphi 0, %s502
      %s505 = sphi 0, %s504
      %s519 = sphi 0, %s505
      %s523 = sphi 0, %s523
      %s525 = sphi 0, %s523
      %s526 = sphi 0, %s525
      %s540 = sphi 0, %s526
      %s544 = sphi 0, %s544
      %s546 = sphi 0, %s544
      %s547 = sphi 0, %s546
      %s561 = sphi 0, %s547
      %s565 = sphi 0, %s565
      %s567 = sphi 0, %s565
      %s568 = sphi 0, %s567
      %s582 = sphi 0, %s568
      %s586 = sphi 0, %s586
      %s588 = sphi 0, %s586
      %s589 = sphi 0, %s588
      %s603 = sphi 0, %s589
      %s607 = sphi 0, %s607
      %s609 = sphi 0, %s607
      %s610 = sphi 0, %s609
      %s624 = sphi 0, %s610
      %s628 = sphi 0, %s628
      %s630 = sphi 0, %s628
      %s631 = sphi 0, %s630
      %s645 = sphi 0, %s631
      %s649 = sphi 0, %s649
      %s651 = sphi 0, %s649
      %s652 = sphi 0, %s651
      %s666 = sphi 0, %s652
      %s670 = sphi 0, %s670
      %s672 = sphi 0, %s670
      %s673 = sphi 0, %s672
      %s687 = sphi 0, %s673
      %s691 = sphi 0, %s691
      %s693 = sphi 0, %s691
      %s694 = sphi 0, %s693
      %s708 = sphi 0, %s694
      %s712 = sphi 0, %s712
      %s714 = sphi 0, %s712
      %s715 = sphi 0, %s714
      %s729 = sphi 0, %s715
      %s733 = sphi 0, %s733
      %s735 = sphi 0, %s733
      %s736 = sphi 0, %s735
      %s750 = sphi 0, %s736
      %s754 = sphi 0, %s754
      %s756 = sphi 0, %s754
      %s757 = sphi 0, %s756
      %s771 = sphi 0, %s757
      %s775 = sphi 0, %s775
      %s777 = sphi 0, %s775
      %s778 = sphi 0, %s777
      %s792 = sphi 0, %s778
      %s796 = sphi 0, %s796
      %s798 = sphi 0, %s796
      %s799 = sphi 0, %s798
      %s813 = sphi 0, %s799
      %s817 = sphi 0, %s817
      %s819 = sphi 0, %s817
      %s820 = sphi 0, %s819
      %s834 = sphi 0, %s820
      %s838 = sphi 0, %s838
      %s840 = sphi 0, %s838
      %s841 = sphi 0, %s840
      %s855 = sphi 0, %s841
      %s859 = sphi 0, %s859
      %s861 = sphi 0, %s859
      %s862 = sphi 0, %s861
      %s876 = sphi 0, %s862
      %s880 = sphi 0, %s880
      %s882 = sphi 0, %s880
      %s883 = sphi 0, %s882
      %s897 = sphi 0, %s883
      %s901 = sphi 0, %s901
      %s903 = sphi 0, %s901
      %s904 = sphi 0, %s903
      %s918 = sphi 0, %s904
      %s922 = sphi 0, %s922
      %s924 = sphi 0, %s922
      %s925 = sphi 0, %s924
      %s939 = sphi 0, %s925
      %s943 = sphi 0, %s943
      %s945 = sphi 0, %s943
      %s946 = sphi 0, %s945
      %s960 = sphi 0, %s946
      %s966 = sphi 0, %s968
      %s969 = sphi 0, %s966
      %s970 = sphi 0, %s969
      %s986 = sphi 0, %s970
      %s992 = sphi 0, %s994
      %s995 = sphi 0, %s992
      %s996 = sphi 0, %s995
      %s1012 = sphi 0, %s996
    $region4: #{_lambda_.1} parent=1 // loop_header_branch
      %99 = sbr.rel (%p97) target = $region8
    $region5: #{_lambda_.1} parent=1 // loop_body
      %s101 = ssub.s32 %s96, 1
      %s102 = ssub.s32 %s96, 2
      %s103 = sadd.s32 %s96, 1
      %s104 = ssub.s32 %s96, %s103
      %p105 = scmp.eq.s32.totalorder %s104, 0
      %s107 = sadd.s32 %s106, 1
      %s108 = scalar_select %p105, %s106, %s107
      %p111 = pneg %p105
      %p112 = scmp.eq.s32.totalorder %s96, 1
      %p113 = por %p111, %p112
      %p114 = scmp.ne.s32.totalorder %s106, %s109
      %p115 = scmp.eq.s32.totalorder %s96, 0
      %p116 = por %p114, %p115
      %p117 = scmp.ne.s32.totalorder %s106, %s109
      %p118 = scmp.eq.s32.totalorder %s101, 1
      %p119 = por %p117, %p118
      %p120 = scmp.ne.s32.totalorder %s109, %s110
      %p121 = scmp.eq.s32.totalorder %s101, 0
      %p122 = por %p120, %p121
      %p123 = scmp.ne.s32.totalorder %s109, %s110
      %p124 = scmp.eq.s32.totalorder %s102, 1
      %p125 = por %p123, %p124
      %p127 = scmp.ne.s32.totalorder %s110, %s126
      %p128 = scmp.eq.s32.totalorder %s102, 0
      %p129 = por %p127, %p128
      %s130 = ssub.s32 %s96, %s103
      %p131 = scmp.eq.s32.totalorder %s130, 0
      %s133 = sadd.s32 %s132, 1
      %s134 = scalar_select %p131, %s132, %s133
      %p137 = pneg %p131
      %p138 = scmp.eq.s32.totalorder %s96, 1
      %p139 = por %p137, %p138
      %p140 = scmp.ne.s32.totalorder %s132, %s135
      %p141 = scmp.eq.s32.totalorder %s96, 0
      %p142 = por %p140, %p141
      %p143 = scmp.ne.s32.totalorder %s132, %s135
      %p144 = scmp.eq.s32.totalorder %s101, 1
      %p145 = por %p143, %p144
      %p146 = scmp.ne.s32.totalorder %s135, %s136
      %p147 = scmp.eq.s32.totalorder %s101, 0
      %p148 = por %p146, %p147
      %p149 = scmp.ne.s32.totalorder %s135, %s136
      %p150 = scmp.eq.s32.totalorder %s102, 1
      %p151 = por %p149, %p150
      %p153 = scmp.ne.s32.totalorder %s136, %s152
      %p154 = scmp.eq.s32.totalorder %s102, 0
      %p155 = por %p153, %p154
      %s156 = ssub.s32 %s96, %s103
      %p157 = scmp.eq.s32.totalorder %s156, 0
      %s159 = sadd.s32 %s158, 1
      %s160 = scalar_select %p157, %s158, %s159
      %p163 = pneg %p157
      %p164 = scmp.eq.s32.totalorder %s96, 1
      %p165 = por %p163, %p164
      %p166 = scmp.ne.s32.totalorder %s158, %s161
      %p167 = scmp.eq.s32.totalorder %s96, 0
      %p168 = por %p166, %p167
      %p169 = scmp.ne.s32.totalorder %s158, %s161
      %p170 = scmp.eq.s32.totalorder %s101, 1
      %p171 = por %p169, %p170
      %p172 = scmp.ne.s32.totalorder %s161, %s162
      %p173 = scmp.eq.s32.totalorder %s101, 0
      %p174 = por %p172, %p173
      %p175 = scmp.ne.s32.totalorder %s161, %s162
      %p176 = scmp.eq.s32.totalorder %s102, 1
      %p177 = por %p175, %p176
      %p179 = scmp.ne.s32.totalorder %s162, %s178
      %p180 = scmp.eq.s32.totalorder %s102, 0
      %p181 = por %p179, %p180
      %s182 = ssub.s32 %s96, %s103
      %p183 = scmp.eq.s32.totalorder %s182, 0
      %s185 = sadd.s32 %s184, 1
      %s186 = scalar_select %p183, %s184, %s185
      %p189 = pneg %p183
      %p190 = scmp.eq.s32.totalorder %s96, 1
      %p191 = por %p189, %p190
      %p192 = scmp.ne.s32.totalorder %s184, %s187
      %p193 = scmp.eq.s32.totalorder %s96, 0
      %p194 = por %p192, %p193
      %p195 = scmp.ne.s32.totalorder %s184, %s187
      %p196 = scmp.eq.s32.totalorder %s101, 1
      %p197 = por %p195, %p196
      %p198 = scmp.ne.s32.totalorder %s187, %s188
      %p199 = scmp.eq.s32.totalorder %s101, 0
      %p200 = por %p198, %p199
      %p201 = scmp.ne.s32.totalorder %s187, %s188
      %p202 = scmp.eq.s32.totalorder %s102, 1
      %p203 = por %p201, %p202
      %p205 = scmp.ne.s32.totalorder %s188, %s204
      %p206 = scmp.eq.s32.totalorder %s102, 0
      %p207 = por %p205, %p206
      %s209 = sadd.s32 %s208, 1
      %p212 = scmp.eq.s32.totalorder %s96, 1
      %p213 = scmp.ne.s32.totalorder %s208, %s210
      %p214 = scmp.eq.s32.totalorder %s96, 0
      %p215 = por %p213, %p214
      %p216 = scmp.ne.s32.totalorder %s208, %s210
      %p217 = scmp.eq.s32.totalorder %s101, 1
      %p218 = por %p216, %p217
      %p219 = scmp.ne.s32.totalorder %s210, %s211
      %p220 = scmp.eq.s32.totalorder %s101, 0
      %p221 = por %p219, %p220
      %p222 = scmp.ne.s32.totalorder %s210, %s211
      %p223 = scmp.eq.s32.totalorder %s102, 1
      %p224 = por %p222, %p223
      %p226 = scmp.ne.s32.totalorder %s211, %s225
      %p227 = scmp.eq.s32.totalorder %s102, 0
      %p228 = por %p226, %p227
      %s230 = sadd.s32 %s229, 1
      %p233 = scmp.eq.s32.totalorder %s96, 1
      %p234 = scmp.ne.s32.totalorder %s229, %s231
      %p235 = scmp.eq.s32.totalorder %s96, 0
      %p236 = por %p234, %p235
      %p237 = scmp.ne.s32.totalorder %s229, %s231
      %p238 = scmp.eq.s32.totalorder %s101, 1
      %p239 = por %p237, %p238
      %p240 = scmp.ne.s32.totalorder %s231, %s232
      %p241 = scmp.eq.s32.totalorder %s101, 0
      %p242 = por %p240, %p241
      %p243 = scmp.ne.s32.totalorder %s231, %s232
      %p244 = scmp.eq.s32.totalorder %s102, 1
      %p245 = por %p243, %p244
      %p247 = scmp.ne.s32.totalorder %s232, %s246
      %p248 = scmp.eq.s32.totalorder %s102, 0
      %p249 = por %p247, %p248
      %s251 = sadd.s32 %s250, 1
      %p254 = scmp.eq.s32.totalorder %s96, 1
      %p255 = scmp.ne.s32.totalorder %s250, %s252
      %p256 = scmp.eq.s32.totalorder %s96, 0
      %p257 = por %p255, %p256
      %p258 = scmp.ne.s32.totalorder %s250, %s252
      %p259 = scmp.eq.s32.totalorder %s101, 1
      %p260 = por %p258, %p259
      %p261 = scmp.ne.s32.totalorder %s252, %s253
      %p262 = scmp.eq.s32.totalorder %s101, 0
      %p263 = por %p261, %p262
      %p264 = scmp.ne.s32.totalorder %s252, %s253
      %p265 = scmp.eq.s32.totalorder %s102, 1
      %p266 = por %p264, %p265
      %p268 = scmp.ne.s32.totalorder %s253, %s267
      %p269 = scmp.eq.s32.totalorder %s102, 0
      %p270 = por %p268, %p269
      %s272 = sadd.s32 %s271, 1
      %p275 = scmp.eq.s32.totalorder %s96, 1
      %p276 = scmp.ne.s32.totalorder %s271, %s273
      %p277 = scmp.eq.s32.totalorder %s96, 0
      %p278 = por %p276, %p277
      %p279 = scmp.ne.s32.totalorder %s271, %s273
      %p280 = scmp.eq.s32.totalorder %s101, 1
      %p281 = por %p279, %p280
      %p282 = scmp.ne.s32.totalorder %s273, %s274
      %p283 = scmp.eq.s32.totalorder %s101, 0
      %p284 = por %p282, %p283
      %p285 = scmp.ne.s32.totalorder %s273, %s274
      %p286 = scmp.eq.s32.totalorder %s102, 1
      %p287 = por %p285, %p286
      %p289 = scmp.ne.s32.totalorder %s274, %s288
      %p290 = scmp.eq.s32.totalorder %s102, 0
      %p291 = por %p289, %p290
      %s293 = sadd.s32 %s292, 1
      %p296 = scmp.eq.s32.totalorder %s96, 1
      %p297 = scmp.ne.s32.totalorder %s292, %s294
      %p298 = scmp.eq.s32.totalorder %s96, 0
      %p299 = por %p297, %p298
      %p300 = scmp.ne.s32.totalorder %s292, %s294
      %p301 = scmp.eq.s32.totalorder %s101, 1
      %p302 = por %p300, %p301
      %p303 = scmp.ne.s32.totalorder %s294, %s295
      %p304 = scmp.eq.s32.totalorder %s101, 0
      %p305 = por %p303, %p304
      %p306 = scmp.ne.s32.totalorder %s294, %s295
      %p307 = scmp.eq.s32.totalorder %s102, 1
      %p308 = por %p306, %p307
      %p310 = scmp.ne.s32.totalorder %s295, %s309
      %p311 = scmp.eq.s32.totalorder %s102, 0
      %p312 = por %p310, %p311
      %s314 = sadd.s32 %s313, 1
      %p317 = scmp.eq.s32.totalorder %s96, 1
      %p318 = scmp.ne.s32.totalorder %s313, %s315
      %p319 = scmp.eq.s32.totalorder %s96, 0
      %p320 = por %p318, %p319
      %p321 = scmp.ne.s32.totalorder %s313, %s315
      %p322 = scmp.eq.s32.totalorder %s101, 1
      %p323 = por %p321, %p322
      %p324 = scmp.ne.s32.totalorder %s315, %s316
      %p325 = scmp.eq.s32.totalorder %s101, 0
      %p326 = por %p324, %p325
      %p327 = scmp.ne.s32.totalorder %s315, %s316
      %p328 = scmp.eq.s32.totalorder %s102, 1
      %p329 = por %p327, %p328
      %p331 = scmp.ne.s32.totalorder %s316, %s330
      %p332 = scmp.eq.s32.totalorder %s102, 0
      %p333 = por %p331, %p332
      %s335 = sadd.s32 %s334, 1
      %p338 = scmp.eq.s32.totalorder %s96, 1
      %p339 = scmp.ne.s32.totalorder %s334, %s336
      %p340 = scmp.eq.s32.totalorder %s96, 0
      %p341 = por %p339, %p340
      %p342 = scmp.ne.s32.totalorder %s334, %s336
      %p343 = scmp.eq.s32.totalorder %s101, 1
      %p344 = por %p342, %p343
      %p345 = scmp.ne.s32.totalorder %s336, %s337
      %p346 = scmp.eq.s32.totalorder %s101, 0
      %p347 = por %p345, %p346
      %p348 = scmp.ne.s32.totalorder %s336, %s337
      %p349 = scmp.eq.s32.totalorder %s102, 1
      %p350 = por %p348, %p349
      %p352 = scmp.ne.s32.totalorder %s337, %s351
      %p353 = scmp.eq.s32.totalorder %s102, 0
      %p354 = por %p352, %p353
      %s356 = sadd.s32 %s355, 1
      %p359 = scmp.eq.s32.totalorder %s96, 1
      %p360 = scmp.ne.s32.totalorder %s355, %s357
      %p361 = scmp.eq.s32.totalorder %s96, 0
      %p362 = por %p360, %p361
      %p363 = scmp.ne.s32.totalorder %s355, %s357
      %p364 = scmp.eq.s32.totalorder %s101, 1
      %p365 = por %p363, %p364
      %p366 = scmp.ne.s32.totalorder %s357, %s358
      %p367 = scmp.eq.s32.totalorder %s101, 0
      %p368 = por %p366, %p367
      %p369 = scmp.ne.s32.totalorder %s357, %s358
      %p370 = scmp.eq.s32.totalorder %s102, 1
      %p371 = por %p369, %p370
      %p373 = scmp.ne.s32.totalorder %s358, %s372
      %p374 = scmp.eq.s32.totalorder %s102, 0
      %p375 = por %p373, %p374
      %s377 = sadd.s32 %s376, 1
      %p380 = scmp.eq.s32.totalorder %s96, 1
      %p381 = scmp.ne.s32.totalorder %s376, %s378
      %p382 = scmp.eq.s32.totalorder %s96, 0
      %p383 = por %p381, %p382
      %p384 = scmp.ne.s32.totalorder %s376, %s378
      %p385 = scmp.eq.s32.totalorder %s101, 1
      %p386 = por %p384, %p385
      %p387 = scmp.ne.s32.totalorder %s378, %s379
      %p388 = scmp.eq.s32.totalorder %s101, 0
      %p389 = por %p387, %p388
      %p390 = scmp.ne.s32.totalorder %s378, %s379
      %p391 = scmp.eq.s32.totalorder %s102, 1
      %p392 = por %p390, %p391
      %p394 = scmp.ne.s32.totalorder %s379, %s393
      %p395 = scmp.eq.s32.totalorder %s102, 0
      %p396 = por %p394, %p395
      %s398 = sadd.s32 %s397, 1
      %p401 = scmp.eq.s32.totalorder %s96, 1
      %p402 = scmp.ne.s32.totalorder %s397, %s399
      %p403 = scmp.eq.s32.totalorder %s96, 0
      %p404 = por %p402, %p403
      %p405 = scmp.ne.s32.totalorder %s397, %s399
      %p406 = scmp.eq.s32.totalorder %s101, 1
      %p407 = por %p405, %p406
      %p408 = scmp.ne.s32.totalorder %s399, %s400
      %p409 = scmp.eq.s32.totalorder %s101, 0
      %p410 = por %p408, %p409
      %p411 = scmp.ne.s32.totalorder %s399, %s400
      %p412 = scmp.eq.s32.totalorder %s102, 1
      %p413 = por %p411, %p412
      %p415 = scmp.ne.s32.totalorder %s400, %s414
      %p416 = scmp.eq.s32.totalorder %s102, 0
      %p417 = por %p415, %p416
      %s419 = sadd.s32 %s418, 1
      %p422 = scmp.eq.s32.totalorder %s96, 1
      %p423 = scmp.ne.s32.totalorder %s418, %s420
      %p424 = scmp.eq.s32.totalorder %s96, 0
      %p425 = por %p423, %p424
      %p426 = scmp.ne.s32.totalorder %s418, %s420
      %p427 = scmp.eq.s32.totalorder %s101, 1
      %p428 = por %p426, %p427
      %p429 = scmp.ne.s32.totalorder %s420, %s421
      %p430 = scmp.eq.s32.totalorder %s101, 0
      %p431 = por %p429, %p430
      %p432 = scmp.ne.s32.totalorder %s420, %s421
      %p433 = scmp.eq.s32.totalorder %s102, 1
      %p434 = por %p432, %p433
      %p436 = scmp.ne.s32.totalorder %s421, %s435
      %p437 = scmp.eq.s32.totalorder %s102, 0
      %p438 = por %p436, %p437
      %s440 = sadd.s32 %s439, 1
      %p443 = scmp.eq.s32.totalorder %s96, 1
      %p444 = scmp.ne.s32.totalorder %s439, %s441
      %p445 = scmp.eq.s32.totalorder %s96, 0
      %p446 = por %p444, %p445
      %p447 = scmp.ne.s32.totalorder %s439, %s441
      %p448 = scmp.eq.s32.totalorder %s101, 1
      %p449 = por %p447, %p448
      %p450 = scmp.ne.s32.totalorder %s441, %s442
      %p451 = scmp.eq.s32.totalorder %s101, 0
      %p452 = por %p450, %p451
      %p453 = scmp.ne.s32.totalorder %s441, %s442
      %p454 = scmp.eq.s32.totalorder %s102, 1
      %p455 = por %p453, %p454
      %p457 = scmp.ne.s32.totalorder %s442, %s456
      %p458 = scmp.eq.s32.totalorder %s102, 0
      %p459 = por %p457, %p458
      %s461 = sadd.s32 %s460, 1
      %p464 = scmp.eq.s32.totalorder %s96, 1
      %p465 = scmp.ne.s32.totalorder %s460, %s462
      %p466 = scmp.eq.s32.totalorder %s96, 0
      %p467 = por %p465, %p466
      %p468 = scmp.ne.s32.totalorder %s460, %s462
      %p469 = scmp.eq.s32.totalorder %s101, 1
      %p470 = por %p468, %p469
      %p471 = scmp.ne.s32.totalorder %s462, %s463
      %p472 = scmp.eq.s32.totalorder %s101, 0
      %p473 = por %p471, %p472
      %p474 = scmp.ne.s32.totalorder %s462, %s463
      %p475 = scmp.eq.s32.totalorder %s102, 1
      %p476 = por %p474, %p475
      %p478 = scmp.ne.s32.totalorder %s463, %s477
      %p479 = scmp.eq.s32.totalorder %s102, 0
      %p480 = por %p478, %p479
      %s482 = sadd.s32 %s481, 1
      %p485 = scmp.eq.s32.totalorder %s96, 1
      %p486 = scmp.ne.s32.totalorder %s481, %s483
      %p487 = scmp.eq.s32.totalorder %s96, 0
      %p488 = por %p486, %p487
      %p489 = scmp.ne.s32.totalorder %s481, %s483
      %p490 = scmp.eq.s32.totalorder %s101, 1
      %p491 = por %p489, %p490
      %p492 = scmp.ne.s32.totalorder %s483, %s484
      %p493 = scmp.eq.s32.totalorder %s101, 0
      %p494 = por %p492, %p493
      %p495 = scmp.ne.s32.totalorder %s483, %s484
      %p496 = scmp.eq.s32.totalorder %s102, 1
      %p497 = por %p495, %p496
      %p499 = scmp.ne.s32.totalorder %s484, %s498
      %p500 = scmp.eq.s32.totalorder %s102, 0
      %p501 = por %p499, %p500
      %s503 = sadd.s32 %s502, 1
      %p506 = scmp.eq.s32.totalorder %s96, 1
      %p507 = scmp.ne.s32.totalorder %s502, %s504
      %p508 = scmp.eq.s32.totalorder %s96, 0
      %p509 = por %p507, %p508
      %p510 = scmp.ne.s32.totalorder %s502, %s504
      %p511 = scmp.eq.s32.totalorder %s101, 1
      %p512 = por %p510, %p511
      %p513 = scmp.ne.s32.totalorder %s504, %s505
      %p514 = scmp.eq.s32.totalorder %s101, 0
      %p515 = por %p513, %p514
      %p516 = scmp.ne.s32.totalorder %s504, %s505
      %p517 = scmp.eq.s32.totalorder %s102, 1
      %p518 = por %p516, %p517
      %p520 = scmp.ne.s32.totalorder %s505, %s519
      %p521 = scmp.eq.s32.totalorder %s102, 0
      %p522 = por %p520, %p521
      %s524 = sadd.s32 %s523, 1
      %p527 = scmp.eq.s32.totalorder %s96, 1
      %p528 = scmp.ne.s32.totalorder %s523, %s525
      %p529 = scmp.eq.s32.totalorder %s96, 0
      %p530 = por %p528, %p529
      %p531 = scmp.ne.s32.totalorder %s523, %s525
      %p532 = scmp.eq.s32.totalorder %s101, 1
      %p533 = por %p531, %p532
      %p534 = scmp.ne.s32.totalorder %s525, %s526
      %p535 = scmp.eq.s32.totalorder %s101, 0
      %p536 = por %p534, %p535
      %p537 = scmp.ne.s32.totalorder %s525, %s526
      %p538 = scmp.eq.s32.totalorder %s102, 1
      %p539 = por %p537, %p538
      %p541 = scmp.ne.s32.totalorder %s526, %s540
      %p542 = scmp.eq.s32.totalorder %s102, 0
      %p543 = por %p541, %p542
      %s545 = sadd.s32 %s544, 1
      %p548 = scmp.eq.s32.totalorder %s96, 1
      %p549 = scmp.ne.s32.totalorder %s544, %s546
      %p550 = scmp.eq.s32.totalorder %s96, 0
      %p551 = por %p549, %p550
      %p552 = scmp.ne.s32.totalorder %s544, %s546
      %p553 = scmp.eq.s32.totalorder %s101, 1
      %p554 = por %p552, %p553
      %p555 = scmp.ne.s32.totalorder %s546, %s547
      %p556 = scmp.eq.s32.totalorder %s101, 0
      %p557 = por %p555, %p556
      %p558 = scmp.ne.s32.totalorder %s546, %s547
      %p559 = scmp.eq.s32.totalorder %s102, 1
      %p560 = por %p558, %p559
      %p562 = scmp.ne.s32.totalorder %s547, %s561
      %p563 = scmp.eq.s32.totalorder %s102, 0
      %p564 = por %p562, %p563
      %s566 = sadd.s32 %s565, 1
      %p569 = scmp.eq.s32.totalorder %s96, 1
      %p570 = scmp.ne.s32.totalorder %s565, %s567
      %p571 = scmp.eq.s32.totalorder %s96, 0
      %p572 = por %p570, %p571
      %p573 = scmp.ne.s32.totalorder %s565, %s567
      %p574 = scmp.eq.s32.totalorder %s101, 1
      %p575 = por %p573, %p574
      %p576 = scmp.ne.s32.totalorder %s567, %s568
      %p577 = scmp.eq.s32.totalorder %s101, 0
      %p578 = por %p576, %p577
      %p579 = scmp.ne.s32.totalorder %s567, %s568
      %p580 = scmp.eq.s32.totalorder %s102, 1
      %p581 = por %p579, %p580
      %p583 = scmp.ne.s32.totalorder %s568, %s582
      %p584 = scmp.eq.s32.totalorder %s102, 0
      %p585 = por %p583, %p584
      %s587 = sadd.s32 %s586, 1
      %p590 = scmp.eq.s32.totalorder %s96, 1
      %p591 = scmp.ne.s32.totalorder %s586, %s588
      %p592 = scmp.eq.s32.totalorder %s96, 0
      %p593 = por %p591, %p592
      %p594 = scmp.ne.s32.totalorder %s586, %s588
      %p595 = scmp.eq.s32.totalorder %s101, 1
      %p596 = por %p594, %p595
      %p597 = scmp.ne.s32.totalorder %s588, %s589
      %p598 = scmp.eq.s32.totalorder %s101, 0
      %p599 = por %p597, %p598
      %p600 = scmp.ne.s32.totalorder %s588, %s589
      %p601 = scmp.eq.s32.totalorder %s102, 1
      %p602 = por %p600, %p601
      %p604 = scmp.ne.s32.totalorder %s589, %s603
      %p605 = scmp.eq.s32.totalorder %s102, 0
      %p606 = por %p604, %p605
      %s608 = sadd.s32 %s607, 1
      %p611 = scmp.eq.s32.totalorder %s96, 1
      %p612 = scmp.ne.s32.totalorder %s607, %s609
      %p613 = scmp.eq.s32.totalorder %s96, 0
      %p614 = por %p612, %p613
      %p615 = scmp.ne.s32.totalorder %s607, %s609
      %p616 = scmp.eq.s32.totalorder %s101, 1
      %p617 = por %p615, %p616
      %p618 = scmp.ne.s32.totalorder %s609, %s610
      %p619 = scmp.eq.s32.totalorder %s101, 0
      %p620 = por %p618, %p619
      %p621 = scmp.ne.s32.totalorder %s609, %s610
      %p622 = scmp.eq.s32.totalorder %s102, 1
      %p623 = por %p621, %p622
      %p625 = scmp.ne.s32.totalorder %s610, %s624
      %p626 = scmp.eq.s32.totalorder %s102, 0
      %p627 = por %p625, %p626
      %s629 = sadd.s32 %s628, 1
      %p632 = scmp.eq.s32.totalorder %s96, 1
      %p633 = scmp.ne.s32.totalorder %s628, %s630
      %p634 = scmp.eq.s32.totalorder %s96, 0
      %p635 = por %p633, %p634
      %p636 = scmp.ne.s32.totalorder %s628, %s630
      %p637 = scmp.eq.s32.totalorder %s101, 1
      %p638 = por %p636, %p637
      %p639 = scmp.ne.s32.totalorder %s630, %s631
      %p640 = scmp.eq.s32.totalorder %s101, 0
      %p641 = por %p639, %p640
      %p642 = scmp.ne.s32.totalorder %s630, %s631
      %p643 = scmp.eq.s32.totalorder %s102, 1
      %p644 = por %p642, %p643
      %p646 = scmp.ne.s32.totalorder %s631, %s645
      %p647 = scmp.eq.s32.totalorder %s102, 0
      %p648 = por %p646, %p647
      %s650 = sadd.s32 %s649, 1
      %p653 = scmp.eq.s32.totalorder %s96, 1
      %p654 = scmp.ne.s32.totalorder %s649, %s651
      %p655 = scmp.eq.s32.totalorder %s96, 0
      %p656 = por %p654, %p655
      %p657 = scmp.ne.s32.totalorder %s649, %s651
      %p658 = scmp.eq.s32.totalorder %s101, 1
      %p659 = por %p657, %p658
      %p660 = scmp.ne.s32.totalorder %s651, %s652
      %p661 = scmp.eq.s32.totalorder %s101, 0
      %p662 = por %p660, %p661
      %p663 = scmp.ne.s32.totalorder %s651, %s652
      %p664 = scmp.eq.s32.totalorder %s102, 1
      %p665 = por %p663, %p664
      %p667 = scmp.ne.s32.totalorder %s652, %s666
      %p668 = scmp.eq.s32.totalorder %s102, 0
      %p669 = por %p667, %p668
      %s671 = sadd.s32 %s670, 1
      %p674 = scmp.eq.s32.totalorder %s96, 1
      %p675 = scmp.ne.s32.totalorder %s670, %s672
      %p676 = scmp.eq.s32.totalorder %s96, 0
      %p677 = por %p675, %p676
      %p678 = scmp.ne.s32.totalorder %s670, %s672
      %p679 = scmp.eq.s32.totalorder %s101, 1
      %p680 = por %p678, %p679
      %p681 = scmp.ne.s32.totalorder %s672, %s673
      %p682 = scmp.eq.s32.totalorder %s101, 0
      %p683 = por %p681, %p682
      %p684 = scmp.ne.s32.totalorder %s672, %s673
      %p685 = scmp.eq.s32.totalorder %s102, 1
      %p686 = por %p684, %p685
      %p688 = scmp.ne.s32.totalorder %s673, %s687
      %p689 = scmp.eq.s32.totalorder %s102, 0
      %p690 = por %p688, %p689
      %s692 = sadd.s32 %s691, 1
      %p695 = scmp.eq.s32.totalorder %s96, 1
      %p696 = scmp.ne.s32.totalorder %s691, %s693
      %p697 = scmp.eq.s32.totalorder %s96, 0
      %p698 = por %p696, %p697
      %p699 = scmp.ne.s32.totalorder %s691, %s693
      %p700 = scmp.eq.s32.totalorder %s101, 1
      %p701 = por %p699, %p700
      %p702 = scmp.ne.s32.totalorder %s693, %s694
      %p703 = scmp.eq.s32.totalorder %s101, 0
      %p704 = por %p702, %p703
      %p705 = scmp.ne.s32.totalorder %s693, %s694
      %p706 = scmp.eq.s32.totalorder %s102, 1
      %p707 = por %p705, %p706
      %p709 = scmp.ne.s32.totalorder %s694, %s708
      %p710 = scmp.eq.s32.totalorder %s102, 0
      %p711 = por %p709, %p710
      %s713 = sadd.s32 %s712, 1
      %p716 = scmp.eq.s32.totalorder %s96, 1
      %p717 = scmp.ne.s32.totalorder %s712, %s714
      %p718 = scmp.eq.s32.totalorder %s96, 0
      %p719 = por %p717, %p718
      %p720 = scmp.ne.s32.totalorder %s712, %s714
      %p721 = scmp.eq.s32.totalorder %s101, 1
      %p722 = por %p720, %p721
      %p723 = scmp.ne.s32.totalorder %s714, %s715
      %p724 = scmp.eq.s32.totalorder %s101, 0
      %p725 = por %p723, %p724
      %p726 = scmp.ne.s32.totalorder %s714, %s715
      %p727 = scmp.eq.s32.totalorder %s102, 1
      %p728 = por %p726, %p727
      %p730 = scmp.ne.s32.totalorder %s715, %s729
      %p731 = scmp.eq.s32.totalorder %s102, 0
      %p732 = por %p730, %p731
      %s734 = sadd.s32 %s733, 1
      %p737 = scmp.eq.s32.totalorder %s96, 1
      %p738 = scmp.ne.s32.totalorder %s733, %s735
      %p739 = scmp.eq.s32.totalorder %s96, 0
      %p740 = por %p738, %p739
      %p741 = scmp.ne.s32.totalorder %s733, %s735
      %p742 = scmp.eq.s32.totalorder %s101, 1
      %p743 = por %p741, %p742
      %p744 = scmp.ne.s32.totalorder %s735, %s736
      %p745 = scmp.eq.s32.totalorder %s101, 0
      %p746 = por %p744, %p745
      %p747 = scmp.ne.s32.totalorder %s735, %s736
      %p748 = scmp.eq.s32.totalorder %s102, 1
      %p749 = por %p747, %p748
      %p751 = scmp.ne.s32.totalorder %s736, %s750
      %p752 = scmp.eq.s32.totalorder %s102, 0
      %p753 = por %p751, %p752
      %s755 = sadd.s32 %s754, 1
      %p758 = scmp.eq.s32.totalorder %s96, 1
      %p759 = scmp.ne.s32.totalorder %s754, %s756
      %p760 = scmp.eq.s32.totalorder %s96, 0
      %p761 = por %p759, %p760
      %p762 = scmp.ne.s32.totalorder %s754, %s756
      %p763 = scmp.eq.s32.totalorder %s101, 1
      %p764 = por %p762, %p763
      %p765 = scmp.ne.s32.totalorder %s756, %s757
      %p766 = scmp.eq.s32.totalorder %s101, 0
      %p767 = por %p765, %p766
      %p768 = scmp.ne.s32.totalorder %s756, %s757
      %p769 = scmp.eq.s32.totalorder %s102, 1
      %p770 = por %p768, %p769
      %p772 = scmp.ne.s32.totalorder %s757, %s771
      %p773 = scmp.eq.s32.totalorder %s102, 0
      %p774 = por %p772, %p773
      %s776 = sadd.s32 %s775, 1
      %p779 = scmp.eq.s32.totalorder %s96, 1
      %p780 = scmp.ne.s32.totalorder %s775, %s777
      %p781 = scmp.eq.s32.totalorder %s96, 0
      %p782 = por %p780, %p781
      %p783 = scmp.ne.s32.totalorder %s775, %s777
      %p784 = scmp.eq.s32.totalorder %s101, 1
      %p785 = por %p783, %p784
      %p786 = scmp.ne.s32.totalorder %s777, %s778
      %p787 = scmp.eq.s32.totalorder %s101, 0
      %p788 = por %p786, %p787
      %p789 = scmp.ne.s32.totalorder %s777, %s778
      %p790 = scmp.eq.s32.totalorder %s102, 1
      %p791 = por %p789, %p790
      %p793 = scmp.ne.s32.totalorder %s778, %s792
      %p794 = scmp.eq.s32.totalorder %s102, 0
      %p795 = por %p793, %p794
      %s797 = sadd.s32 %s796, 1
      %p800 = scmp.eq.s32.totalorder %s96, 1
      %p801 = scmp.ne.s32.totalorder %s796, %s798
      %p802 = scmp.eq.s32.totalorder %s96, 0
      %p803 = por %p801, %p802
      %p804 = scmp.ne.s32.totalorder %s796, %s798
      %p805 = scmp.eq.s32.totalorder %s101, 1
      %p806 = por %p804, %p805
      %p807 = scmp.ne.s32.totalorder %s798, %s799
      %p808 = scmp.eq.s32.totalorder %s101, 0
      %p809 = por %p807, %p808
      %p810 = scmp.ne.s32.totalorder %s798, %s799
      %p811 = scmp.eq.s32.totalorder %s102, 1
      %p812 = por %p810, %p811
      %p814 = scmp.ne.s32.totalorder %s799, %s813
      %p815 = scmp.eq.s32.totalorder %s102, 0
      %p816 = por %p814, %p815
      %s818 = sadd.s32 %s817, 1
      %p821 = scmp.eq.s32.totalorder %s96, 1
      %p822 = scmp.ne.s32.totalorder %s817, %s819
      %p823 = scmp.eq.s32.totalorder %s96, 0
      %p824 = por %p822, %p823
      %p825 = scmp.ne.s32.totalorder %s817, %s819
      %p826 = scmp.eq.s32.totalorder %s101, 1
      %p827 = por %p825, %p826
      %p828 = scmp.ne.s32.totalorder %s819, %s820
      %p829 = scmp.eq.s32.totalorder %s101, 0
      %p830 = por %p828, %p829
      %p831 = scmp.ne.s32.totalorder %s819, %s820
      %p832 = scmp.eq.s32.totalorder %s102, 1
      %p833 = por %p831, %p832
      %p835 = scmp.ne.s32.totalorder %s820, %s834
      %p836 = scmp.eq.s32.totalorder %s102, 0
      %p837 = por %p835, %p836
      %s839 = sadd.s32 %s838, 1
      %p842 = scmp.eq.s32.totalorder %s96, 1
      %p843 = scmp.ne.s32.totalorder %s838, %s840
      %p844 = scmp.eq.s32.totalorder %s96, 0
      %p845 = por %p843, %p844
      %p846 = scmp.ne.s32.totalorder %s838, %s840
      %p847 = scmp.eq.s32.totalorder %s101, 1
      %p848 = por %p846, %p847
      %p849 = scmp.ne.s32.totalorder %s840, %s841
      %p850 = scmp.eq.s32.totalorder %s101, 0
      %p851 = por %p849, %p850
      %p852 = scmp.ne.s32.totalorder %s840, %s841
      %p853 = scmp.eq.s32.totalorder %s102, 1
      %p854 = por %p852, %p853
      %p856 = scmp.ne.s32.totalorder %s841, %s855
      %p857 = scmp.eq.s32.totalorder %s102, 0
      %p858 = por %p856, %p857
      %s860 = sadd.s32 %s859, 1
      %p863 = scmp.eq.s32.totalorder %s96, 1
      %p864 = scmp.ne.s32.totalorder %s859, %s861
      %p865 = scmp.eq.s32.totalorder %s96, 0
      %p866 = por %p864, %p865
      %p867 = scmp.ne.s32.totalorder %s859, %s861
      %p868 = scmp.eq.s32.totalorder %s101, 1
      %p869 = por %p867, %p868
      %p870 = scmp.ne.s32.totalorder %s861, %s862
      %p871 = scmp.eq.s32.totalorder %s101, 0
      %p872 = por %p870, %p871
      %p873 = scmp.ne.s32.totalorder %s861, %s862
      %p874 = scmp.eq.s32.totalorder %s102, 1
      %p875 = por %p873, %p874
      %p877 = scmp.ne.s32.totalorder %s862, %s876
      %p878 = scmp.eq.s32.totalorder %s102, 0
      %p879 = por %p877, %p878
      %s881 = sadd.s32 %s880, 1
      %p884 = scmp.eq.s32.totalorder %s96, 1
      %p885 = scmp.ne.s32.totalorder %s880, %s882
      %p886 = scmp.eq.s32.totalorder %s96, 0
      %p887 = por %p885, %p886
      %p888 = scmp.ne.s32.totalorder %s880, %s882
      %p889 = scmp.eq.s32.totalorder %s101, 1
      %p890 = por %p888, %p889
      %p891 = scmp.ne.s32.totalorder %s882, %s883
      %p892 = scmp.eq.s32.totalorder %s101, 0
      %p893 = por %p891, %p892
      %p894 = scmp.ne.s32.totalorder %s882, %s883
      %p895 = scmp.eq.s32.totalorder %s102, 1
      %p896 = por %p894, %p895
      %p898 = scmp.ne.s32.totalorder %s883, %s897
      %p899 = scmp.eq.s32.totalorder %s102, 0
      %p900 = por %p898, %p899
      %s902 = sadd.s32 %s901, 1
      %p905 = scmp.eq.s32.totalorder %s96, 1
      %p906 = scmp.ne.s32.totalorder %s901, %s903
      %p907 = scmp.eq.s32.totalorder %s96, 0
      %p908 = por %p906, %p907
      %p909 = scmp.ne.s32.totalorder %s901, %s903
      %p910 = scmp.eq.s32.totalorder %s101, 1
      %p911 = por %p909, %p910
      %p912 = scmp.ne.s32.totalorder %s903, %s904
      %p913 = scmp.eq.s32.totalorder %s101, 0
      %p914 = por %p912, %p913
      %p915 = scmp.ne.s32.totalorder %s903, %s904
      %p916 = scmp.eq.s32.totalorder %s102, 1
      %p917 = por %p915, %p916
      %p919 = scmp.ne.s32.totalorder %s904, %s918
      %p920 = scmp.eq.s32.totalorder %s102, 0
      %p921 = por %p919, %p920
      %s923 = sadd.s32 %s922, 1
      %p926 = scmp.eq.s32.totalorder %s96, 1
      %p927 = scmp.ne.s32.totalorder %s922, %s924
      %p928 = scmp.eq.s32.totalorder %s96, 0
      %p929 = por %p927, %p928
      %p930 = scmp.ne.s32.totalorder %s922, %s924
      %p931 = scmp.eq.s32.totalorder %s101, 1
      %p932 = por %p930, %p931
      %p933 = scmp.ne.s32.totalorder %s924, %s925
      %p934 = scmp.eq.s32.totalorder %s101, 0
      %p935 = por %p933, %p934
      %p936 = scmp.ne.s32.totalorder %s924, %s925
      %p937 = scmp.eq.s32.totalorder %s102, 1
      %p938 = por %p936, %p937
      %p940 = scmp.ne.s32.totalorder %s925, %s939
      %p941 = scmp.eq.s32.totalorder %s102, 0
      %p942 = por %p940, %p941
      %s944 = sadd.s32 %s943, 1
      %p947 = scmp.eq.s32.totalorder %s96, 1
      %p948 = scmp.ne.s32.totalorder %s943, %s945
      %p949 = scmp.eq.s32.totalorder %s96, 0
      %p950 = por %p948, %p949
      %p951 = scmp.ne.s32.totalorder %s943, %s945
      %p952 = scmp.eq.s32.totalorder %s101, 1
      %p953 = por %p951, %p952
      %p954 = scmp.ne.s32.totalorder %s945, %s946
      %p955 = scmp.eq.s32.totalorder %s101, 0
      %p956 = por %p954, %p955
      %p957 = scmp.ne.s32.totalorder %s945, %s946
      %p958 = scmp.eq.s32.totalorder %s102, 1
      %p959 = por %p957, %p958
      %p961 = scmp.ne.s32.totalorder %s946, %s960
      %p962 = scmp.eq.s32.totalorder %s102, 0
      %p963 = por %p961, %p962
      %s964 = ssub.s32 %s96, %s103
      %p965 = scmp.eq.s32.totalorder %s964, 0
      %s967 = sadd.s32 %s966, 1
      %s968 = scalar_select %p965, %s966, %s967
      %p971 = pneg %p965
      %p972 = scmp.eq.s32.totalorder %s96, 1
      %p973 = por %p971, %p972
      %p974 = scmp.ne.s32.totalorder %s966, %s969
      %p975 = scmp.eq.s32.totalorder %s96, 0
      %p976 = por %p974, %p975
      %p977 = scmp.ne.s32.totalorder %s966, %s969
      %p978 = scmp.eq.s32.totalorder %s101, 1
      %p979 = por %p977, %p978
      %p980 = scmp.ne.s32.totalorder %s969, %s970
      %p981 = scmp.eq.s32.totalorder %s101, 0
      %p982 = por %p980, %p981
      %p983 = scmp.ne.s32.totalorder %s969, %s970
      %p984 = scmp.eq.s32.totalorder %s102, 1
      %p985 = por %p983, %p984
      %p987 = scmp.ne.s32.totalorder %s970, %s986
      %p988 = scmp.eq.s32.totalorder %s102, 0
      %p989 = por %p987, %p988
      %s990 = ssub.s32 %s96, %s103
      %p991 = scmp.eq.s32.totalorder %s990, 0
      %s993 = sadd.s32 %s992, 1
      %s994 = scalar_select %p991, %s992, %s993
      %p997 = pneg %p991
      %p998 = scmp.eq.s32.totalorder %s96, 1
      %p999 = por %p997, %p998
      %p1000 = scmp.ne.s32.totalorder %s992, %s995
      %p1001 = scmp.eq.s32.totalorder %s96, 0
      %p1002 = por %p1000, %p1001
      %p1003 = scmp.ne.s32.totalorder %s992, %s995
      %p1004 = scmp.eq.s32.totalorder %s101, 1
      %p1005 = por %p1003, %p1004
      %p1006 = scmp.ne.s32.totalorder %s995, %s996
      %p1007 = scmp.eq.s32.totalorder %s101, 0
      %p1008 = por %p1006, %p1007
      %p1009 = scmp.ne.s32.totalorder %s995, %s996
      %p1010 = scmp.eq.s32.totalorder %s102, 1
      %p1011 = por %p1009, %p1010
      %p1013 = scmp.ne.s32.totalorder %s996, %s1012
      %p1014 = scmp.eq.s32.totalorder %s102, 0
      %p1015 = por %p1013, %p1014
      %p1016 = scmp.le.s32.totalorder 1, %s96
      %p1017 = scmp.lt.s32.totalorder %s96, 3
      %p1018 = pnand %p1016, %p1017
      %p1019 = pneg %p1018
      // Predicated region
      $region9: #{_lambda_.1} parent=5 // pred_check
        _
      $region10: #{_lambda_.1} parent=5 // pred_check_branch
        %1021 = sbr.rel (%p1018) target = $region12
      $region11: #{_lambda_.1} parent=5 // pred_region
        %s1022 = ssub.s32 %s96, 1
        // Predicated region
        $region13: #{_lambda_.1} parent=11 // pred_check
          %p1023 = pneg %p221
        $region14: #{_lambda_.1} parent=11 // pred_check_branch
          %1025 = sbr.rel (%p1023) target = $region16
        $region15: #{_lambda_.1} parent=11 // pred_region
          _
        $region16: #{_lambda_.1} parent=11 // pred_fallthru
          _
        // Predicated region
        $region17: #{_lambda_.1} parent=11 // pred_check
          %p1026 = pneg %p242
        $region18: #{_lambda_.1} parent=11 // pred_check_branch
          %1028 = sbr.rel (%p1026) target = $region20
        $region19: #{_lambda_.1} parent=11 // pred_region
          _
        $region20: #{_lambda_.1} parent=11 // pred_fallthru
          _
        // Predicated region
        $region21: #{_lambda_.1} parent=11 // pred_check
          %p1029 = pneg %p263
        $region22: #{_lambda_.1} parent=11 // pred_check_branch
          %1031 = sbr.rel (%p1029) target = $region24
        $region23: #{_lambda_.1} parent=11 // pred_region
          _
        $region24: #{_lambda_.1} parent=11 // pred_fallthru
          _
        // Predicated region
        $region25: #{_lambda_.1} parent=11 // pred_check
          %p1032 = pneg %p284
        $region26: #{_lambda_.1} parent=11 // pred_check_branch
          %1034 = sbr.rel (%p1032) target = $region28
        $region27: #{_lambda_.1} parent=11 // pred_region
          _
        $region28: #{_lambda_.1} parent=11 // pred_fallthru
          _
        // Predicated region
        $region29: #{_lambda_.1} parent=11 // pred_check
          %p1035 = pneg %p305
        $region30: #{_lambda_.1} parent=11 // pred_check_branch
          %1037 = sbr.rel (%p1035) target = $region32
        $region31: #{_lambda_.1} parent=11 // pred_region
          _
        $region32: #{_lambda_.1} parent=11 // pred_fallthru
          _
        // Predicated region
        $region33: #{_lambda_.1} parent=11 // pred_check
          %p1038 = pneg %p326
        $region34: #{_lambda_.1} parent=11 // pred_check_branch
          %1040 = sbr.rel (%p1038) target = $region36
        $region35: #{_lambda_.1} parent=11 // pred_region
          _
        $region36: #{_lambda_.1} parent=11 // pred_fallthru
          _
        // Predicated region
        $region37: #{_lambda_.1} parent=11 // pred_check
          %p1041 = pneg %p347
        $region38: #{_lambda_.1} parent=11 // pred_check_branch
          %1043 = sbr.rel (%p1041) target = $region40
        $region39: #{_lambda_.1} parent=11 // pred_region
          _
        $region40: #{_lambda_.1} parent=11 // pred_fallthru
          _
        // Predicated region
        $region41: #{_lambda_.1} parent=11 // pred_check
          %p1044 = pneg %p368
        $region42: #{_lambda_.1} parent=11 // pred_check_branch
          %1046 = sbr.rel (%p1044) target = $region44
        $region43: #{_lambda_.1} parent=11 // pred_region
          _
        $region44: #{_lambda_.1} parent=11 // pred_fallthru
          _
        // Predicated region
        $region45: #{_lambda_.1} parent=11 // pred_check
          %p1047 = pneg %p389
        $region46: #{_lambda_.1} parent=11 // pred_check_branch
          %1049 = sbr.rel (%p1047) target = $region48
        $region47: #{_lambda_.1} parent=11 // pred_region
          _
        $region48: #{_lambda_.1} parent=11 // pred_fallthru
          _
        // Predicated region
        $region49: #{_lambda_.1} parent=11 // pred_check
          %p1050 = pneg %p410
        $region50: #{_lambda_.1} parent=11 // pred_check_branch
          %1052 = sbr.rel (%p1050) target = $region52
        $region51: #{_lambda_.1} parent=11 // pred_region
          _
        $region52: #{_lambda_.1} parent=11 // pred_fallthru
          _
        // Predicated region
        $region53: #{_lambda_.1} parent=11 // pred_check
          %p1053 = pneg %p431
        $region54: #{_lambda_.1} parent=11 // pred_check_branch
          %1055 = sbr.rel (%p1053) target = $region56
        $region55: #{_lambda_.1} parent=11 // pred_region
          _
        $region56: #{_lambda_.1} parent=11 // pred_fallthru
          _
        // Predicated region
        $region57: #{_lambda_.1} parent=11 // pred_check
          %p1056 = pneg %p452
        $region58: #{_lambda_.1} parent=11 // pred_check_branch
          %1058 = sbr.rel (%p1056) target = $region60
        $region59: #{_lambda_.1} parent=11 // pred_region
          _
        $region60: #{_lambda_.1} parent=11 // pred_fallthru
          _
        // Predicated region
        $region61: #{_lambda_.1} parent=11 // pred_check
          %p1059 = pneg %p473
        $region62: #{_lambda_.1} parent=11 // pred_check_branch
          %1061 = sbr.rel (%p1059) target = $region64
        $region63: #{_lambda_.1} parent=11 // pred_region
          _
        $region64: #{_lambda_.1} parent=11 // pred_fallthru
          _
        // Predicated region
        $region65: #{_lambda_.1} parent=11 // pred_check
          %p1062 = pneg %p494
        $region66: #{_lambda_.1} parent=11 // pred_check_branch
          %1064 = sbr.rel (%p1062) target = $region68
        $region67: #{_lambda_.1} parent=11 // pred_region
          _
        $region68: #{_lambda_.1} parent=11 // pred_fallthru
          _
        // Predicated region
        $region69: #{_lambda_.1} parent=11 // pred_check
          %p1065 = pneg %p515
        $region70: #{_lambda_.1} parent=11 // pred_check_branch
          %1067 = sbr.rel (%p1065) target = $region72
        $region71: #{_lambda_.1} parent=11 // pred_region
          _
        $region72: #{_lambda_.1} parent=11 // pred_fallthru
          _
        // Predicated region
        $region73: #{_lambda_.1} parent=11 // pred_check
          %p1068 = pneg %p536
        $region74: #{_lambda_.1} parent=11 // pred_check_branch
          %1070 = sbr.rel (%p1068) target = $region76
        $region75: #{_lambda_.1} parent=11 // pred_region
          _
        $region76: #{_lambda_.1} parent=11 // pred_fallthru
          _
        // Predicated region
        $region77: #{_lambda_.1} parent=11 // pred_check
          %p1071 = pneg %p557
        $region78: #{_lambda_.1} parent=11 // pred_check_branch
          %1073 = sbr.rel (%p1071) target = $region80
        $region79: #{_lambda_.1} parent=11 // pred_region
          _
        $region80: #{_lambda_.1} parent=11 // pred_fallthru
          _
        // Predicated region
        $region81: #{_lambda_.1} parent=11 // pred_check
          %p1074 = pneg %p578
        $region82: #{_lambda_.1} parent=11 // pred_check_branch
          %1076 = sbr.rel (%p1074) target = $region84
        $region83: #{_lambda_.1} parent=11 // pred_region
          _
        $region84: #{_lambda_.1} parent=11 // pred_fallthru
          _
        // Predicated region
        $region85: #{_lambda_.1} parent=11 // pred_check
          %p1077 = pneg %p599
        $region86: #{_lambda_.1} parent=11 // pred_check_branch
          %1079 = sbr.rel (%p1077) target = $region88
        $region87: #{_lambda_.1} parent=11 // pred_region
          _
        $region88: #{_lambda_.1} parent=11 // pred_fallthru
          _
        // Predicated region
        $region89: #{_lambda_.1} parent=11 // pred_check
          %p1080 = pneg %p620
        $region90: #{_lambda_.1} parent=11 // pred_check_branch
          %1082 = sbr.rel (%p1080) target = $region92
        $region91: #{_lambda_.1} parent=11 // pred_region
          _
        $region92: #{_lambda_.1} parent=11 // pred_fallthru
          _
        // Predicated region
        $region93: #{_lambda_.1} parent=11 // pred_check
          %p1083 = pneg %p641
        $region94: #{_lambda_.1} parent=11 // pred_check_branch
          %1085 = sbr.rel (%p1083) target = $region96
        $region95: #{_lambda_.1} parent=11 // pred_region
          _
        $region96: #{_lambda_.1} parent=11 // pred_fallthru
          _
        // Predicated region
        $region97: #{_lambda_.1} parent=11 // pred_check
          %p1086 = pneg %p662
        $region98: #{_lambda_.1} parent=11 // pred_check_branch
          %1088 = sbr.rel (%p1086) target = $region100
        $region99: #{_lambda_.1} parent=11 // pred_region
          %s1090 = ssub.s32 16, 16
          %1091 = vsyncadd [#allocation3], %s1090
          %s1093 = sshll.u32 [#allocation2], 4
          %s1094 = int_to_ptr.vmem [resolvable:$true] %s1093
          %1096 = dma.hbm_to_vmem [thread:$0]  %s51, 16, %s1094, [#allocation3]
        $region100: #{_lambda_.1} parent=11 // pred_fallthru
          _
        // Predicated region
        $region101: #{_lambda_.1} parent=11 // pred_check
          %p1097 = pneg %p683
        $region102: #{_lambda_.1} parent=11 // pred_check_branch
          %1099 = sbr.rel (%p1097) target = $region104
        $region103: #{_lambda_.1} parent=11 // pred_region
          _
        $region104: #{_lambda_.1} parent=11 // pred_fallthru
          _
        // Predicated region
        $region105: #{_lambda_.1} parent=11 // pred_check
          %p1100 = pneg %p704
        $region106: #{_lambda_.1} parent=11 // pred_check_branch
          %1102 = sbr.rel (%p1100) target = $region108
        $region107: #{_lambda_.1} parent=11 // pred_region
          %s1104 = ssub.s32 16, 16
          %1105 = vsyncadd [#allocation6], %s1104
          %s1107 = sshll.u32 [#allocation5], 4
          %s1108 = int_to_ptr.vmem [resolvable:$true] %s1107
          %1110 = dma.hbm_to_vmem [thread:$0]  %s55, 16, %s1108, [#allocation6]
        $region108: #{_lambda_.1} parent=11 // pred_fallthru
          _
        // Predicated region
        $region109: #{_lambda_.1} parent=11 // pred_check
          %p1111 = pneg %p725
        $region110: #{_lambda_.1} parent=11 // pred_check_branch
          %1113 = sbr.rel (%p1111) target = $region112
        $region111: #{_lambda_.1} parent=11 // pred_region
          _
        $region112: #{_lambda_.1} parent=11 // pred_fallthru
          _
        // Predicated region
        $region113: #{_lambda_.1} parent=11 // pred_check
          %p1114 = pneg %p746
        $region114: #{_lambda_.1} parent=11 // pred_check_branch
          %1116 = sbr.rel (%p1114) target = $region116
        $region115: #{_lambda_.1} parent=11 // pred_region
          %s1118 = ssub.s32 16, 16
          %1119 = vsyncadd [#allocation6], %s1118
          %s1121 = sshll.u32 [#allocation7], 4
          %s1122 = int_to_ptr.vmem [resolvable:$true] %s1121
          %1124 = dma.hbm_to_vmem [thread:$0]  %s59, 16, %s1122, [#allocation6]
        $region116: #{_lambda_.1} parent=11 // pred_fallthru
          _
        // Predicated region
        $region117: #{_lambda_.1} parent=11 // pred_check
          %p1125 = pneg %p767
        $region118: #{_lambda_.1} parent=11 // pred_check_branch
          %1127 = sbr.rel (%p1125) target = $region120
        $region119: #{_lambda_.1} parent=11 // pred_region
          _
        $region120: #{_lambda_.1} parent=11 // pred_fallthru
          _
        // Predicated region
        $region121: #{_lambda_.1} parent=11 // pred_check
          %p1128 = pneg %p788
        $region122: #{_lambda_.1} parent=11 // pred_check_branch
          %1130 = sbr.rel (%p1128) target = $region124
        $region123: #{_lambda_.1} parent=11 // pred_region
          %s1132 = ssub.s32 16, 16
          %1133 = vsyncadd [#allocation9], %s1132
          %s1135 = sshll.u32 [#allocation8], 4
          %s1136 = int_to_ptr.vmem [resolvable:$true] %s1135
          %1138 = dma.hbm_to_vmem [thread:$0]  %s63, 16, %s1136, [#allocation9]
        $region124: #{_lambda_.1} parent=11 // pred_fallthru
          _
        // Predicated region
        $region125: #{_lambda_.1} parent=11 // pred_check
          %p1139 = pneg %p809
        $region126: #{_lambda_.1} parent=11 // pred_check_branch
          %1141 = sbr.rel (%p1139) target = $region128
        $region127: #{_lambda_.1} parent=11 // pred_region
          _
        $region128: #{_lambda_.1} parent=11 // pred_fallthru
          _
        // Predicated region
        $region129: #{_lambda_.1} parent=11 // pred_check
          %p1142 = pneg %p830
        $region130: #{_lambda_.1} parent=11 // pred_check_branch
          %1144 = sbr.rel (%p1142) target = $region132
        $region131: #{_lambda_.1} parent=11 // pred_region
          _
        $region132: #{_lambda_.1} parent=11 // pred_fallthru
          _
        // Predicated region
        $region133: #{_lambda_.1} parent=11 // pred_check
          %p1145 = pneg %p851
        $region134: #{_lambda_.1} parent=11 // pred_check_branch
          %1147 = sbr.rel (%p1145) target = $region136
        $region135: #{_lambda_.1} parent=11 // pred_region
          _
        $region136: #{_lambda_.1} parent=11 // pred_fallthru
          _
        // Predicated region
        $region137: #{_lambda_.1} parent=11 // pred_check
          %p1148 = pneg %p872
        $region138: #{_lambda_.1} parent=11 // pred_check_branch
          %1150 = sbr.rel (%p1148) target = $region140
        $region139: #{_lambda_.1} parent=11 // pred_region
          _
        $region140: #{_lambda_.1} parent=11 // pred_fallthru
          _
        // Predicated region
        $region141: #{_lambda_.1} parent=11 // pred_check
          %p1151 = pneg %p893
        $region142: #{_lambda_.1} parent=11 // pred_check_branch
          %1153 = sbr.rel (%p1151) target = $region144
        $region143: #{_lambda_.1} parent=11 // pred_region
          _
        $region144: #{_lambda_.1} parent=11 // pred_fallthru
          _
        // Predicated region
        $region145: #{_lambda_.1} parent=11 // pred_check
          %p1154 = pneg %p914
        $region146: #{_lambda_.1} parent=11 // pred_check_branch
          %1156 = sbr.rel (%p1154) target = $region148
        $region147: #{_lambda_.1} parent=11 // pred_region
          _
        $region148: #{_lambda_.1} parent=11 // pred_fallthru
          _
        // Predicated region
        $region149: #{_lambda_.1} parent=11 // pred_check
          %p1157 = pneg %p935
        $region150: #{_lambda_.1} parent=11 // pred_check_branch
          %1159 = sbr.rel (%p1157) target = $region152
        $region151: #{_lambda_.1} parent=11 // pred_region
          _
        $region152: #{_lambda_.1} parent=11 // pred_fallthru
          _
        // Predicated region
        $region153: #{_lambda_.1} parent=11 // pred_check
          %p1160 = pneg %p956
        $region154: #{_lambda_.1} parent=11 // pred_check_branch
          %1162 = sbr.rel (%p1160) target = $region156
        $region155: #{_lambda_.1} parent=11 // pred_region
          _
        $region156: #{_lambda_.1} parent=11 // pred_fallthru
          _
      $region12: #{_lambda_.1} parent=5 // pred_fallthru
        _
      %p1163 = scmp.lt.s32.totalorder %s96, 2
      // Predicated region
      $region157: #{_lambda_.1} parent=5 // pred_check
        %p1164 = pneg %p1163
      $region158: #{_lambda_.1} parent=5 // pred_check_branch
        %1166 = sbr.rel (%p1164) target = $region160
      $region159: #{_lambda_.1} parent=5 // pred_region
        // Predicated region
        $region161: #{_lambda_.1} parent=159 // pred_check
          %p1167 = pneg %p116
        $region162: #{_lambda_.1} parent=159 // pred_check_branch
          %1169 = sbr.rel (%p1167) target = $region164
        $region163: #{_lambda_.1} parent=159 // pred_region
          %p1170 = scmp.lt.s32.totalorder %s96, 1
          %s1171 = scalar_select %p1170, %s96, 1
          %s1172 = smul.addr %s1171, 8
          %s1173 = scalar_lea.vmem %s1, %s1172
        $region164: #{_lambda_.1} parent=159 // pred_fallthru
          _
        // Predicated region
        $region165: #{_lambda_.1} parent=159 // pred_check
          %p1174 = pneg %p142
        $region166: #{_lambda_.1} parent=159 // pred_check_branch
          %1176 = sbr.rel (%p1174) target = $region168
        $region167: #{_lambda_.1} parent=159 // pred_region
          %p1177 = scmp.lt.s32.totalorder %s96, 1
          %s1178 = scalar_select %p1177, %s96, 1
          %s1179 = smul.addr %s1178, 4
          %s1180 = scalar_lea.vmem %s3, %s1179
        $region168: #{_lambda_.1} parent=159 // pred_fallthru
          _
        // Predicated region
        $region169: #{_lambda_.1} parent=159 // pred_check
          %p1181 = pneg %p168
        $region170: #{_lambda_.1} parent=159 // pred_check_branch
          %1183 = sbr.rel (%p1181) target = $region172
        $region171: #{_lambda_.1} parent=159 // pred_region
          %p1184 = scmp.lt.s32.totalorder %s96, 1
          %s1185 = scalar_select %p1184, %s96, 1
          %s1186 = smul.addr %s1185, 2
          %s1187 = scalar_lea.vmem %s5, %s1186
        $region172: #{_lambda_.1} parent=159 // pred_fallthru
          _
        // Predicated region
        $region173: #{_lambda_.1} parent=159 // pred_check
          %p1188 = pneg %p194
        $region174: #{_lambda_.1} parent=159 // pred_check_branch
          %1190 = sbr.rel (%p1188) target = $region176
        $region175: #{_lambda_.1} parent=159 // pred_region
          %p1191 = scmp.lt.s32.totalorder %s96, 1
          %s1192 = scalar_select %p1191, %s96, 1
          %s1193 = scalar_lea.vmem %s7, %s1192
        $region176: #{_lambda_.1} parent=159 // pred_fallthru
          _
      $region160: #{_lambda_.1} parent=5 // pred_fallthru
        _
      %p1194 = scmp.le.s32.totalorder 1, %s96
      %p1195 = scmp.lt.s32.totalorder %s96, 3
      %p1196 = pnand %p1194, %p1195
      %p1197 = pneg %p1196
      // Predicated region
      $region177: #{_lambda_.1} parent=5 // pred_check
        _
      $region178: #{_lambda_.1} parent=5 // pred_check_branch
        %1199 = sbr.rel (%p1196) target = $region180
      $region179: #{_lambda_.1} parent=5 // pred_region
        %s1200 = ssub.s32 %s96, 1
        // Predicated region
        $region181: #{_lambda_.1} parent=179 // pred_check
          %p1201 = pneg %p662
        $region182: #{_lambda_.1} parent=179 // pred_check_branch
          %1203 = sbr.rel (%p1201) target = $region184
        $region183: #{_lambda_.1} parent=179 // pred_region
          %1204 = dma.done [#allocation3], 16
        $region184: #{_lambda_.1} parent=179 // pred_fallthru
          _
        // Predicated region
        $region185: #{_lambda_.1} parent=179 // pred_check
          %p1205 = pneg %p704
        $region186: #{_lambda_.1} parent=179 // pred_check_branch
          %1207 = sbr.rel (%p1205) target = $region188
        $region187: #{_lambda_.1} parent=179 // pred_region
          %1208 = dma.done [#allocation6], 16
        $region188: #{_lambda_.1} parent=179 // pred_fallthru
          _
        // Predicated region
        $region189: #{_lambda_.1} parent=179 // pred_check
          %p1209 = pneg %p746
        $region190: #{_lambda_.1} parent=179 // pred_check_branch
          %1211 = sbr.rel (%p1209) target = $region192
        $region191: #{_lambda_.1} parent=179 // pred_region
          %1212 = dma.done [#allocation6], 16
        $region192: #{_lambda_.1} parent=179 // pred_fallthru
          _
        // Predicated region
        $region193: #{_lambda_.1} parent=179 // pred_check
          %p1213 = pneg %p788
        $region194: #{_lambda_.1} parent=179 // pred_check_branch
          %1215 = sbr.rel (%p1213) target = $region196
        $region195: #{_lambda_.1} parent=179 // pred_region
          %1216 = dma.done [#allocation9], 16
        $region196: #{_lambda_.1} parent=179 // pred_fallthru
          _
        %p1217 = scmp.lt.s32.totalorder %s101, 1
        %s1218 = scalar_select %p1217, %s101, 1
        %s1219 = smul.addr %s1218, 8
        %s1220 = scalar_lea.vmem %s1, %s1219
        %p1221 = pneg %p122
        %p1222 = pneg %p119
        %p1223 = scmp.lt.s32.totalorder %s101, 1
        %s1224 = scalar_select %p1223, %s101, 1
        %s1225 = smul.addr %s1224, 4
        %s1226 = scalar_lea.vmem %s3, %s1225
        %p1227 = pneg %p148
        %p1228 = pneg %p145
        %p1229 = scmp.lt.s32.totalorder %s101, 1
        %s1230 = scalar_select %p1229, %s101, 1
        %s1231 = smul.addr %s1230, 2
        %s1232 = scalar_lea.vmem %s5, %s1231
        %p1233 = pneg %p174
        %p1234 = pneg %p171
        %p1235 = scmp.lt.s32.totalorder %s101, 1
        %s1236 = scalar_select %p1235, %s101, 1
        %s1237 = scalar_lea.vmem %s7, %s1236
        %p1238 = pneg %p200
        %p1239 = pneg %p197
        %p1240 = pneg %p221
        %p1241 = pneg %p218
        %p1242 = pneg %p242
        %p1243 = pneg %p239
        %p1244 = pneg %p263
        %p1245 = pneg %p260
        %p1246 = pneg %p284
        %p1247 = pneg %p281
        %p1248 = pneg %p305
        %p1249 = pneg %p302
        %p1250 = pneg %p326
        %p1251 = pneg %p323
        %p1252 = pneg %p347
        %p1253 = pneg %p344
        %p1254 = pneg %p368
        %p1255 = pneg %p365
        %p1256 = pneg %p389
        %p1257 = pneg %p386
        %p1258 = pneg %p410
        %p1259 = pneg %p407
        %p1260 = pneg %p431
        %p1261 = pneg %p428
        %p1262 = pneg %p452
        %p1263 = pneg %p449
        %p1264 = pneg %p473
        %p1265 = pneg %p470
        %p1266 = pneg %p494
        %p1267 = pneg %p491
        %p1268 = pneg %p515
        %p1269 = pneg %p512
        %p1270 = pneg %p536
        %p1271 = pneg %p533
        %p1272 = pneg %p557
        %p1273 = pneg %p554
        %p1274 = pneg %p578
        %p1275 = pneg %p575
        %p1276 = pneg %p599
        %p1277 = pneg %p596
        %p1278 = pneg %p620
        %p1279 = pneg %p617
        %p1280 = pneg %p641
        %p1281 = pneg %p638
        %p1282 = pneg %p662
        %p1283 = pneg %p659
        %p1284 = pneg %p683
        %p1285 = pneg %p680
        %p1286 = pneg %p704
        %p1287 = pneg %p701
        %p1288 = pneg %p725
        %p1289 = pneg %p722
        %p1290 = pneg %p746
        %p1291 = pneg %p743
        %p1292 = pneg %p767
        %p1293 = pneg %p764
        %p1294 = pneg %p788
        %p1295 = pneg %p785
        %p1296 = pneg %p809
        %p1297 = pneg %p806
        %p1298 = pneg %p830
        %p1299 = pneg %p827
        %p1300 = pneg %p851
        %p1301 = pneg %p848
        %p1302 = pneg %p872
        %p1303 = pneg %p869
        %p1304 = pneg %p893
        %p1305 = pneg %p890
        %p1306 = pneg %p914
        %p1307 = pneg %p911
        %p1308 = pneg %p935
        %p1309 = pneg %p932
        %p1310 = pneg %p956
        %p1311 = pneg %p953
        %p1312 = pneg %p982
        %p1313 = pneg %p979
        %s1314 = sand.u32 %s969, 1
        %s1315 = scalar_lea.sflag [#allocation4], %s1314
        %s1316 = sand.u32 %s969, 1
        %s1317 = smul.addr %s1316, 8
        %s1318 = scalar_lea.vmem [#allocation10], %s1317
        %p1319 = pneg %p1008
        %p1320 = pneg %p1005
        %p1321 = scmp.lt.s32.totalorder %s101, 1
        %s1322 = scalar_select %p1321, %s101, 1
        %s1323 = smul.addr %s1322, 4
        %s1324 = scalar_lea.vmem %s83, %s1323
        %p1325 = scmp.lt.s32.totalorder %s101, 1
        %s1326 = scalar_select %p1325, %s101, 1
        %s1327 = smul.addr %s1326, 8
        %s1328 = scalar_lea.vmem %s1, %s1327
        %p1329 = scmp.lt.s32.totalorder %s101, 1
        %s1330 = scalar_select %p1329, %s101, 1
        %s1331 = smul.addr %s1330, 4
        %s1332 = scalar_lea.vmem %s3, %s1331
        %p1333 = scmp.lt.s32.totalorder %s101, 1
        %s1334 = scalar_select %p1333, %s101, 1
        %s1335 = smul.addr %s1334, 2
        %s1336 = scalar_lea.vmem %s5, %s1335
        %p1337 = scmp.lt.s32.totalorder %s101, 1
        %s1338 = scalar_select %p1337, %s101, 1
        %s1339 = scalar_lea.vmem %s7, %s1338
        %p1340 = scmp.lt.s32.totalorder %s101, 1
        %s1341 = scalar_select %p1340, %s101, 1
        %s1342 = smul.addr %s1341, 4
        %s1343 = scalar_lea.vmem %s83, %s1342
        %v1345 = vld [vmem:[%s1328] sm:$0x3f]
        %v1346 = vld [vmem:[%s1336] sm:$0x3]
        %v1347 = vld [vmem:[%s1332] sm:$0x7]
        %v1348 = vld [vmem:[%s1339] sm:$0x1]
        %vm1349 = vcmp.gt.f32.partialorder %v1348, 0.0
        %v1350 = vsel %vm1349, 0.0, -1e+09
        %v1351 = vpack.c.bf16 %v1345, %v1345
        %v1352 = vld [vmem:[%s9] sm:$0xf]
        %v1353 = vld [vmem:[%s9 + $0x4] sm:$0x1]
        %v1354 = vld [vmem:[%s11] sm:$0x1]
        %v1356 = vlaneseq
        %v1357 = vshrl.u32 %v1356, 7
        %v1358 = vsub.s32 0, %v1357
        %v1359 = vrot.slane %v1354, %v1358
        %v1363 = vunpack.c.l.b16 %v1352
        %v1364 = vunpack.c.l.b16 %v1353
        %v1365 = vpack.c.b16 %v1364, %v1363
        %vm1366 = vcmask 80896
        %v1368 = vsel %vm1366, %v1351, 0
        %vm1370 = vcmask 1044480
        %v1372 = vsel %vm1370, %v1365, 0
        %1374 = vmatprep.subr.bf16.mxu0 0
        %1375 = vmatpush1.bf16.msra.mxu0 %v1372
        %1376 = vmatprep.subr.bf16.mxu0 0
        %1377 = vmatpush1.bf16.msra.mxu0 0
        %1378 = vmatprep.subr.bf16.mxu0 0
        %1379 = vmatpush1.bf16.msra.mxu0 0
        %1380 = vmatprep.subr.bf16.mxu0 0
        %1381 = vmatpush1.bf16.msra.mxu0 0
        %1382 = vmatprep.subr.bf16.mxu0 0
        %1383 = vmatpush1.bf16.msra.mxu0 0
        %1384 = vmatprep.subr.bf16.mxu0 0
        %1385 = vmatpush1.bf16.msra.mxu0 0
        %1386 = vmatprep.subr.bf16.mxu0 0
        %1387 = vmatpush1.bf16.msra.mxu0 0
        %1388 = vmatprep.subr.bf16.mxu0 0
        %1389 = vmatpush1.bf16.msra.mxu0 0
        %1390 = vmatprep.subr.bf16.mxu0 0
        %1391 = vmatpush1.bf16.msra.mxu0 0
        %1392 = vmatprep.subr.bf16.mxu0 0
        %1393 = vmatpush1.bf16.msra.mxu0 0
        %1394 = vmatprep.subr.bf16.mxu0 0
        %1395 = vmatpush1.bf16.msra.mxu0 0
        %1396 = vmatprep.subr.bf16.mxu0 0
        %1397 = vmatpush1.bf16.msra.mxu0 0
        %1398 = vmatprep.subr.bf16.mxu0 0
        %1399 = vmatpush1.bf16.msra.mxu0 0
        %1400 = vmatprep.subr.bf16.mxu0 0
        %1401 = vmatpush1.bf16.msra.mxu0 0
        %1402 = vmatprep.subr.bf16.mxu0 0
        %1403 = vmatpush1.bf16.msra.mxu0 0
        %1404 = vmatprep.subr.bf16.mxu0 0
        %1405 = vmatpush1.bf16.msra.mxu0 0
        %1406 = vmatprep.mubr.bf16.mxu0 0
        %1407 = vmatmul.mubr.bf16.gmra.mrb[0].mxu0 %v1368
        %v1408 = vpop.f32.mrb[0].mxu0
        %v1409 = vadd.f32 %v1359, %v1408
        %v1410 = vpop.f32.mrb[0].mxu0
        %v1411 = vpop.f32.mrb[0].mxu0
        %v1412 = vpop.f32.mrb[0].mxu0
        %1413 = vdwg.mxu0
        %v1415 = vrot.slane %v1346, 2
        %vm1417 = vcmask 1045504
        %v1418 = vsel %vm1417, %v1409, %v1415
        %vm1419 = vcmask 261120
        %1420 = vst.msk [vmem:[%s1318] sm:$0xff] %vm1419, %v1418
        %v1421 = vpack.c.bf16 %v1418, %v1418
        %v1422 = vld [vmem:[%s17] sm:$0xf]
        %v1423 = vld [vmem:[%s17 + $0x4] sm:$0xf]
        %v1424 = vld [vmem:[%s17 + $0x8] sm:$0xf]
        %v1425 = vld [vmem:[%s17 + $0xc] sm:$0xf]
        %v1426 = vld [vmem:[%s19] sm:$0x1]
        %v1428 = vlaneseq
        %v1429 = vshrl.u32 %v1428, 7
        %v1430 = vsub.s32 0, %v1429
        %v1431 = vrot.slane %v1426, %v1430
        %v1437 = vunpack.c.l.b16 %v1422
        %v1438 = vunpack.c.l.b16 %v1423
        %v1439 = vunpack.c.l.b16 %v1424
        %v1440 = vunpack.c.l.b16 %v1425
        %v1441 = vpack.c.b16 %v1438, %v1437
        %v1442 = vpack.c.b16 %v1440, %v1439
        %v1446 = vsel %vm1419, %v1421, 0
        %1448 = vmatprep.subr.bf16.mxu0 0
        %1449 = vmatpush1.bf16.msra.mxu0 %v1441
        %1450 = vmatprep.subr.bf16.mxu0 0
        %1451 = vmatpush1.bf16.msra.mxu0 %v1442
        %1452 = vmatprep.subr.bf16.mxu0 0
        %1453 = vmatpush1.bf16.msra.mxu0 0
        %1454 = vmatprep.subr.bf16.mxu0 0
        %1455 = vmatpush1.bf16.msra.mxu0 0
        %1456 = vmatprep.subr.bf16.mxu0 0
        %1457 = vmatpush1.bf16.msra.mxu0 0
        %1458 = vmatprep.subr.bf16.mxu0 0
        %1459 = vmatpush1.bf16.msra.mxu0 0
        %1460 = vmatprep.subr.bf16.mxu0 0
        %1461 = vmatpush1.bf16.msra.mxu0 0
        %1462 = vmatprep.subr.bf16.mxu0 0
        %1463 = vmatpush1.bf16.msra.mxu0 0
        %1464 = vmatprep.subr.bf16.mxu0 0
        %1465 = vmatpush1.bf16.msra.mxu0 0
        %1466 = vmatprep.subr.bf16.mxu0 0
        %1467 = vmatpush1.bf16.msra.mxu0 0
        %1468 = vmatprep.subr.bf16.mxu0 0
        %1469 = vmatpush1.bf16.msra.mxu0 0
        %1470 = vmatprep.subr.bf16.mxu0 0
        %1471 = vmatpush1.bf16.msra.mxu0 0
        %1472 = vmatprep.subr.bf16.mxu0 0
        %1473 = vmatpush1.bf16.msra.mxu0 0
        %1474 = vmatprep.subr.bf16.mxu0 0
        %1475 = vmatpush1.bf16.msra.mxu0 0
        %1476 = vmatprep.subr.bf16.mxu0 0
        %1477 = vmatpush1.bf16.msra.mxu0 0
        %1478 = vmatprep.subr.bf16.mxu0 0
        %1479 = vmatpush1.bf16.msra.mxu0 0
        %1480 = vmatprep.mubr.bf16.mxu0 0
        %1481 = vmatmul.mubr.bf16.gmra.mrb[0].mxu0 %v1446
        %v1482 = vpop.f32.mrb[0].mxu0
        %v1483 = vadd.f32 %v1431, %v1482
        %v1484 = vpop.f32.mrb[0].mxu0
        %v1485 = vpop.f32.mrb[0].mxu0
        %v1486 = vpop.f32.mrb[0].mxu0
        %1487 = vdwg.mxu0
        %v1488 = vpack.c.bf16 %v1483, %v1483
        %v1489 = vld [vmem:[%s21] sm:$0xf]
        %v1490 = vld [vmem:[%s21 + $0x4] sm:$0xf]
        %v1491 = vld [vmem:[%s21 + $0x8] sm:$0xf]
        %v1492 = vld [vmem:[%s21 + $0xc] sm:$0xf]
        %1494 = vrot.lane.b32.xlu0 %v1488, 96
        %v1495 = vpop.permute.xlu0 %1494
        %vm1496 = vcmask 64512
        %v1498 = vsel %vm1496, %v1488, 0
        %v1501 = vsel %vm1496, %v1495, 0
        %1503 = vmatprep.subr.bf16.mxu0 0
        %1504 = vmatpush1.bf16.xpose.msra.mxu0 %v1501
        %1505 = vmatprep.subr.bf16.mxu0 0
        %1506 = vmatpush1.bf16.xpose.msra.mxu0 0
        %1507 = vmatprep.subr.bf16.mxu0 0
        %1508 = vmatpush1.bf16.xpose.msra.mxu0 0
        %1509 = vmatprep.subr.bf16.mxu0 0
        %1510 = vmatpush1.bf16.xpose.msra.mxu0 0
        %1511 = vmatprep.subr.bf16.mxu0 0
        %1512 = vmatpush1.bf16.xpose.msra.mxu0 0
        %1513 = vmatprep.subr.bf16.mxu0 0
        %1514 = vmatpush1.bf16.xpose.msra.mxu0 0
        %1515 = vmatprep.subr.bf16.mxu0 0
        %1516 = vmatpush1.bf16.xpose.msra.mxu0 0
        %1517 = vmatprep.subr.bf16.mxu0 0
        %1518 = vmatpush1.bf16.xpose.msra.mxu0 0
        %1519 = vmatprep.subr.bf16.mxu0 0
        %1520 = vmatpush1.bf16.xpose.msra.mxu0 0
        %1521 = vmatprep.subr.bf16.mxu0 0
        %1522 = vmatpush1.bf16.xpose.msra.mxu0 0
        %1523 = vmatprep.subr.bf16.mxu0 0
        %1524 = vmatpush1.bf16.xpose.msra.mxu0 0
        %1525 = vmatprep.subr.bf16.mxu0 0
        %1526 = vmatpush1.bf16.xpose.msra.mxu0 0
        %1527 = vmatprep.subr.bf16.mxu0 0
        %1528 = vmatpush1.bf16.xpose.msra.mxu0 0
        %1529 = vmatprep.subr.bf16.mxu0 0
        %1530 = vmatpush1.bf16.xpose.msra.mxu0 0
        %1531 = vmatprep.subr.bf16.mxu0 0
        %1532 = vmatpush1.bf16.xpose.msra.mxu0 0
        %1533 = vmatprep.subr.bf16.mxu0 0
        %1534 = vmatpush1.bf16.xpose.msra.mxu0 0
        %1535 = vmatprep.mubr.bf16.mxu0 0
        %1536 = vmatmul.mubr.bf16.gmra.mrb[0].mxu0 %v1498
        %v1537 = vpop.f32.mrb[0].mxu0
        %v1538 = vadd.f32 0.0, %v1537
        %v1539 = vpop.f32.mrb[0].mxu0
        %v1540 = vpop.f32.mrb[0].mxu0
        %v1541 = vpop.f32.mrb[0].mxu0
        %1542 = vdwg.mxu0
        %v1543 = vmul.f32 %v1538, 0.35355338
        %v1545 = vlaneseq
        %v1546 = vshrl.u32 %v1545, 7
        %v1547 = vsub.s32 0, %v1546
        %v1548 = vrot.slane %v1350, %v1547
        %v1550 = vadd.f32 %v1543, %v1548
        %v1551 = vsel %vm1496, %v1550, -inf
        %1552 = vmax.xlane.f32.xlu0 %v1551
        %v1553 = vpop.xlane.xlu0 %1552
        %v1554 = vsub.f32 %v1550, %v1553
        %v1555 = vmul.f32 %v1554, 1.442695
        %v1556 = vpow.pop %v1555
        %v1557 = vsel %vm1496, %v1556, 0.0
        %1558 = vadd.xlane.f32.xlu0 %v1557
        %v1559 = vpop.xlane.xlu0 %1558
        %v1560 = vrcp.pop %v1559
        %v1561 = vmul.f32 %v1556, %v1560
        %v1562 = vpack.c.bf16 %v1561, %v1561
        %1563 = vrot.lane.b32.xlu0 %v1488, 64
        %v1564 = vpop.permute.xlu0 %1563
        %v1566 = vsel %vm1496, %v1562, 0
        %vm1568 = vcmask 1043456
        %v1570 = vsel %vm1568, %v1564, 0
        %1572 = vmatprep.subr.bf16.mxu0 0
        %1573 = vmatpush1.bf16.msra.mxu0 %v1570
        %1574 = vmatprep.subr.bf16.mxu0 0
        %1575 = vmatpush1.bf16.msra.mxu0 0
        %1576 = vmatprep.subr.bf16.mxu0 0
        %1577 = vmatpush1.bf16.msra.mxu0 0
        %1578 = vmatprep.subr.bf16.mxu0 0
        %1579 = vmatpush1.bf16.msra.mxu0 0
        %1580 = vmatprep.subr.bf16.mxu0 0
        %1581 = vmatpush1.bf16.msra.mxu0 0
        %1582 = vmatprep.subr.bf16.mxu0 0
        %1583 = vmatpush1.bf16.msra.mxu0 0
        %1584 = vmatprep.subr.bf16.mxu0 0
        %1585 = vmatpush1.bf16.msra.mxu0 0
        %1586 = vmatprep.subr.bf16.mxu0 0
        %1587 = vmatpush1.bf16.msra.mxu0 0
        %1588 = vmatprep.subr.bf16.mxu0 0
        %1589 = vmatpush1.bf16.msra.mxu0 0
        %1590 = vmatprep.subr.bf16.mxu0 0
        %1591 = vmatpush1.bf16.msra.mxu0 0
        %1592 = vmatprep.subr.bf16.mxu0 0
        %1593 = vmatpush1.bf16.msra.mxu0 0
        %1594 = vmatprep.subr.bf16.mxu0 0
        %1595 = vmatpush1.bf16.msra.mxu0 0
        %1596 = vmatprep.subr.bf16.mxu0 0
        %1597 = vmatpush1.bf16.msra.mxu0 0
        %1598 = vmatprep.subr.bf16.mxu0 0
        %1599 = vmatpush1.bf16.msra.mxu0 0
        %1600 = vmatprep.subr.bf16.mxu0 0
        %1601 = vmatpush1.bf16.msra.mxu0 0
        %1602 = vmatprep.subr.bf16.mxu0 0
        %1603 = vmatpush1.bf16.msra.mxu0 0
        %1604 = vmatprep.mubr.bf16.mxu0 0
        %1605 = vmatmul.mubr.bf16.gmra.mrb[0].mxu0 %v1566
        %v1606 = vpop.f32.mrb[0].mxu0
        %v1607 = vadd.f32 0.0, %v1606
        %v1608 = vpop.f32.mrb[0].mxu0
        %v1609 = vpop.f32.mrb[0].mxu0
        %v1610 = vpop.f32.mrb[0].mxu0
        %1611 = vdwg.mxu0
        %v1612 = vpack.c.bf16 %v1607, %v1607
        %1613 = vrot.lane.b32.xlu0 %v1488, 120
        %v1614 = vpop.permute.xlu0 %1613
        %1615 = vrot.lane.b32.xlu0 %v1488, 88
        %v1616 = vpop.permute.xlu0 %1615
        %v1618 = vsel %vm1496, %v1614, 0
        %v1621 = vsel %vm1496, %v1616, 0
        %1623 = vmatprep.subr.bf16.mxu0 0
        %1624 = vmatpush1.bf16.xpose.msra.mxu0 %v1621
        %1625 = vmatprep.subr.bf16.mxu0 0
        %1626 = vmatpush1.bf16.xpose.msra.mxu0 0
        %1627 = vmatprep.subr.bf16.mxu0 0
        %1628 = vmatpush1.bf16.xpose.msra.mxu0 0
        %1629 = vmatprep.subr.bf16.mxu0 0
        %1630 = vmatpush1.bf16.xpose.msra.mxu0 0
        %1631 = vmatprep.subr.bf16.mxu0 0
        %1632 = vmatpush1.bf16.xpose.msra.mxu0 0
        %1633 = vmatprep.subr.bf16.mxu0 0
        %1634 = vmatpush1.bf16.xpose.msra.mxu0 0
        %1635 = vmatprep.subr.bf16.mxu0 0
        %1636 = vmatpush1.bf16.xpose.msra.mxu0 0
        %1637 = vmatprep.subr.bf16.mxu0 0
        %1638 = vmatpush1.bf16.xpose.msra.mxu0 0
        %1639 = vmatprep.subr.bf16.mxu0 0
        %1640 = vmatpush1.bf16.xpose.msra.mxu0 0
        %1641 = vmatprep.subr.bf16.mxu0 0
        %1642 = vmatpush1.bf16.xpose.msra.mxu0 0
        %1643 = vmatprep.subr.bf16.mxu0 0
        %1644 = vmatpush1.bf16.xpose.msra.mxu0 0
        %1645 = vmatprep.subr.bf16.mxu0 0
        %1646 = vmatpush1.bf16.xpose.msra.mxu0 0
        %1647 = vmatprep.subr.bf16.mxu0 0
        %1648 = vmatpush1.bf16.xpose.msra.mxu0 0
        %1649 = vmatprep.subr.bf16.mxu0 0
        %1650 = vmatpush1.bf16.xpose.msra.mxu0 0
        %1651 = vmatprep.subr.bf16.mxu0 0
        %1652 = vmatpush1.bf16.xpose.msra.mxu0 0
        %1653 = vmatprep.subr.bf16.mxu0 0
        %1654 = vmatpush1.bf16.xpose.msra.mxu0 0
        %1655 = vmatprep.mubr.bf16.mxu0 0
        %1656 = vmatmul.mubr.bf16.gmra.mrb[0].mxu0 %v1618
        %v1657 = vpop.f32.mrb[0].mxu0
        %v1658 = vadd.f32 0.0, %v1657
        %v1659 = vpop.f32.mrb[0].mxu0
        %v1660 = vpop.f32.mrb[0].mxu0
        %v1661 = vpop.f32.mrb[0].mxu0
        %1662 = vdwg.mxu0
        %v1663 = vmul.f32 %v1658, 0.35355338
        %v1664 = vadd.f32 %v1663, %v1548
        %v1665 = vsel %vm1496, %v1664, -inf
        %1666 = vmax.xlane.f32.xlu0 %v1665
        %v1667 = vpop.xlane.xlu0 %1666
        %v1668 = vsub.f32 %v1664, %v1667
        %v1669 = vmul.f32 %v1668, 1.442695
        %v1670 = vpow.pop %v1669
        %v1671 = vsel %vm1496, %v1670, 0.0
        %1672 = vadd.xlane.f32.xlu0 %v1671
        %v1673 = vpop.xlane.xlu0 %1672
        %v1674 = vrcp.pop %v1673
        %v1675 = vmul.f32 %v1670, %v1674
        %v1676 = vpack.c.bf16 %v1675, %v1675
        %1677 = vrot.lane.b32.xlu0 %v1488, 56
        %v1678 = vpop.permute.xlu0 %1677
        %v1680 = vsel %vm1496, %v1676, 0
        %v1683 = vsel %vm1568, %v1678, 0
        %1685 = vmatprep.subr.bf16.mxu0 0
        %1686 = vmatpush1.bf16.msra.mxu0 %v1683
        %1687 = vmatprep.subr.bf16.mxu0 0
        %1688 = vmatpush1.bf16.msra.mxu0 0
        %1689 = vmatprep.subr.bf16.mxu0 0
        %1690 = vmatpush1.bf16.msra.mxu0 0
        %1691 = vmatprep.subr.bf16.mxu0 0
        %1692 = vmatpush1.bf16.msra.mxu0 0
        %1693 = vmatprep.subr.bf16.mxu0 0
        %1694 = vmatpush1.bf16.msra.mxu0 0
        %1695 = vmatprep.subr.bf16.mxu0 0
        %1696 = vmatpush1.bf16.msra.mxu0 0
        %1697 = vmatprep.subr.bf16.mxu0 0
        %1698 = vmatpush1.bf16.msra.mxu0 0
        %1699 = vmatprep.subr.bf16.mxu0 0
        %1700 = vmatpush1.bf16.msra.mxu0 0
        %1701 = vmatprep.subr.bf16.mxu0 0
        %1702 = vmatpush1.bf16.msra.mxu0 0
        %1703 = vmatprep.subr.bf16.mxu0 0
        %1704 = vmatpush1.bf16.msra.mxu0 0
        %1705 = vmatprep.subr.bf16.mxu0 0
        %1706 = vmatpush1.bf16.msra.mxu0 0
        %1707 = vmatprep.subr.bf16.mxu0 0
        %1708 = vmatpush1.bf16.msra.mxu0 0
        %1709 = vmatprep.subr.bf16.mxu0 0
        %1710 = vmatpush1.bf16.msra.mxu0 0
        %1711 = vmatprep.subr.bf16.mxu0 0
        %1712 = vmatpush1.bf16.msra.mxu0 0
        %1713 = vmatprep.subr.bf16.mxu0 0
        %1714 = vmatpush1.bf16.msra.mxu0 0
        %1715 = vmatprep.subr.bf16.mxu0 0
        %1716 = vmatpush1.bf16.msra.mxu0 0
        %1717 = vmatprep.mubr.bf16.mxu0 0
        %1718 = vmatmul.mubr.bf16.gmra.mrb[0].mxu0 %v1680
        %v1719 = vpop.f32.mrb[0].mxu0
        %v1720 = vadd.f32 0.0, %v1719
        %v1721 = vpop.f32.mrb[0].mxu0
        %v1722 = vpop.f32.mrb[0].mxu0
        %v1723 = vpop.f32.mrb[0].mxu0
        %1724 = vdwg.mxu0
        %v1725 = vpack.c.bf16 %v1720, %v1720
        %v1727 = vsel %vm1496, %v1725, 0
        %v1730 = vsel %vm1568, %v1490, 0
        %1732 = vmatprep.subr.bf16.mxu0 0
        %1733 = vmatpush1.bf16.msra.mxu0 %v1730
        %1734 = vmatprep.subr.bf16.mxu0 0
        %1735 = vmatpush1.bf16.msra.mxu0 0
        %1736 = vmatprep.subr.bf16.mxu0 0
        %1737 = vmatpush1.bf16.msra.mxu0 0
        %1738 = vmatprep.subr.bf16.mxu0 0
        %1739 = vmatpush1.bf16.msra.mxu0 0
        %1740 = vmatprep.subr.bf16.mxu0 0
        %1741 = vmatpush1.bf16.msra.mxu0 0
        %1742 = vmatprep.subr.bf16.mxu0 0
        %1743 = vmatpush1.bf16.msra.mxu0 0
        %1744 = vmatprep.subr.bf16.mxu0 0
        %1745 = vmatpush1.bf16.msra.mxu0 0
        %1746 = vmatprep.subr.bf16.mxu0 0
        %1747 = vmatpush1.bf16.msra.mxu0 0
        %1748 = vmatprep.subr.bf16.mxu0 0
        %1749 = vmatpush1.bf16.msra.mxu0 0
        %1750 = vmatprep.subr.bf16.mxu0 0
        %1751 = vmatpush1.bf16.msra.mxu0 0
        %1752 = vmatprep.subr.bf16.mxu0 0
        %1753 = vmatpush1.bf16.msra.mxu0 0
        %1754 = vmatprep.subr.bf16.mxu0 0
        %1755 = vmatpush1.bf16.msra.mxu0 0
        %1756 = vmatprep.subr.bf16.mxu0 0
        %1757 = vmatpush1.bf16.msra.mxu0 0
        %1758 = vmatprep.subr.bf16.mxu0 0
        %1759 = vmatpush1.bf16.msra.mxu0 0
        %1760 = vmatprep.subr.bf16.mxu0 0
        %1761 = vmatpush1.bf16.msra.mxu0 0
        %1762 = vmatprep.subr.bf16.mxu0 0
        %1763 = vmatpush1.bf16.msra.mxu0 0
        %1764 = vmatprep.mubr.bf16.mxu0 0
        %1765 = vmatmul.mubr.bf16.gmra.mrb[0].mxu0 %v1727
        %v1766 = vpop.f32.mrb[0].mxu0
        %v1767 = vadd.f32 0.0, %v1766
        %v1768 = vpop.f32.mrb[0].mxu0
        %v1769 = vpop.f32.mrb[0].mxu0
        %v1770 = vpop.f32.mrb[0].mxu0
        %1771 = vdwg.mxu0
        %v1773 = vsel %vm1496, %v1612, 0
        %v1776 = vsel %vm1568, %v1489, 0
        %1778 = vmatprep.subr.bf16.mxu0 0
        %1779 = vmatpush1.bf16.msra.mxu0 %v1776
        %1780 = vmatprep.subr.bf16.mxu0 0
        %1781 = vmatpush1.bf16.msra.mxu0 0
        %1782 = vmatprep.subr.bf16.mxu0 0
        %1783 = vmatpush1.bf16.msra.mxu0 0
        %1784 = vmatprep.subr.bf16.mxu0 0
        %1785 = vmatpush1.bf16.msra.mxu0 0
        %1786 = vmatprep.subr.bf16.mxu0 0
        %1787 = vmatpush1.bf16.msra.mxu0 0
        %1788 = vmatprep.subr.bf16.mxu0 0
        %1789 = vmatpush1.bf16.msra.mxu0 0
        %1790 = vmatprep.subr.bf16.mxu0 0
        %1791 = vmatpush1.bf16.msra.mxu0 0
        %1792 = vmatprep.subr.bf16.mxu0 0
        %1793 = vmatpush1.bf16.msra.mxu0 0
        %1794 = vmatprep.subr.bf16.mxu0 0
        %1795 = vmatpush1.bf16.msra.mxu0 0
        %1796 = vmatprep.subr.bf16.mxu0 0
        %1797 = vmatpush1.bf16.msra.mxu0 0
        %1798 = vmatprep.subr.bf16.mxu0 0
        %1799 = vmatpush1.bf16.msra.mxu0 0
        %1800 = vmatprep.subr.bf16.mxu0 0
        %1801 = vmatpush1.bf16.msra.mxu0 0
        %1802 = vmatprep.subr.bf16.mxu0 0
        %1803 = vmatpush1.bf16.msra.mxu0 0
        %1804 = vmatprep.subr.bf16.mxu0 0
        %1805 = vmatpush1.bf16.msra.mxu0 0
        %1806 = vmatprep.subr.bf16.mxu0 0
        %1807 = vmatpush1.bf16.msra.mxu0 0
        %1808 = vmatprep.subr.bf16.mxu0 0
        %1809 = vmatpush1.bf16.msra.mxu0 0
        %1810 = vmatprep.mubr.bf16.mxu0 0
        %1811 = vmatmul.mubr.bf16.gmra.mrb[0].mxu0 %v1773
        %v1812 = vpop.f32.mrb[0].mxu0
        %v1813 = vadd.f32 %v1767, %v1812
        %v1814 = vpop.f32.mrb[0].mxu0
        %v1815 = vpop.f32.mrb[0].mxu0
        %v1816 = vpop.f32.mrb[0].mxu0
        %1817 = vdwg.mxu0
        %1818 = vrot.lane.b32.xlu0 %v1488, 112
        %v1819 = vpop.permute.xlu0 %1818
        %1820 = vrot.lane.b32.xlu0 %v1488, 80
        %v1821 = vpop.permute.xlu0 %1820
        %v1823 = vsel %vm1496, %v1819, 0
        %v1826 = vsel %vm1496, %v1821, 0
        %1828 = vmatprep.subr.bf16.mxu0 0
        %1829 = vmatpush1.bf16.xpose.msra.mxu0 %v1826
        %1830 = vmatprep.subr.bf16.mxu0 0
        %1831 = vmatpush1.bf16.xpose.msra.mxu0 0
        %1832 = vmatprep.subr.bf16.mxu0 0
        %1833 = vmatpush1.bf16.xpose.msra.mxu0 0
        %1834 = vmatprep.subr.bf16.mxu0 0
        %1835 = vmatpush1.bf16.xpose.msra.mxu0 0
        %1836 = vmatprep.subr.bf16.mxu0 0
        %1837 = vmatpush1.bf16.xpose.msra.mxu0 0
        %1838 = vmatprep.subr.bf16.mxu0 0
        %1839 = vmatpush1.bf16.xpose.msra.mxu0 0
        %1840 = vmatprep.subr.bf16.mxu0 0
        %1841 = vmatpush1.bf16.xpose.msra.mxu0 0
        %1842 = vmatprep.subr.bf16.mxu0 0
        %1843 = vmatpush1.bf16.xpose.msra.mxu0 0
        %1844 = vmatprep.subr.bf16.mxu0 0
        %1845 = vmatpush1.bf16.xpose.msra.mxu0 0
        %1846 = vmatprep.subr.bf16.mxu0 0
        %1847 = vmatpush1.bf16.xpose.msra.mxu0 0
        %1848 = vmatprep.subr.bf16.mxu0 0
        %1849 = vmatpush1.bf16.xpose.msra.mxu0 0
        %1850 = vmatprep.subr.bf16.mxu0 0
        %1851 = vmatpush1.bf16.xpose.msra.mxu0 0
        %1852 = vmatprep.subr.bf16.mxu0 0
        %1853 = vmatpush1.bf16.xpose.msra.mxu0 0
        %1854 = vmatprep.subr.bf16.mxu0 0
        %1855 = vmatpush1.bf16.xpose.msra.mxu0 0
        %1856 = vmatprep.subr.bf16.mxu0 0
        %1857 = vmatpush1.bf16.xpose.msra.mxu0 0
        %1858 = vmatprep.subr.bf16.mxu0 0
        %1859 = vmatpush1.bf16.xpose.msra.mxu0 0
        %1860 = vmatprep.mubr.bf16.mxu0 0
        %1861 = vmatmul.mubr.bf16.gmra.mrb[0].mxu0 %v1823
        %v1862 = vpop.f32.mrb[0].mxu0
        %v1863 = vadd.f32 0.0, %v1862
        %v1864 = vpop.f32.mrb[0].mxu0
        %v1865 = vpop.f32.mrb[0].mxu0
        %v1866 = vpop.f32.mrb[0].mxu0
        %1867 = vdwg.mxu0
        %v1868 = vmul.f32 %v1863, 0.35355338
        %v1869 = vadd.f32 %v1868, %v1548
        %v1870 = vsel %vm1496, %v1869, -inf
        %1871 = vmax.xlane.f32.xlu0 %v1870
        %v1872 = vpop.xlane.xlu0 %1871
        %v1873 = vsub.f32 %v1869, %v1872
        %v1874 = vmul.f32 %v1873, 1.442695
        %v1875 = vpow.pop %v1874
        %v1876 = vsel %vm1496, %v1875, 0.0
        %1877 = vadd.xlane.f32.xlu0 %v1876
        %v1878 = vpop.xlane.xlu0 %1877
        %v1879 = vrcp.pop %v1878
        %v1880 = vmul.f32 %v1875, %v1879
        %v1881 = vpack.c.bf16 %v1880, %v1880
        %1882 = vrot.lane.b32.xlu0 %v1488, 48
        %v1883 = vpop.permute.xlu0 %1882
        %v1885 = vsel %vm1496, %v1881, 0
        %v1888 = vsel %vm1568, %v1883, 0
        %1890 = vmatprep.subr.bf16.mxu0 0
        %1891 = vmatpush1.bf16.msra.mxu0 %v1888
        %1892 = vmatprep.subr.bf16.mxu0 0
        %1893 = vmatpush1.bf16.msra.mxu0 0
        %1894 = vmatprep.subr.bf16.mxu0 0
        %1895 = vmatpush1.bf16.msra.mxu0 0
        %1896 = vmatprep.subr.bf16.mxu0 0
        %1897 = vmatpush1.bf16.msra.mxu0 0
        %1898 = vmatprep.subr.bf16.mxu0 0
        %1899 = vmatpush1.bf16.msra.mxu0 0
        %1900 = vmatprep.subr.bf16.mxu0 0
        %1901 = vmatpush1.bf16.msra.mxu0 0
        %1902 = vmatprep.subr.bf16.mxu0 0
        %1903 = vmatpush1.bf16.msra.mxu0 0
        %1904 = vmatprep.subr.bf16.mxu0 0
        %1905 = vmatpush1.bf16.msra.mxu0 0
        %1906 = vmatprep.subr.bf16.mxu0 0
        %1907 = vmatpush1.bf16.msra.mxu0 0
        %1908 = vmatprep.subr.bf16.mxu0 0
        %1909 = vmatpush1.bf16.msra.mxu0 0
        %1910 = vmatprep.subr.bf16.mxu0 0
        %1911 = vmatpush1.bf16.msra.mxu0 0
        %1912 = vmatprep.subr.bf16.mxu0 0
        %1913 = vmatpush1.bf16.msra.mxu0 0
        %1914 = vmatprep.subr.bf16.mxu0 0
        %1915 = vmatpush1.bf16.msra.mxu0 0
        %1916 = vmatprep.subr.bf16.mxu0 0
        %1917 = vmatpush1.bf16.msra.mxu0 0
        %1918 = vmatprep.subr.bf16.mxu0 0
        %1919 = vmatpush1.bf16.msra.mxu0 0
        %1920 = vmatprep.subr.bf16.mxu0 0
        %1921 = vmatpush1.bf16.msra.mxu0 0
        %1922 = vmatprep.mubr.bf16.mxu0 0
        %1923 = vmatmul.mubr.bf16.gmra.mrb[0].mxu0 %v1885
        %v1924 = vpop.f32.mrb[0].mxu0
        %v1925 = vadd.f32 0.0, %v1924
        %v1926 = vpop.f32.mrb[0].mxu0
        %v1927 = vpop.f32.mrb[0].mxu0
        %v1928 = vpop.f32.mrb[0].mxu0
        %1929 = vdwg.mxu0
        %v1930 = vpack.c.bf16 %v1925, %v1925
        %v1932 = vsel %vm1496, %v1930, 0
        %v1935 = vsel %vm1568, %v1491, 0
        %1937 = vmatprep.subr.bf16.mxu0 0
        %1938 = vmatpush1.bf16.msra.mxu0 %v1935
        %1939 = vmatprep.subr.bf16.mxu0 0
        %1940 = vmatpush1.bf16.msra.mxu0 0
        %1941 = vmatprep.subr.bf16.mxu0 0
        %1942 = vmatpush1.bf16.msra.mxu0 0
        %1943 = vmatprep.subr.bf16.mxu0 0
        %1944 = vmatpush1.bf16.msra.mxu0 0
        %1945 = vmatprep.subr.bf16.mxu0 0
        %1946 = vmatpush1.bf16.msra.mxu0 0
        %1947 = vmatprep.subr.bf16.mxu0 0
        %1948 = vmatpush1.bf16.msra.mxu0 0
        %1949 = vmatprep.subr.bf16.mxu0 0
        %1950 = vmatpush1.bf16.msra.mxu0 0
        %1951 = vmatprep.subr.bf16.mxu0 0
        %1952 = vmatpush1.bf16.msra.mxu0 0
        %1953 = vmatprep.subr.bf16.mxu0 0
        %1954 = vmatpush1.bf16.msra.mxu0 0
        %1955 = vmatprep.subr.bf16.mxu0 0
        %1956 = vmatpush1.bf16.msra.mxu0 0
        %1957 = vmatprep.subr.bf16.mxu0 0
        %1958 = vmatpush1.bf16.msra.mxu0 0
        %1959 = vmatprep.subr.bf16.mxu0 0
        %1960 = vmatpush1.bf16.msra.mxu0 0
        %1961 = vmatprep.subr.bf16.mxu0 0
        %1962 = vmatpush1.bf16.msra.mxu0 0
        %1963 = vmatprep.subr.bf16.mxu0 0
        %1964 = vmatpush1.bf16.msra.mxu0 0
        %1965 = vmatprep.subr.bf16.mxu0 0
        %1966 = vmatpush1.bf16.msra.mxu0 0
        %1967 = vmatprep.subr.bf16.mxu0 0
        %1968 = vmatpush1.bf16.msra.mxu0 0
        %1969 = vmatprep.mubr.bf16.mxu0 0
        %1970 = vmatmul.mubr.bf16.gmra.mrb[0].mxu0 %v1932
        %v1971 = vpop.f32.mrb[0].mxu0
        %v1972 = vadd.f32 0.0, %v1971
        %v1973 = vpop.f32.mrb[0].mxu0
        %v1974 = vpop.f32.mrb[0].mxu0
        %v1975 = vpop.f32.mrb[0].mxu0
        %1976 = vdwg.mxu0
        %v1977 = vadd.f32 %v1813, %v1972
        %1978 = vrot.lane.b32.xlu0 %v1488, 104
        %v1979 = vpop.permute.xlu0 %1978
        %1980 = vrot.lane.b32.xlu0 %v1488, 72
        %v1981 = vpop.permute.xlu0 %1980
        %v1983 = vsel %vm1496, %v1979, 0
        %v1986 = vsel %vm1496, %v1981, 0
        %1988 = vmatprep.subr.bf16.mxu0 0
        %1989 = vmatpush1.bf16.xpose.msra.mxu0 %v1986
        %1990 = vmatprep.subr.bf16.mxu0 0
        %1991 = vmatpush1.bf16.xpose.msra.mxu0 0
        %1992 = vmatprep.subr.bf16.mxu0 0
        %1993 = vmatpush1.bf16.xpose.msra.mxu0 0
        %1994 = vmatprep.subr.bf16.mxu0 0
        %1995 = vmatpush1.bf16.xpose.msra.mxu0 0
        %1996 = vmatprep.subr.bf16.mxu0 0
        %1997 = vmatpush1.bf16.xpose.msra.mxu0 0
        %1998 = vmatprep.subr.bf16.mxu0 0
        %1999 = vmatpush1.bf16.xpose.msra.mxu0 0
        %2000 = vmatprep.subr.bf16.mxu0 0
        %2001 = vmatpush1.bf16.xpose.msra.mxu0 0
        %2002 = vmatprep.subr.bf16.mxu0 0
        %2003 = vmatpush1.bf16.xpose.msra.mxu0 0
        %2004 = vmatprep.subr.bf16.mxu0 0
        %2005 = vmatpush1.bf16.xpose.msra.mxu0 0
        %2006 = vmatprep.subr.bf16.mxu0 0
        %2007 = vmatpush1.bf16.xpose.msra.mxu0 0
        %2008 = vmatprep.subr.bf16.mxu0 0
        %2009 = vmatpush1.bf16.xpose.msra.mxu0 0
        %2010 = vmatprep.subr.bf16.mxu0 0
        %2011 = vmatpush1.bf16.xpose.msra.mxu0 0
        %2012 = vmatprep.subr.bf16.mxu0 0
        %2013 = vmatpush1.bf16.xpose.msra.mxu0 0
        %2014 = vmatprep.subr.bf16.mxu0 0
        %2015 = vmatpush1.bf16.xpose.msra.mxu0 0
        %2016 = vmatprep.subr.bf16.mxu0 0
        %2017 = vmatpush1.bf16.xpose.msra.mxu0 0
        %2018 = vmatprep.subr.bf16.mxu0 0
        %2019 = vmatpush1.bf16.xpose.msra.mxu0 0
        %2020 = vmatprep.mubr.bf16.mxu0 0
        %2021 = vmatmul.mubr.bf16.gmra.mrb[0].mxu0 %v1983
        %v2022 = vpop.f32.mrb[0].mxu0
        %v2023 = vadd.f32 0.0, %v2022
        %v2024 = vpop.f32.mrb[0].mxu0
        %v2025 = vpop.f32.mrb[0].mxu0
        %v2026 = vpop.f32.mrb[0].mxu0
        %2027 = vdwg.mxu0
        %v2028 = vmul.f32 %v2023, 0.35355338
        %v2029 = vadd.f32 %v2028, %v1548
        %v2030 = vsel %vm1496, %v2029, -inf
        %2031 = vmax.xlane.f32.xlu0 %v2030
        %v2032 = vpop.xlane.xlu0 %2031
        %v2033 = vsub.f32 %v2029, %v2032
        %v2034 = vmul.f32 %v2033, 1.442695
        %v2035 = vpow.pop %v2034
        %v2036 = vsel %vm1496, %v2035, 0.0
        %2037 = vadd.xlane.f32.xlu0 %v2036
        %v2038 = vpop.xlane.xlu0 %2037
        %v2039 = vrcp.pop %v2038
        %v2040 = vmul.f32 %v2035, %v2039
        %v2041 = vpack.c.bf16 %v2040, %v2040
        %2042 = vrot.lane.b32.xlu0 %v1488, 40
        %v2043 = vpop.permute.xlu0 %2042
        %v2045 = vsel %vm1496, %v2041, 0
        %v2048 = vsel %vm1568, %v2043, 0
        %2050 = vmatprep.subr.bf16.mxu0 0
        %2051 = vmatpush1.bf16.msra.mxu0 %v2048
        %2052 = vmatprep.subr.bf16.mxu0 0
        %2053 = vmatpush1.bf16.msra.mxu0 0
        %2054 = vmatprep.subr.bf16.mxu0 0
        %2055 = vmatpush1.bf16.msra.mxu0 0
        %2056 = vmatprep.subr.bf16.mxu0 0
        %2057 = vmatpush1.bf16.msra.mxu0 0
        %2058 = vmatprep.subr.bf16.mxu0 0
        %2059 = vmatpush1.bf16.msra.mxu0 0
        %2060 = vmatprep.subr.bf16.mxu0 0
        %2061 = vmatpush1.bf16.msra.mxu0 0
        %2062 = vmatprep.subr.bf16.mxu0 0
        %2063 = vmatpush1.bf16.msra.mxu0 0
        %2064 = vmatprep.subr.bf16.mxu0 0
        %2065 = vmatpush1.bf16.msra.mxu0 0
        %2066 = vmatprep.subr.bf16.mxu0 0
        %2067 = vmatpush1.bf16.msra.mxu0 0
        %2068 = vmatprep.subr.bf16.mxu0 0
        %2069 = vmatpush1.bf16.msra.mxu0 0
        %2070 = vmatprep.subr.bf16.mxu0 0
        %2071 = vmatpush1.bf16.msra.mxu0 0
        %2072 = vmatprep.subr.bf16.mxu0 0
        %2073 = vmatpush1.bf16.msra.mxu0 0
        %2074 = vmatprep.subr.bf16.mxu0 0
        %2075 = vmatpush1.bf16.msra.mxu0 0
        %2076 = vmatprep.subr.bf16.mxu0 0
        %2077 = vmatpush1.bf16.msra.mxu0 0
        %2078 = vmatprep.subr.bf16.mxu0 0
        %2079 = vmatpush1.bf16.msra.mxu0 0
        %2080 = vmatprep.subr.bf16.mxu0 0
        %2081 = vmatpush1.bf16.msra.mxu0 0
        %2082 = vmatprep.mubr.bf16.mxu0 0
        %2083 = vmatmul.mubr.bf16.gmra.mrb[0].mxu0 %v2045
        %v2084 = vpop.f32.mrb[0].mxu0
        %v2085 = vadd.f32 0.0, %v2084
        %v2086 = vpop.f32.mrb[0].mxu0
        %v2087 = vpop.f32.mrb[0].mxu0
        %v2088 = vpop.f32.mrb[0].mxu0
        %2089 = vdwg.mxu0
        %v2090 = vpack.c.bf16 %v2085, %v2085
        %v2092 = vsel %vm1496, %v2090, 0
        %v2095 = vsel %vm1568, %v1492, 0
        %2097 = vmatprep.subr.bf16.mxu0 0
        %2098 = vmatpush1.bf16.msra.mxu0 %v2095
        %2099 = vmatprep.subr.bf16.mxu0 0
        %2100 = vmatpush1.bf16.msra.mxu0 0
        %2101 = vmatprep.subr.bf16.mxu0 0
        %2102 = vmatpush1.bf16.msra.mxu0 0
        %2103 = vmatprep.subr.bf16.mxu0 0
        %2104 = vmatpush1.bf16.msra.mxu0 0
        %2105 = vmatprep.subr.bf16.mxu0 0
        %2106 = vmatpush1.bf16.msra.mxu0 0
        %2107 = vmatprep.subr.bf16.mxu0 0
        %2108 = vmatpush1.bf16.msra.mxu0 0
        %2109 = vmatprep.subr.bf16.mxu0 0
        %2110 = vmatpush1.bf16.msra.mxu0 0
        %2111 = vmatprep.subr.bf16.mxu0 0
        %2112 = vmatpush1.bf16.msra.mxu0 0
        %2113 = vmatprep.subr.bf16.mxu0 0
        %2114 = vmatpush1.bf16.msra.mxu0 0
        %2115 = vmatprep.subr.bf16.mxu0 0
        %2116 = vmatpush1.bf16.msra.mxu0 0
        %2117 = vmatprep.subr.bf16.mxu0 0
        %2118 = vmatpush1.bf16.msra.mxu0 0
        %2119 = vmatprep.subr.bf16.mxu0 0
        %2120 = vmatpush1.bf16.msra.mxu0 0
        %2121 = vmatprep.subr.bf16.mxu0 0
        %2122 = vmatpush1.bf16.msra.mxu0 0
        %2123 = vmatprep.subr.bf16.mxu0 0
        %2124 = vmatpush1.bf16.msra.mxu0 0
        %2125 = vmatprep.subr.bf16.mxu0 0
        %2126 = vmatpush1.bf16.msra.mxu0 0
        %2127 = vmatprep.subr.bf16.mxu0 0
        %2128 = vmatpush1.bf16.msra.mxu0 0
        %2129 = vmatprep.mubr.bf16.mxu0 0
        %2130 = vmatmul.mubr.bf16.gmra.mrb[0].mxu0 %v2092
        %v2131 = vpop.f32.mrb[0].mxu0
        %v2132 = vadd.f32 0.0, %v2131
        %v2133 = vpop.f32.mrb[0].mxu0
        %v2134 = vpop.f32.mrb[0].mxu0
        %v2135 = vpop.f32.mrb[0].mxu0
        %2136 = vdwg.mxu0
        %v2137 = vadd.f32 %v1977, %v2132
        %v2138 = vld [vmem:[%s23] sm:$0x1]
        %v2140 = vlaneseq
        %v2141 = vshrl.u32 %v2140, 7
        %v2142 = vsub.s32 0, %v2141
        %v2143 = vrot.slane %v2138, %v2142
        %v2145 = vadd.f32 %v2137, %v2143
        %v2146 = vadd.f32 %v1418, %v2145
        %v2147 = vsel %vm1419, %v2146, 0.0
        %2148 = vadd.xlane.f32.xlu0 %v2147
        %v2149 = vpop.xlane.xlu0 %2148
        %v2150 = vrcp.pop 32.0
        %v2151 = vmul.f32 %v2149, %v2150
        %v2152 = vsub.f32 %v2146, %v2151
        %v2153 = vmul.f32 %v2152, %v2152
        %v2154 = vsel %vm1419, %v2153, 0.0
        %2155 = vadd.xlane.f32.xlu0 %v2154
        %v2156 = vpop.xlane.xlu0 %2155
        %v2157 = vmul.f32 %v2156, %v2150
        %v2158 = vadd.f32 %v2157, 1e-05
        %v2159 = vrsqrt.pop %v2158
        %v2160 = vmul.f32 %v2152, %v2159
        %v2161 = vld [vmem:[%s33] sm:$0x1]
        %v2163 = vlaneseq
        %v2164 = vshrl.u32 %v2163, 7
        %v2165 = vsub.s32 0, %v2164
        %v2166 = vrot.slane %v2161, %v2165
        %v2168 = vmul.f32 %v2160, %v2166
        %v2169 = vld [vmem:[%s35] sm:$0x1]
        %v2171 = vlaneseq
        %v2172 = vshrl.u32 %v2171, 7
        %v2173 = vsub.s32 0, %v2172
        %v2174 = vrot.slane %v2169, %v2173
        %v2176 = vadd.f32 %v2168, %v2174
        %v2177 = vpack.c.bf16 %v2176, %v2176
        %v2178 = vld [vmem:[%s25] sm:$0xf]
        %v2179 = vld [vmem:[%s25 + $0x4] sm:$0xf]
        %v2180 = vld [vmem:[%s25 + $0x8] sm:$0xf]
        %v2181 = vld [vmem:[%s25 + $0xc] sm:$0xf]
        %v2182 = vld [vmem:[%s27] sm:$0x1]
        %v2184 = vlaneseq
        %v2185 = vshrl.u32 %v2184, 7
        %v2186 = vsub.s32 0, %v2185
        %v2187 = vrot.slane %v2182, %v2186
        %v2193 = vunpack.c.l.b16 %v2178
        %v2194 = vunpack.c.l.b16 %v2179
        %v2195 = vunpack.c.l.b16 %v2180
        %v2196 = vunpack.c.l.b16 %v2181
        %v2197 = vpack.c.b16 %v2194, %v2193
        %v2198 = vpack.c.b16 %v2196, %v2195
        %v2202 = vsel %vm1419, %v2177, 0
        %2204 = vmatprep.subr.bf16.mxu0 0
        %2205 = vmatpush1.bf16.msra.mxu0 %v2197
        %2206 = vmatprep.subr.bf16.mxu0 0
        %2207 = vmatpush1.bf16.msra.mxu0 %v2198
        %2208 = vmatprep.subr.bf16.mxu0 0
        %2209 = vmatpush1.bf16.msra.mxu0 0
        %2210 = vmatprep.subr.bf16.mxu0 0
        %2211 = vmatpush1.bf16.msra.mxu0 0
        %2212 = vmatprep.subr.bf16.mxu0 0
        %2213 = vmatpush1.bf16.msra.mxu0 0
        %2214 = vmatprep.subr.bf16.mxu0 0
        %2215 = vmatpush1.bf16.msra.mxu0 0
        %2216 = vmatprep.subr.bf16.mxu0 0
        %2217 = vmatpush1.bf16.msra.mxu0 0
        %2218 = vmatprep.subr.bf16.mxu0 0
        %2219 = vmatpush1.bf16.msra.mxu0 0
        %2220 = vmatprep.subr.bf16.mxu0 0
        %2221 = vmatpush1.bf16.msra.mxu0 0
        %2222 = vmatprep.subr.bf16.mxu0 0
        %2223 = vmatpush1.bf16.msra.mxu0 0
        %2224 = vmatprep.subr.bf16.mxu0 0
        %2225 = vmatpush1.bf16.msra.mxu0 0
        %2226 = vmatprep.subr.bf16.mxu0 0
        %2227 = vmatpush1.bf16.msra.mxu0 0
        %2228 = vmatprep.subr.bf16.mxu0 0
        %2229 = vmatpush1.bf16.msra.mxu0 0
        %2230 = vmatprep.subr.bf16.mxu0 0
        %2231 = vmatpush1.bf16.msra.mxu0 0
        %2232 = vmatprep.subr.bf16.mxu0 0
        %2233 = vmatpush1.bf16.msra.mxu0 0
        %2234 = vmatprep.subr.bf16.mxu0 0
        %2235 = vmatpush1.bf16.msra.mxu0 0
        %2236 = vmatprep.mubr.bf16.mxu0 0
        %2237 = vmatmul.mubr.bf16.gmra.mrb[0].mxu0 %v2202
        %v2238 = vpop.f32.mrb[0].mxu0
        %v2239 = vadd.f32 %v2187, %v2238
        %v2240 = vpop.f32.mrb[0].mxu0
        %v2241 = vpop.f32.mrb[0].mxu0
        %v2242 = vpop.f32.mrb[0].mxu0
        %2243 = vdwg.mxu0
        %v2244 = vmax.f32 %v2239, 0.0
        %v2245 = vpack.c.bf16 %v2244, %v2244
        %v2246 = vld [vmem:[%s29] sm:$0xf]
        %v2247 = vld [vmem:[%s29 + $0x4] sm:$0xf]
        %v2248 = vld [vmem:[%s29 + $0x8] sm:$0xf]
        %v2249 = vld [vmem:[%s29 + $0xc] sm:$0xf]
        %v2250 = vld [vmem:[%s29 + $0x10] sm:$0xf]
        %v2251 = vld [vmem:[%s29 + $0x14] sm:$0xf]
        %v2252 = vld [vmem:[%s29 + $0x18] sm:$0xf]
        %v2253 = vld [vmem:[%s29 + $0x1c] sm:$0xf]
        %v2254 = vld [vmem:[%s29 + $0x20] sm:$0xf]
        %v2255 = vld [vmem:[%s29 + $0x24] sm:$0xf]
        %v2256 = vld [vmem:[%s29 + $0x28] sm:$0xf]
        %v2257 = vld [vmem:[%s29 + $0x2c] sm:$0xf]
        %v2258 = vld [vmem:[%s29 + $0x30] sm:$0xf]
        %v2259 = vld [vmem:[%s29 + $0x34] sm:$0xf]
        %v2260 = vld [vmem:[%s29 + $0x38] sm:$0xf]
        %v2261 = vld [vmem:[%s29 + $0x3c] sm:$0xf]
        %v2262 = vld [vmem:[%s31] sm:$0x1]
        %v2264 = vlaneseq
        %v2265 = vshrl.u32 %v2264, 7
        %v2266 = vsub.s32 0, %v2265
        %v2267 = vrot.slane %v2262, %v2266
        %v2285 = vunpack.c.l.b16 %v2246
        %v2286 = vunpack.c.l.b16 %v2247
        %v2287 = vunpack.c.l.b16 %v2248
        %v2288 = vunpack.c.l.b16 %v2249
        %v2289 = vunpack.c.l.b16 %v2250
        %v2290 = vunpack.c.l.b16 %v2251
        %v2291 = vunpack.c.l.b16 %v2252
        %v2292 = vunpack.c.l.b16 %v2253
        %v2293 = vunpack.c.l.b16 %v2254
        %v2294 = vunpack.c.l.b16 %v2255
        %v2295 = vunpack.c.l.b16 %v2256
        %v2296 = vunpack.c.l.b16 %v2257
        %v2297 = vunpack.c.l.b16 %v2258
        %v2298 = vunpack.c.l.b16 %v2259
        %v2299 = vunpack.c.l.b16 %v2260
        %v2300 = vunpack.c.l.b16 %v2261
        %v2301 = vpack.c.b16 %v2286, %v2285
        %v2302 = vpack.c.b16 %v2288, %v2287
        %v2303 = vpack.c.b16 %v2290, %v2289
        %v2304 = vpack.c.b16 %v2292, %v2291
        %v2305 = vpack.c.b16 %v2294, %v2293
        %v2306 = vpack.c.b16 %v2296, %v2295
        %v2307 = vpack.c.b16 %v2298, %v2297
        %v2308 = vpack.c.b16 %v2300, %v2299
        %2317 = vmatprep.subr.bf16.mxu0 0
        %2318 = vmatpush1.bf16.msra.mxu0 %v2301
        %2319 = vmatprep.subr.bf16.mxu0 0
        %2320 = vmatpush1.bf16.msra.mxu0 %v2302
        %2321 = vmatprep.subr.bf16.mxu0 0
        %2322 = vmatpush1.bf16.msra.mxu0 %v2303
        %2323 = vmatprep.subr.bf16.mxu0 0
        %2324 = vmatpush1.bf16.msra.mxu0 %v2304
        %2325 = vmatprep.subr.bf16.mxu0 0
        %2326 = vmatpush1.bf16.msra.mxu0 %v2305
        %2327 = vmatprep.subr.bf16.mxu0 0
        %2328 = vmatpush1.bf16.msra.mxu0 %v2306
        %2329 = vmatprep.subr.bf16.mxu0 0
        %2330 = vmatpush1.bf16.msra.mxu0 %v2307
        %2331 = vmatprep.subr.bf16.mxu0 0
        %2332 = vmatpush1.bf16.msra.mxu0 %v2308
        %2333 = vmatprep.subr.bf16.mxu0 0
        %2334 = vmatpush1.bf16.msra.mxu0 0
        %2335 = vmatprep.subr.bf16.mxu0 0
        %2336 = vmatpush1.bf16.msra.mxu0 0
        %2337 = vmatprep.subr.bf16.mxu0 0
        %2338 = vmatpush1.bf16.msra.mxu0 0
        %2339 = vmatprep.subr.bf16.mxu0 0
        %2340 = vmatpush1.bf16.msra.mxu0 0
        %2341 = vmatprep.subr.bf16.mxu0 0
        %2342 = vmatpush1.bf16.msra.mxu0 0
        %2343 = vmatprep.subr.bf16.mxu0 0
        %2344 = vmatpush1.bf16.msra.mxu0 0
        %2345 = vmatprep.subr.bf16.mxu0 0
        %2346 = vmatpush1.bf16.msra.mxu0 0
        %2347 = vmatprep.subr.bf16.mxu0 0
        %2348 = vmatpush1.bf16.msra.mxu0 0
        %2349 = vmatprep.mubr.bf16.mxu0 0
        %2350 = vmatmul.mubr.bf16.gmra.mrb[0].mxu0 %v2245
        %v2351 = vpop.f32.mrb[0].mxu0
        %v2352 = vadd.f32 %v2267, %v2351
        %v2353 = vpop.f32.mrb[0].mxu0
        %v2354 = vpop.f32.mrb[0].mxu0
        %v2355 = vpop.f32.mrb[0].mxu0
        %2356 = vdwg.mxu0
        %v2357 = vadd.f32 %v2176, %v2352
        %v2358 = vsel %vm1419, %v2357, 0.0
        %2359 = vadd.xlane.f32.xlu0 %v2358
        %v2360 = vpop.xlane.xlu0 %2359
        %v2361 = vmul.f32 %v2360, %v2150
        %v2362 = vsub.f32 %v2357, %v2361
        %v2363 = vmul.f32 %v2362, %v2362
        %v2364 = vsel %vm1419, %v2363, 0.0
        %2365 = vadd.xlane.f32.xlu0 %v2364
        %v2366 = vpop.xlane.xlu0 %2365
        %v2367 = vmul.f32 %v2366, %v2150
        %v2368 = vadd.f32 %v2367, 1e-05
        %v2369 = vrsqrt.pop %v2368
        %v2370 = vmul.f32 %v2362, %v2369
        %v2371 = vld [vmem:[%s37] sm:$0x1]
        %v2373 = vlaneseq
        %v2374 = vshrl.u32 %v2373, 7
        %v2375 = vsub.s32 0, %v2374
        %v2376 = vrot.slane %v2371, %v2375
        %v2378 = vmul.f32 %v2370, %v2376
        %v2379 = vld [vmem:[%s39] sm:$0x1]
        %v2381 = vlaneseq
        %v2382 = vshrl.u32 %v2381, 7
        %v2383 = vsub.s32 0, %v2382
        %v2384 = vrot.slane %v2379, %v2383
        %v2386 = vadd.f32 %v2378, %v2384
        %v2387 = vpack.c.bf16 %v1347, %v1347
        %v2388 = vld [vmem:[%s13] sm:$0xf]
        %v2389 = vld [vmem:[%s13 + $0x4] sm:$0x1]
        %v2390 = vld [vmem:[%s15] sm:$0x1]
        %v2392 = vlaneseq
        %v2393 = vshrl.u32 %v2392, 7
        %v2394 = vsub.s32 0, %v2393
        %v2395 = vrot.slane %v2390, %v2394
        %v2399 = vunpack.c.l.b16 %v2388
        %v2400 = vunpack.c.l.b16 %v2389
        %v2401 = vpack.c.b16 %v2400, %v2399
        %v2403 = vsel %vm1366, %v2387, 0
        %v2406 = vsel %vm1370, %v2401, 0
        %2408 = vmatprep.subr.bf16.mxu0 0
        %2409 = vmatpush1.bf16.msra.mxu0 %v2406
        %2410 = vmatprep.subr.bf16.mxu0 0
        %2411 = vmatpush1.bf16.msra.mxu0 0
        %2412 = vmatprep.subr.bf16.mxu0 0
        %2413 = vmatpush1.bf16.msra.mxu0 0
        %2414 = vmatprep.subr.bf16.mxu0 0
        %2415 = vmatpush1.bf16.msra.mxu0 0
        %2416 = vmatprep.subr.bf16.mxu0 0
        %2417 = vmatpush1.bf16.msra.mxu0 0
        %2418 = vmatprep.subr.bf16.mxu0 0
        %2419 = vmatpush1.bf16.msra.mxu0 0
        %2420 = vmatprep.subr.bf16.mxu0 0
        %2421 = vmatpush1.bf16.msra.mxu0 0
        %2422 = vmatprep.subr.bf16.mxu0 0
        %2423 = vmatpush1.bf16.msra.mxu0 0
        %2424 = vmatprep.subr.bf16.mxu0 0
        %2425 = vmatpush1.bf16.msra.mxu0 0
        %2426 = vmatprep.subr.bf16.mxu0 0
        %2427 = vmatpush1.bf16.msra.mxu0 0
        %2428 = vmatprep.subr.bf16.mxu0 0
        %2429 = vmatpush1.bf16.msra.mxu0 0
        %2430 = vmatprep.subr.bf16.mxu0 0
        %2431 = vmatpush1.bf16.msra.mxu0 0
        %2432 = vmatprep.subr.bf16.mxu0 0
        %2433 = vmatpush1.bf16.msra.mxu0 0
        %2434 = vmatprep.subr.bf16.mxu0 0
        %2435 = vmatpush1.bf16.msra.mxu0 0
        %2436 = vmatprep.subr.bf16.mxu0 0
        %2437 = vmatpush1.bf16.msra.mxu0 0
        %2438 = vmatprep.subr.bf16.mxu0 0
        %2439 = vmatpush1.bf16.msra.mxu0 0
        %2440 = vmatprep.mubr.bf16.mxu0 0
        %2441 = vmatmul.mubr.bf16.gmra.mrb[0].mxu0 %v2403
        %v2442 = vpop.f32.mrb[0].mxu0
        %v2443 = vadd.f32 %v2395, %v2442
        %v2444 = vpop.f32.mrb[0].mxu0
        %v2445 = vpop.f32.mrb[0].mxu0
        %v2446 = vpop.f32.mrb[0].mxu0
        %2447 = vdwg.mxu0
        %v2448 = vpack.c.bf16 %v2443, %v2443
        %v2449 = vld [vmem:[%s41] sm:$0xf]
        %v2450 = vld [vmem:[%s41 + $0x4] sm:$0xf]
        %v2451 = vld [vmem:[%s41 + $0x8] sm:$0xf]
        %v2452 = vld [vmem:[%s41 + $0xc] sm:$0xf]
        %v2453 = vld [vmem:[%s43] sm:$0x1]
        %v2455 = vlaneseq
        %v2456 = vshrl.u32 %v2455, 7
        %v2457 = vsub.s32 0, %v2456
        %v2458 = vrot.slane %v2453, %v2457
        %v2464 = vunpack.c.l.b16 %v2449
        %v2465 = vunpack.c.l.b16 %v2450
        %v2466 = vunpack.c.l.b16 %v2451
        %v2467 = vunpack.c.l.b16 %v2452
        %v2468 = vpack.c.b16 %v2465, %v2464
        %v2469 = vpack.c.b16 %v2467, %v2466
        %v2473 = vsel %vm1419, %v2448, 0
        %2475 = vmatprep.subr.bf16.mxu0 0
        %2476 = vmatpush1.bf16.msra.mxu0 %v2468
        %2477 = vmatprep.subr.bf16.mxu0 0
        %2478 = vmatpush1.bf16.msra.mxu0 %v2469
        %2479 = vmatprep.subr.bf16.mxu0 0
        %2480 = vmatpush1.bf16.msra.mxu0 0
        %2481 = vmatprep.subr.bf16.mxu0 0
        %2482 = vmatpush1.bf16.msra.mxu0 0
        %2483 = vmatprep.subr.bf16.mxu0 0
        %2484 = vmatpush1.bf16.msra.mxu0 0
        %2485 = vmatprep.subr.bf16.mxu0 0
        %2486 = vmatpush1.bf16.msra.mxu0 0
        %2487 = vmatprep.subr.bf16.mxu0 0
        %2488 = vmatpush1.bf16.msra.mxu0 0
        %2489 = vmatprep.subr.bf16.mxu0 0
        %2490 = vmatpush1.bf16.msra.mxu0 0
        %2491 = vmatprep.subr.bf16.mxu0 0
        %2492 = vmatpush1.bf16.msra.mxu0 0
        %2493 = vmatprep.subr.bf16.mxu0 0
        %2494 = vmatpush1.bf16.msra.mxu0 0
        %2495 = vmatprep.subr.bf16.mxu0 0
        %2496 = vmatpush1.bf16.msra.mxu0 0
        %2497 = vmatprep.subr.bf16.mxu0 0
        %2498 = vmatpush1.bf16.msra.mxu0 0
        %2499 = vmatprep.subr.bf16.mxu0 0
        %2500 = vmatpush1.bf16.msra.mxu0 0
        %2501 = vmatprep.subr.bf16.mxu0 0
        %2502 = vmatpush1.bf16.msra.mxu0 0
        %2503 = vmatprep.subr.bf16.mxu0 0
        %2504 = vmatpush1.bf16.msra.mxu0 0
        %2505 = vmatprep.subr.bf16.mxu0 0
        %2506 = vmatpush1.bf16.msra.mxu0 0
        %2507 = vmatprep.mubr.bf16.mxu0 0
        %2508 = vmatmul.mubr.bf16.gmra.mrb[0].mxu0 %v2473
        %v2509 = vpop.f32.mrb[0].mxu0
        %v2510 = vadd.f32 %v2458, %v2509
        %v2511 = vpop.f32.mrb[0].mxu0
        %v2512 = vpop.f32.mrb[0].mxu0
        %v2513 = vpop.f32.mrb[0].mxu0
        %2514 = vdwg.mxu0
        %v2515 = vpack.c.bf16 %v2510, %v2510
        %v2516 = vld [vmem:[%s45] sm:$0xf]
        %v2517 = vld [vmem:[%s45 + $0x4] sm:$0xf]
        %v2518 = vld [vmem:[%s45 + $0x8] sm:$0xf]
        %v2519 = vld [vmem:[%s45 + $0xc] sm:$0xf]
        %2521 = vrot.lane.b32.xlu0 %v2515, 96
        %v2522 = vpop.permute.xlu0 %2521
        %v2524 = vsel %vm1496, %v2515, 0
        %v2527 = vsel %vm1496, %v2522, 0
        %2529 = vmatprep.subr.bf16.mxu0 0
        %2530 = vmatpush1.bf16.xpose.msra.mxu0 %v2527
        %2531 = vmatprep.subr.bf16.mxu0 0
        %2532 = vmatpush1.bf16.xpose.msra.mxu0 0
        %2533 = vmatprep.subr.bf16.mxu0 0
        %2534 = vmatpush1.bf16.xpose.msra.mxu0 0
        %2535 = vmatprep.subr.bf16.mxu0 0
        %2536 = vmatpush1.bf16.xpose.msra.mxu0 0
        %2537 = vmatprep.subr.bf16.mxu0 0
        %2538 = vmatpush1.bf16.xpose.msra.mxu0 0
        %2539 = vmatprep.subr.bf16.mxu0 0
        %2540 = vmatpush1.bf16.xpose.msra.mxu0 0
        %2541 = vmatprep.subr.bf16.mxu0 0
        %2542 = vmatpush1.bf16.xpose.msra.mxu0 0
        %2543 = vmatprep.subr.bf16.mxu0 0
        %2544 = vmatpush1.bf16.xpose.msra.mxu0 0
        %2545 = vmatprep.subr.bf16.mxu0 0
        %2546 = vmatpush1.bf16.xpose.msra.mxu0 0
        %2547 = vmatprep.subr.bf16.mxu0 0
        %2548 = vmatpush1.bf16.xpose.msra.mxu0 0
        %2549 = vmatprep.subr.bf16.mxu0 0
        %2550 = vmatpush1.bf16.xpose.msra.mxu0 0
        %2551 = vmatprep.subr.bf16.mxu0 0
        %2552 = vmatpush1.bf16.xpose.msra.mxu0 0
        %2553 = vmatprep.subr.bf16.mxu0 0
        %2554 = vmatpush1.bf16.xpose.msra.mxu0 0
        %2555 = vmatprep.subr.bf16.mxu0 0
        %2556 = vmatpush1.bf16.xpose.msra.mxu0 0
        %2557 = vmatprep.subr.bf16.mxu0 0
        %2558 = vmatpush1.bf16.xpose.msra.mxu0 0
        %2559 = vmatprep.subr.bf16.mxu0 0
        %2560 = vmatpush1.bf16.xpose.msra.mxu0 0
        %2561 = vmatprep.mubr.bf16.mxu0 0
        %2562 = vmatmul.mubr.bf16.gmra.mrb[0].mxu0 %v2524
        %v2563 = vpop.f32.mrb[0].mxu0
        %v2564 = vadd.f32 0.0, %v2563
        %v2565 = vpop.f32.mrb[0].mxu0
        %v2566 = vpop.f32.mrb[0].mxu0
        %v2567 = vpop.f32.mrb[0].mxu0
        %2568 = vdwg.mxu0
        %v2569 = vmul.f32 %v2564, 0.35355338
        %vm2570 = vcmask 18432
        %v2571 = vsel %vm2570, %v2569, -inf
        %2572 = vmax.xlane.f32.xlu0 %v2571
        %v2573 = vpop.xlane.xlu0 %2572
        %v2574 = vsub.f32 %v2569, %v2573
        %v2575 = vmul.f32 %v2574, 1.442695
        %v2576 = vpow.pop %v2575
        %v2577 = vsel %vm2570, %v2576, 0.0
        %2578 = vadd.xlane.f32.xlu0 %v2577
        %v2579 = vpop.xlane.xlu0 %2578
        %v2580 = vrcp.pop %v2579
        %v2581 = vmul.f32 %v2576, %v2580
        %v2582 = vpack.c.bf16 %v2581, %v2581
        %2583 = vrot.lane.b32.xlu0 %v2515, 64
        %v2584 = vpop.permute.xlu0 %2583
        %vm2585 = vcmask 23552
        %v2587 = vsel %vm2585, %v2582, 0
        %vm2589 = vcmask 1040384
        %vm2590 = vcmask 1041408
        %v2591 = vsel %vm2589, 4294967295, 65535
        %v2592 = vsel %vm2590, %v2591, 0
        %v2594 = vand.u32 %v2584, %v2592
        %2596 = vmatprep.subr.bf16.mxu0 0
        %2597 = vmatpush1.bf16.msra.mxu0 %v2594
        %2598 = vmatprep.subr.bf16.mxu0 0
        %2599 = vmatpush1.bf16.msra.mxu0 0
        %2600 = vmatprep.subr.bf16.mxu0 0
        %2601 = vmatpush1.bf16.msra.mxu0 0
        %2602 = vmatprep.subr.bf16.mxu0 0
        %2603 = vmatpush1.bf16.msra.mxu0 0
        %2604 = vmatprep.subr.bf16.mxu0 0
        %2605 = vmatpush1.bf16.msra.mxu0 0
        %2606 = vmatprep.subr.bf16.mxu0 0
        %2607 = vmatpush1.bf16.msra.mxu0 0
        %2608 = vmatprep.subr.bf16.mxu0 0
        %2609 = vmatpush1.bf16.msra.mxu0 0
        %2610 = vmatprep.subr.bf16.mxu0 0
        %2611 = vmatpush1.bf16.msra.mxu0 0
        %2612 = vmatprep.subr.bf16.mxu0 0
        %2613 = vmatpush1.bf16.msra.mxu0 0
        %2614 = vmatprep.subr.bf16.mxu0 0
        %2615 = vmatpush1.bf16.msra.mxu0 0
        %2616 = vmatprep.subr.bf16.mxu0 0
        %2617 = vmatpush1.bf16.msra.mxu0 0
        %2618 = vmatprep.subr.bf16.mxu0 0
        %2619 = vmatpush1.bf16.msra.mxu0 0
        %2620 = vmatprep.subr.bf16.mxu0 0
        %2621 = vmatpush1.bf16.msra.mxu0 0
        %2622 = vmatprep.subr.bf16.mxu0 0
        %2623 = vmatpush1.bf16.msra.mxu0 0
        %2624 = vmatprep.subr.bf16.mxu0 0
        %2625 = vmatpush1.bf16.msra.mxu0 0
        %2626 = vmatprep.subr.bf16.mxu0 0
        %2627 = vmatpush1.bf16.msra.mxu0 0
        %2628 = vmatprep.mubr.bf16.mxu0 0
        %2629 = vmatmul.mubr.bf16.gmra.mrb[0].mxu0 %v2587
        %v2630 = vpop.f32.mrb[0].mxu0
        %v2631 = vadd.f32 0.0, %v2630
        %v2632 = vpop.f32.mrb[0].mxu0
        %v2633 = vpop.f32.mrb[0].mxu0
        %v2634 = vpop.f32.mrb[0].mxu0
        %2635 = vdwg.mxu0
        %v2636 = vpack.c.bf16 %v2631, %v2631
        %2637 = vrot.lane.b32.xlu0 %v2515, 120
        %v2638 = vpop.permute.xlu0 %2637
        %2639 = vrot.lane.b32.xlu0 %v2515, 88
        %v2640 = vpop.permute.xlu0 %2639
        %v2642 = vsel %vm1496, %v2638, 0
        %v2645 = vsel %vm1496, %v2640, 0
        %2647 = vmatprep.subr.bf16.mxu0 0
        %2648 = vmatpush1.bf16.xpose.msra.mxu0 %v2645
        %2649 = vmatprep.subr.bf16.mxu0 0
        %2650 = vmatpush1.bf16.xpose.msra.mxu0 0
        %2651 = vmatprep.subr.bf16.mxu0 0
        %2652 = vmatpush1.bf16.xpose.msra.mxu0 0
        %2653 = vmatprep.subr.bf16.mxu0 0
        %2654 = vmatpush1.bf16.xpose.msra.mxu0 0
        %2655 = vmatprep.subr.bf16.mxu0 0
        %2656 = vmatpush1.bf16.xpose.msra.mxu0 0
        %2657 = vmatprep.subr.bf16.mxu0 0
        %2658 = vmatpush1.bf16.xpose.msra.mxu0 0
        %2659 = vmatprep.subr.bf16.mxu0 0
        %2660 = vmatpush1.bf16.xpose.msra.mxu0 0
        %2661 = vmatprep.subr.bf16.mxu0 0
        %2662 = vmatpush1.bf16.xpose.msra.mxu0 0
        %2663 = vmatprep.subr.bf16.mxu0 0
        %2664 = vmatpush1.bf16.xpose.msra.mxu0 0
        %2665 = vmatprep.subr.bf16.mxu0 0
        %2666 = vmatpush1.bf16.xpose.msra.mxu0 0
        %2667 = vmatprep.subr.bf16.mxu0 0
        %2668 = vmatpush1.bf16.xpose.msra.mxu0 0
        %2669 = vmatprep.subr.bf16.mxu0 0
        %2670 = vmatpush1.bf16.xpose.msra.mxu0 0
        %2671 = vmatprep.subr.bf16.mxu0 0
        %2672 = vmatpush1.bf16.xpose.msra.mxu0 0
        %2673 = vmatprep.subr.bf16.mxu0 0
        %2674 = vmatpush1.bf16.xpose.msra.mxu0 0
        %2675 = vmatprep.subr.bf16.mxu0 0
        %2676 = vmatpush1.bf16.xpose.msra.mxu0 0
        %2677 = vmatprep.subr.bf16.mxu0 0
        %2678 = vmatpush1.bf16.xpose.msra.mxu0 0
        %2679 = vmatprep.mubr.bf16.mxu0 0
        %2680 = vmatmul.mubr.bf16.gmra.mrb[0].mxu0 %v2642
        %v2681 = vpop.f32.mrb[0].mxu0
        %v2682 = vadd.f32 0.0, %v2681
        %v2683 = vpop.f32.mrb[0].mxu0
        %v2684 = vpop.f32.mrb[0].mxu0
        %v2685 = vpop.f32.mrb[0].mxu0
        %2686 = vdwg.mxu0
        %v2687 = vmul.f32 %v2682, 0.35355338
        %v2688 = vsel %vm2570, %v2687, -inf
        %2689 = vmax.xlane.f32.xlu0 %v2688
        %v2690 = vpop.xlane.xlu0 %2689
        %v2691 = vsub.f32 %v2687, %v2690
        %v2692 = vmul.f32 %v2691, 1.442695
        %v2693 = vpow.pop %v2692
        %v2694 = vsel %vm2570, %v2693, 0.0
        %2695 = vadd.xlane.f32.xlu0 %v2694
        %v2696 = vpop.xlane.xlu0 %2695
        %v2697 = vrcp.pop %v2696
        %v2698 = vmul.f32 %v2693, %v2697
        %v2699 = vpack.c.bf16 %v2698, %v2698
        %2700 = vrot.lane.b32.xlu0 %v2515, 56
        %v2701 = vpop.permute.xlu0 %2700
        %v2703 = vsel %vm2585, %v2699, 0
        %v2706 = vand.u32 %v2701, %v2592
        %2708 = vmatprep.subr.bf16.mxu0 0
        %2709 = vmatpush1.bf16.msra.mxu0 %v2706
        %2710 = vmatprep.subr.bf16.mxu0 0
        %2711 = vmatpush1.bf16.msra.mxu0 0
        %2712 = vmatprep.subr.bf16.mxu0 0
        %2713 = vmatpush1.bf16.msra.mxu0 0
        %2714 = vmatprep.subr.bf16.mxu0 0
        %2715 = vmatpush1.bf16.msra.mxu0 0
        %2716 = vmatprep.subr.bf16.mxu0 0
        %2717 = vmatpush1.bf16.msra.mxu0 0
        %2718 = vmatprep.subr.bf16.mxu0 0
        %2719 = vmatpush1.bf16.msra.mxu0 0
        %2720 = vmatprep.subr.bf16.mxu0 0
        %2721 = vmatpush1.bf16.msra.mxu0 0
        %2722 = vmatprep.subr.bf16.mxu0 0
        %2723 = vmatpush1.bf16.msra.mxu0 0
        %2724 = vmatprep.subr.bf16.mxu0 0
        %2725 = vmatpush1.bf16.msra.mxu0 0
        %2726 = vmatprep.subr.bf16.mxu0 0
        %2727 = vmatpush1.bf16.msra.mxu0 0
        %2728 = vmatprep.subr.bf16.mxu0 0
        %2729 = vmatpush1.bf16.msra.mxu0 0
        %2730 = vmatprep.subr.bf16.mxu0 0
        %2731 = vmatpush1.bf16.msra.mxu0 0
        %2732 = vmatprep.subr.bf16.mxu0 0
        %2733 = vmatpush1.bf16.msra.mxu0 0
        %2734 = vmatprep.subr.bf16.mxu0 0
        %2735 = vmatpush1.bf16.msra.mxu0 0
        %2736 = vmatprep.subr.bf16.mxu0 0
        %2737 = vmatpush1.bf16.msra.mxu0 0
        %2738 = vmatprep.subr.bf16.mxu0 0
        %2739 = vmatpush1.bf16.msra.mxu0 0
        %2740 = vmatprep.mubr.bf16.mxu0 0
        %2741 = vmatmul.mubr.bf16.gmra.mrb[0].mxu0 %v2703
        %v2742 = vpop.f32.mrb[0].mxu0
        %v2743 = vadd.f32 0.0, %v2742
        %v2744 = vpop.f32.mrb[0].mxu0
        %v2745 = vpop.f32.mrb[0].mxu0
        %v2746 = vpop.f32.mrb[0].mxu0
        %2747 = vdwg.mxu0
        %v2748 = vpack.c.bf16 %v2743, %v2743
        %v2750 = vsel %vm1496, %v2748, 0
        %v2753 = vsel %vm1568, %v2517, 0
        %2755 = vmatprep.subr.bf16.mxu0 0
        %2756 = vmatpush1.bf16.msra.mxu0 %v2753
        %2757 = vmatprep.subr.bf16.mxu0 0
        %2758 = vmatpush1.bf16.msra.mxu0 0
        %2759 = vmatprep.subr.bf16.mxu0 0
        %2760 = vmatpush1.bf16.msra.mxu0 0
        %2761 = vmatprep.subr.bf16.mxu0 0
        %2762 = vmatpush1.bf16.msra.mxu0 0
        %2763 = vmatprep.subr.bf16.mxu0 0
        %2764 = vmatpush1.bf16.msra.mxu0 0
        %2765 = vmatprep.subr.bf16.mxu0 0
        %2766 = vmatpush1.bf16.msra.mxu0 0
        %2767 = vmatprep.subr.bf16.mxu0 0
        %2768 = vmatpush1.bf16.msra.mxu0 0
        %2769 = vmatprep.subr.bf16.mxu0 0
        %2770 = vmatpush1.bf16.msra.mxu0 0
        %2771 = vmatprep.subr.bf16.mxu0 0
        %2772 = vmatpush1.bf16.msra.mxu0 0
        %2773 = vmatprep.subr.bf16.mxu0 0
        %2774 = vmatpush1.bf16.msra.mxu0 0
        %2775 = vmatprep.subr.bf16.mxu0 0
        %2776 = vmatpush1.bf16.msra.mxu0 0
        %2777 = vmatprep.subr.bf16.mxu0 0
        %2778 = vmatpush1.bf16.msra.mxu0 0
        %2779 = vmatprep.subr.bf16.mxu0 0
        %2780 = vmatpush1.bf16.msra.mxu0 0
        %2781 = vmatprep.subr.bf16.mxu0 0
        %2782 = vmatpush1.bf16.msra.mxu0 0
        %2783 = vmatprep.subr.bf16.mxu0 0
        %2784 = vmatpush1.bf16.msra.mxu0 0
        %2785 = vmatprep.subr.bf16.mxu0 0
        %2786 = vmatpush1.bf16.msra.mxu0 0
        %2787 = vmatprep.mubr.bf16.mxu0 0
        %2788 = vmatmul.mubr.bf16.gmra.mrb[0].mxu0 %v2750
        %v2789 = vpop.f32.mrb[0].mxu0
        %v2790 = vadd.f32 0.0, %v2789
        %v2791 = vpop.f32.mrb[0].mxu0
        %v2792 = vpop.f32.mrb[0].mxu0
        %v2793 = vpop.f32.mrb[0].mxu0
        %2794 = vdwg.mxu0
        %v2796 = vsel %vm1496, %v2636, 0
        %v2799 = vsel %vm1568, %v2516, 0
        %2801 = vmatprep.subr.bf16.mxu0 0
        %2802 = vmatpush1.bf16.msra.mxu0 %v2799
        %2803 = vmatprep.subr.bf16.mxu0 0
        %2804 = vmatpush1.bf16.msra.mxu0 0
        %2805 = vmatprep.subr.bf16.mxu0 0
        %2806 = vmatpush1.bf16.msra.mxu0 0
        %2807 = vmatprep.subr.bf16.mxu0 0
        %2808 = vmatpush1.bf16.msra.mxu0 0
        %2809 = vmatprep.subr.bf16.mxu0 0
        %2810 = vmatpush1.bf16.msra.mxu0 0
        %2811 = vmatprep.subr.bf16.mxu0 0
        %2812 = vmatpush1.bf16.msra.mxu0 0
        %2813 = vmatprep.subr.bf16.mxu0 0
        %2814 = vmatpush1.bf16.msra.mxu0 0
        %2815 = vmatprep.subr.bf16.mxu0 0
        %2816 = vmatpush1.bf16.msra.mxu0 0
        %2817 = vmatprep.subr.bf16.mxu0 0
        %2818 = vmatpush1.bf16.msra.mxu0 0
        %2819 = vmatprep.subr.bf16.mxu0 0
        %2820 = vmatpush1.bf16.msra.mxu0 0
        %2821 = vmatprep.subr.bf16.mxu0 0
        %2822 = vmatpush1.bf16.msra.mxu0 0
        %2823 = vmatprep.subr.bf16.mxu0 0
        %2824 = vmatpush1.bf16.msra.mxu0 0
        %2825 = vmatprep.subr.bf16.mxu0 0
        %2826 = vmatpush1.bf16.msra.mxu0 0
        %2827 = vmatprep.subr.bf16.mxu0 0
        %2828 = vmatpush1.bf16.msra.mxu0 0
        %2829 = vmatprep.subr.bf16.mxu0 0
        %2830 = vmatpush1.bf16.msra.mxu0 0
        %2831 = vmatprep.subr.bf16.mxu0 0
        %2832 = vmatpush1.bf16.msra.mxu0 0
        %2833 = vmatprep.mubr.bf16.mxu0 0
        %2834 = vmatmul.mubr.bf16.gmra.mrb[0].mxu0 %v2796
        %v2835 = vpop.f32.mrb[0].mxu0
        %v2836 = vadd.f32 %v2790, %v2835
        %v2837 = vpop.f32.mrb[0].mxu0
        %v2838 = vpop.f32.mrb[0].mxu0
        %v2839 = vpop.f32.mrb[0].mxu0
        %2840 = vdwg.mxu0
        %2841 = vrot.lane.b32.xlu0 %v2515, 112
        %v2842 = vpop.permute.xlu0 %2841
        %2843 = vrot.lane.b32.xlu0 %v2515, 80
        %v2844 = vpop.permute.xlu0 %2843
        %v2846 = vsel %vm1496, %v2842, 0
        %v2849 = vsel %vm1496, %v2844, 0
        %2851 = vmatprep.subr.bf16.mxu0 0
        %2852 = vmatpush1.bf16.xpose.msra.mxu0 %v2849
        %2853 = vmatprep.subr.bf16.mxu0 0
        %2854 = vmatpush1.bf16.xpose.msra.mxu0 0
        %2855 = vmatprep.subr.bf16.mxu0 0
        %2856 = vmatpush1.bf16.xpose.msra.mxu0 0
        %2857 = vmatprep.subr.bf16.mxu0 0
        %2858 = vmatpush1.bf16.xpose.msra.mxu0 0
        %2859 = vmatprep.subr.bf16.mxu0 0
        %2860 = vmatpush1.bf16.xpose.msra.mxu0 0
        %2861 = vmatprep.subr.bf16.mxu0 0
        %2862 = vmatpush1.bf16.xpose.msra.mxu0 0
        %2863 = vmatprep.subr.bf16.mxu0 0
        %2864 = vmatpush1.bf16.xpose.msra.mxu0 0
        %2865 = vmatprep.subr.bf16.mxu0 0
        %2866 = vmatpush1.bf16.xpose.msra.mxu0 0
        %2867 = vmatprep.subr.bf16.mxu0 0
        %2868 = vmatpush1.bf16.xpose.msra.mxu0 0
        %2869 = vmatprep.subr.bf16.mxu0 0
        %2870 = vmatpush1.bf16.xpose.msra.mxu0 0
        %2871 = vmatprep.subr.bf16.mxu0 0
        %2872 = vmatpush1.bf16.xpose.msra.mxu0 0
        %2873 = vmatprep.subr.bf16.mxu0 0
        %2874 = vmatpush1.bf16.xpose.msra.mxu0 0
        %2875 = vmatprep.subr.bf16.mxu0 0
        %2876 = vmatpush1.bf16.xpose.msra.mxu0 0
        %2877 = vmatprep.subr.bf16.mxu0 0
        %2878 = vmatpush1.bf16.xpose.msra.mxu0 0
        %2879 = vmatprep.subr.bf16.mxu0 0
        %2880 = vmatpush1.bf16.xpose.msra.mxu0 0
        %2881 = vmatprep.subr.bf16.mxu0 0
        %2882 = vmatpush1.bf16.xpose.msra.mxu0 0
        %2883 = vmatprep.mubr.bf16.mxu0 0
        %2884 = vmatmul.mubr.bf16.gmra.mrb[0].mxu0 %v2846
        %v2885 = vpop.f32.mrb[0].mxu0
        %v2886 = vadd.f32 0.0, %v2885
        %v2887 = vpop.f32.mrb[0].mxu0
        %v2888 = vpop.f32.mrb[0].mxu0
        %v2889 = vpop.f32.mrb[0].mxu0
        %2890 = vdwg.mxu0
        %v2891 = vmul.f32 %v2886, 0.35355338
        %v2892 = vsel %vm2570, %v2891, -inf
        %2893 = vmax.xlane.f32.xlu0 %v2892
        %v2894 = vpop.xlane.xlu0 %2893
        %v2895 = vsub.f32 %v2891, %v2894
        %v2896 = vmul.f32 %v2895, 1.442695
        %v2897 = vpow.pop %v2896
        %v2898 = vsel %vm2570, %v2897, 0.0
        %2899 = vadd.xlane.f32.xlu0 %v2898
        %v2900 = vpop.xlane.xlu0 %2899
        %v2901 = vrcp.pop %v2900
        %v2902 = vmul.f32 %v2897, %v2901
        %v2903 = vpack.c.bf16 %v2902, %v2902
        %2904 = vrot.lane.b32.xlu0 %v2515, 48
        %v2905 = vpop.permute.xlu0 %2904
        %v2907 = vsel %vm2585, %v2903, 0
        %v2910 = vand.u32 %v2905, %v2592
        %2912 = vmatprep.subr.bf16.mxu0 0
        %2913 = vmatpush1.bf16.msra.mxu0 %v2910
        %2914 = vmatprep.subr.bf16.mxu0 0
        %2915 = vmatpush1.bf16.msra.mxu0 0
        %2916 = vmatprep.subr.bf16.mxu0 0
        %2917 = vmatpush1.bf16.msra.mxu0 0
        %2918 = vmatprep.subr.bf16.mxu0 0
        %2919 = vmatpush1.bf16.msra.mxu0 0
        %2920 = vmatprep.subr.bf16.mxu0 0
        %2921 = vmatpush1.bf16.msra.mxu0 0
        %2922 = vmatprep.subr.bf16.mxu0 0
        %2923 = vmatpush1.bf16.msra.mxu0 0
        %2924 = vmatprep.subr.bf16.mxu0 0
        %2925 = vmatpush1.bf16.msra.mxu0 0
        %2926 = vmatprep.subr.bf16.mxu0 0
        %2927 = vmatpush1.bf16.msra.mxu0 0
        %2928 = vmatprep.subr.bf16.mxu0 0
        %2929 = vmatpush1.bf16.msra.mxu0 0
        %2930 = vmatprep.subr.bf16.mxu0 0
        %2931 = vmatpush1.bf16.msra.mxu0 0
        %2932 = vmatprep.subr.bf16.mxu0 0
        %2933 = vmatpush1.bf16.msra.mxu0 0
        %2934 = vmatprep.subr.bf16.mxu0 0
        %2935 = vmatpush1.bf16.msra.mxu0 0
        %2936 = vmatprep.subr.bf16.mxu0 0
        %2937 = vmatpush1.bf16.msra.mxu0 0
        %2938 = vmatprep.subr.bf16.mxu0 0
        %2939 = vmatpush1.bf16.msra.mxu0 0
        %2940 = vmatprep.subr.bf16.mxu0 0
        %2941 = vmatpush1.bf16.msra.mxu0 0
        %2942 = vmatprep.subr.bf16.mxu0 0
        %2943 = vmatpush1.bf16.msra.mxu0 0
        %2944 = vmatprep.mubr.bf16.mxu0 0
        %2945 = vmatmul.mubr.bf16.gmra.mrb[0].mxu0 %v2907
        %v2946 = vpop.f32.mrb[0].mxu0
        %v2947 = vadd.f32 0.0, %v2946
        %v2948 = vpop.f32.mrb[0].mxu0
        %v2949 = vpop.f32.mrb[0].mxu0
        %v2950 = vpop.f32.mrb[0].mxu0
        %2951 = vdwg.mxu0
        %v2952 = vpack.c.bf16 %v2947, %v2947
        %v2954 = vsel %vm1496, %v2952, 0
        %v2957 = vsel %vm1568, %v2518, 0
        %2959 = vmatprep.subr.bf16.mxu0 0
        %2960 = vmatpush1.bf16.msra.mxu0 %v2957
        %2961 = vmatprep.subr.bf16.mxu0 0
        %2962 = vmatpush1.bf16.msra.mxu0 0
        %2963 = vmatprep.subr.bf16.mxu0 0
        %2964 = vmatpush1.bf16.msra.mxu0 0
        %2965 = vmatprep.subr.bf16.mxu0 0
        %2966 = vmatpush1.bf16.msra.mxu0 0
        %2967 = vmatprep.subr.bf16.mxu0 0
        %2968 = vmatpush1.bf16.msra.mxu0 0
        %2969 = vmatprep.subr.bf16.mxu0 0
        %2970 = vmatpush1.bf16.msra.mxu0 0
        %2971 = vmatprep.subr.bf16.mxu0 0
        %2972 = vmatpush1.bf16.msra.mxu0 0
        %2973 = vmatprep.subr.bf16.mxu0 0
        %2974 = vmatpush1.bf16.msra.mxu0 0
        %2975 = vmatprep.subr.bf16.mxu0 0
        %2976 = vmatpush1.bf16.msra.mxu0 0
        %2977 = vmatprep.subr.bf16.mxu0 0
        %2978 = vmatpush1.bf16.msra.mxu0 0
        %2979 = vmatprep.subr.bf16.mxu0 0
        %2980 = vmatpush1.bf16.msra.mxu0 0
        %2981 = vmatprep.subr.bf16.mxu0 0
        %2982 = vmatpush1.bf16.msra.mxu0 0
        %2983 = vmatprep.subr.bf16.mxu0 0
        %2984 = vmatpush1.bf16.msra.mxu0 0
        %2985 = vmatprep.subr.bf16.mxu0 0
        %2986 = vmatpush1.bf16.msra.mxu0 0
        %2987 = vmatprep.subr.bf16.mxu0 0
        %2988 = vmatpush1.bf16.msra.mxu0 0
        %2989 = vmatprep.subr.bf16.mxu0 0
        %2990 = vmatpush1.bf16.msra.mxu0 0
        %2991 = vmatprep.mubr.bf16.mxu0 0
        %2992 = vmatmul.mubr.bf16.gmra.mrb[0].mxu0 %v2954
        %v2993 = vpop.f32.mrb[0].mxu0
        %v2994 = vadd.f32 0.0, %v2993
        %v2995 = vpop.f32.mrb[0].mxu0
        %v2996 = vpop.f32.mrb[0].mxu0
        %v2997 = vpop.f32.mrb[0].mxu0
        %2998 = vdwg.mxu0
        %v2999 = vadd.f32 %v2836, %v2994
        %3000 = vrot.lane.b32.xlu0 %v2515, 104
        %v3001 = vpop.permute.xlu0 %3000
        %3002 = vrot.lane.b32.xlu0 %v2515, 72
        %v3003 = vpop.permute.xlu0 %3002
        %v3005 = vsel %vm1496, %v3001, 0
        %v3008 = vsel %vm1496, %v3003, 0
        %3010 = vmatprep.subr.bf16.mxu0 0
        %3011 = vmatpush1.bf16.xpose.msra.mxu0 %v3008
        %3012 = vmatprep.subr.bf16.mxu0 0
        %3013 = vmatpush1.bf16.xpose.msra.mxu0 0
        %3014 = vmatprep.subr.bf16.mxu0 0
        %3015 = vmatpush1.bf16.xpose.msra.mxu0 0
        %3016 = vmatprep.subr.bf16.mxu0 0
        %3017 = vmatpush1.bf16.xpose.msra.mxu0 0
        %3018 = vmatprep.subr.bf16.mxu0 0
        %3019 = vmatpush1.bf16.xpose.msra.mxu0 0
        %3020 = vmatprep.subr.bf16.mxu0 0
        %3021 = vmatpush1.bf16.xpose.msra.mxu0 0
        %3022 = vmatprep.subr.bf16.mxu0 0
        %3023 = vmatpush1.bf16.xpose.msra.mxu0 0
        %3024 = vmatprep.subr.bf16.mxu0 0
        %3025 = vmatpush1.bf16.xpose.msra.mxu0 0
        %3026 = vmatprep.subr.bf16.mxu0 0
        %3027 = vmatpush1.bf16.xpose.msra.mxu0 0
        %3028 = vmatprep.subr.bf16.mxu0 0
        %3029 = vmatpush1.bf16.xpose.msra.mxu0 0
        %3030 = vmatprep.subr.bf16.mxu0 0
        %3031 = vmatpush1.bf16.xpose.msra.mxu0 0
        %3032 = vmatprep.subr.bf16.mxu0 0
        %3033 = vmatpush1.bf16.xpose.msra.mxu0 0
        %3034 = vmatprep.subr.bf16.mxu0 0
        %3035 = vmatpush1.bf16.xpose.msra.mxu0 0
        %3036 = vmatprep.subr.bf16.mxu0 0
        %3037 = vmatpush1.bf16.xpose.msra.mxu0 0
        %3038 = vmatprep.subr.bf16.mxu0 0
        %3039 = vmatpush1.bf16.xpose.msra.mxu0 0
        %3040 = vmatprep.subr.bf16.mxu0 0
        %3041 = vmatpush1.bf16.xpose.msra.mxu0 0
        %3042 = vmatprep.mubr.bf16.mxu0 0
        %3043 = vmatmul.mubr.bf16.gmra.mrb[0].mxu0 %v3005
        %v3044 = vpop.f32.mrb[0].mxu0
        %v3045 = vadd.f32 0.0, %v3044
        %v3046 = vpop.f32.mrb[0].mxu0
        %v3047 = vpop.f32.mrb[0].mxu0
        %v3048 = vpop.f32.mrb[0].mxu0
        %3049 = vdwg.mxu0
        %v3050 = vmul.f32 %v3045, 0.35355338
        %v3051 = vsel %vm2570, %v3050, -inf
        %3052 = vmax.xlane.f32.xlu0 %v3051
        %v3053 = vpop.xlane.xlu0 %3052
        %v3054 = vsub.f32 %v3050, %v3053
        %v3055 = vmul.f32 %v3054, 1.442695
        %v3056 = vpow.pop %v3055
        %v3057 = vsel %vm2570, %v3056, 0.0
        %3058 = vadd.xlane.f32.xlu0 %v3057
        %v3059 = vpop.xlane.xlu0 %3058
        %v3060 = vrcp.pop %v3059
        %v3061 = vmul.f32 %v3056, %v3060
        %v3062 = vpack.c.bf16 %v3061, %v3061
        %3063 = vrot.lane.b32.xlu0 %v2515, 40
        %v3064 = vpop.permute.xlu0 %3063
        %v3066 = vsel %vm2585, %v3062, 0
        %v3069 = vand.u32 %v3064, %v2592
        %3071 = vmatprep.subr.bf16.mxu0 0
        %3072 = vmatpush1.bf16.msra.mxu0 %v3069
        %3073 = vmatprep.subr.bf16.mxu0 0
        %3074 = vmatpush1.bf16.msra.mxu0 0
        %3075 = vmatprep.subr.bf16.mxu0 0
        %3076 = vmatpush1.bf16.msra.mxu0 0
        %3077 = vmatprep.subr.bf16.mxu0 0
        %3078 = vmatpush1.bf16.msra.mxu0 0
        %3079 = vmatprep.subr.bf16.mxu0 0
        %3080 = vmatpush1.bf16.msra.mxu0 0
        %3081 = vmatprep.subr.bf16.mxu0 0
        %3082 = vmatpush1.bf16.msra.mxu0 0
        %3083 = vmatprep.subr.bf16.mxu0 0
        %3084 = vmatpush1.bf16.msra.mxu0 0
        %3085 = vmatprep.subr.bf16.mxu0 0
        %3086 = vmatpush1.bf16.msra.mxu0 0
        %3087 = vmatprep.subr.bf16.mxu0 0
        %3088 = vmatpush1.bf16.msra.mxu0 0
        %3089 = vmatprep.subr.bf16.mxu0 0
        %3090 = vmatpush1.bf16.msra.mxu0 0
        %3091 = vmatprep.subr.bf16.mxu0 0
        %3092 = vmatpush1.bf16.msra.mxu0 0
        %3093 = vmatprep.subr.bf16.mxu0 0
        %3094 = vmatpush1.bf16.msra.mxu0 0
        %3095 = vmatprep.subr.bf16.mxu0 0
        %3096 = vmatpush1.bf16.msra.mxu0 0
        %3097 = vmatprep.subr.bf16.mxu0 0
        %3098 = vmatpush1.bf16.msra.mxu0 0
        %3099 = vmatprep.subr.bf16.mxu0 0
        %3100 = vmatpush1.bf16.msra.mxu0 0
        %3101 = vmatprep.subr.bf16.mxu0 0
        %3102 = vmatpush1.bf16.msra.mxu0 0
        %3103 = vmatprep.mubr.bf16.mxu0 0
        %3104 = vmatmul.mubr.bf16.gmra.mrb[0].mxu0 %v3066
        %v3105 = vpop.f32.mrb[0].mxu0
        %v3106 = vadd.f32 0.0, %v3105
        %v3107 = vpop.f32.mrb[0].mxu0
        %v3108 = vpop.f32.mrb[0].mxu0
        %v3109 = vpop.f32.mrb[0].mxu0
        %3110 = vdwg.mxu0
        %v3111 = vpack.c.bf16 %v3106, %v3106
        %v3113 = vsel %vm1496, %v3111, 0
        %v3116 = vsel %vm1568, %v2519, 0
        %3118 = vmatprep.subr.bf16.mxu0 0
        %3119 = vmatpush1.bf16.msra.mxu0 %v3116
        %3120 = vmatprep.subr.bf16.mxu0 0
        %3121 = vmatpush1.bf16.msra.mxu0 0
        %3122 = vmatprep.subr.bf16.mxu0 0
        %3123 = vmatpush1.bf16.msra.mxu0 0
        %3124 = vmatprep.subr.bf16.mxu0 0
        %3125 = vmatpush1.bf16.msra.mxu0 0
        %3126 = vmatprep.subr.bf16.mxu0 0
        %3127 = vmatpush1.bf16.msra.mxu0 0
        %3128 = vmatprep.subr.bf16.mxu0 0
        %3129 = vmatpush1.bf16.msra.mxu0 0
        %3130 = vmatprep.subr.bf16.mxu0 0
        %3131 = vmatpush1.bf16.msra.mxu0 0
        %3132 = vmatprep.subr.bf16.mxu0 0
        %3133 = vmatpush1.bf16.msra.mxu0 0
        %3134 = vmatprep.subr.bf16.mxu0 0
        %3135 = vmatpush1.bf16.msra.mxu0 0
        %3136 = vmatprep.subr.bf16.mxu0 0
        %3137 = vmatpush1.bf16.msra.mxu0 0
        %3138 = vmatprep.subr.bf16.mxu0 0
        %3139 = vmatpush1.bf16.msra.mxu0 0
        %3140 = vmatprep.subr.bf16.mxu0 0
        %3141 = vmatpush1.bf16.msra.mxu0 0
        %3142 = vmatprep.subr.bf16.mxu0 0
        %3143 = vmatpush1.bf16.msra.mxu0 0
        %3144 = vmatprep.subr.bf16.mxu0 0
        %3145 = vmatpush1.bf16.msra.mxu0 0
        %3146 = vmatprep.subr.bf16.mxu0 0
        %3147 = vmatpush1.bf16.msra.mxu0 0
        %3148 = vmatprep.subr.bf16.mxu0 0
        %3149 = vmatpush1.bf16.msra.mxu0 0
        %3150 = vmatprep.mubr.bf16.mxu0 0
        %3151 = vmatmul.mubr.bf16.gmra.mrb[0].mxu0 %v3113
        %v3152 = vpop.f32.mrb[0].mxu0
        %v3153 = vadd.f32 0.0, %v3152
        %v3154 = vpop.f32.mrb[0].mxu0
        %v3155 = vpop.f32.mrb[0].mxu0
        %v3156 = vpop.f32.mrb[0].mxu0
        %3157 = vdwg.mxu0
        %v3158 = vadd.f32 %v2999, %v3153
        %v3159 = vld [vmem:[%s47] sm:$0x1]
        %v3161 = vlaneseq
        %v3162 = vshrl.u32 %v3161, 7
        %v3163 = vsub.s32 0, %v3162
        %v3164 = vrot.slane %v3159, %v3163
        %v3166 = vadd.f32 %v3158, %v3164
        %v3167 = vadd.f32 %v2443, %v3166
        %vm3168 = vcmask 256000
        %v3169 = vsel %vm3168, %v3167, 0.0
        %3170 = vadd.xlane.f32.xlu0 %v3169
        %v3171 = vpop.xlane.xlu0 %3170
        %v3172 = vmul.f32 %v3171, %v2150
        %v3173 = vsub.f32 %v3167, %v3172
        %v3174 = vmul.f32 %v3173, %v3173
        %v3175 = vsel %vm3168, %v3174, 0.0
        %3176 = vadd.xlane.f32.xlu0 %v3175
        %v3177 = vpop.xlane.xlu0 %3176
        %v3178 = vmul.f32 %v3177, %v2150
        %v3179 = vadd.f32 %v3178, 1e-05
        %v3180 = vrsqrt.pop %v3179
        %v3181 = vmul.f32 %v3173, %v3180
        %v3182 = vld [vmem:[%s69] sm:$0x1]
        %v3184 = vlaneseq
        %v3185 = vshrl.u32 %v3184, 7
        %v3186 = vsub.s32 0, %v3185
        %v3187 = vrot.slane %v3182, %v3186
        %v3189 = vmul.f32 %v3181, %v3187
        %v3190 = vld [vmem:[%s71] sm:$0x1]
        %v3192 = vlaneseq
        %v3193 = vshrl.u32 %v3192, 7
        %v3194 = vsub.s32 0, %v3193
        %v3195 = vrot.slane %v3190, %v3194
        %v3197 = vadd.f32 %v3189, %v3195
        %v3198 = vpack.c.bf16 %v3197, %v3197
        %v3199 = vld [vmem:[%s49] sm:$0xf]
        %v3200 = vld [vmem:[%s49 + $0x4] sm:$0xf]
        %v3201 = vld [vmem:[%s49 + $0x8] sm:$0xf]
        %v3202 = vld [vmem:[%s49 + $0xc] sm:$0xf]
        %v3203 = vld [vmem:[#allocation2] sm:$0x1]
        %v3205 = vlaneseq
        %v3206 = vshrl.u32 %v3205, 7
        %v3207 = vsub.s32 0, %v3206
        %v3208 = vrot.slane %v3203, %v3207
        %v3214 = vunpack.c.l.b16 %v3199
        %v3215 = vunpack.c.l.b16 %v3200
        %v3216 = vunpack.c.l.b16 %v3201
        %v3217 = vunpack.c.l.b16 %v3202
        %v3218 = vpack.c.b16 %v3215, %v3214
        %v3219 = vpack.c.b16 %v3217, %v3216
        %v3223 = vsel %vm1419, %v3198, 0
        %3225 = vmatprep.subr.bf16.mxu0 0
        %3226 = vmatpush1.bf16.msra.mxu0 %v3218
        %3227 = vmatprep.subr.bf16.mxu0 0
        %3228 = vmatpush1.bf16.msra.mxu0 %v3219
        %3229 = vmatprep.subr.bf16.mxu0 0
        %3230 = vmatpush1.bf16.msra.mxu0 0
        %3231 = vmatprep.subr.bf16.mxu0 0
        %3232 = vmatpush1.bf16.msra.mxu0 0
        %3233 = vmatprep.subr.bf16.mxu0 0
        %3234 = vmatpush1.bf16.msra.mxu0 0
        %3235 = vmatprep.subr.bf16.mxu0 0
        %3236 = vmatpush1.bf16.msra.mxu0 0
        %3237 = vmatprep.subr.bf16.mxu0 0
        %3238 = vmatpush1.bf16.msra.mxu0 0
        %3239 = vmatprep.subr.bf16.mxu0 0
        %3240 = vmatpush1.bf16.msra.mxu0 0
        %3241 = vmatprep.subr.bf16.mxu0 0
        %3242 = vmatpush1.bf16.msra.mxu0 0
        %3243 = vmatprep.subr.bf16.mxu0 0
        %3244 = vmatpush1.bf16.msra.mxu0 0
        %3245 = vmatprep.subr.bf16.mxu0 0
        %3246 = vmatpush1.bf16.msra.mxu0 0
        %3247 = vmatprep.subr.bf16.mxu0 0
        %3248 = vmatpush1.bf16.msra.mxu0 0
        %3249 = vmatprep.subr.bf16.mxu0 0
        %3250 = vmatpush1.bf16.msra.mxu0 0
        %3251 = vmatprep.subr.bf16.mxu0 0
        %3252 = vmatpush1.bf16.msra.mxu0 0
        %3253 = vmatprep.subr.bf16.mxu0 0
        %3254 = vmatpush1.bf16.msra.mxu0 0
        %3255 = vmatprep.subr.bf16.mxu0 0
        %3256 = vmatpush1.bf16.msra.mxu0 0
        %3257 = vmatprep.mubr.bf16.mxu0 0
        %3258 = vmatmul.mubr.bf16.gmra.mrb[0].mxu0 %v3223
        %v3259 = vpop.f32.mrb[0].mxu0
        %v3260 = vadd.f32 %v3208, %v3259
        %v3261 = vpop.f32.mrb[0].mxu0
        %v3262 = vpop.f32.mrb[0].mxu0
        %v3263 = vpop.f32.mrb[0].mxu0
        %3264 = vdwg.mxu0
        %v3265 = vpack.c.bf16 %v2386, %v2386
        %v3266 = vld [vmem:[%s53] sm:$0xf]
        %v3267 = vld [vmem:[%s53 + $0x4] sm:$0xf]
        %v3268 = vld [vmem:[%s53 + $0x8] sm:$0xf]
        %v3269 = vld [vmem:[%s53 + $0xc] sm:$0xf]
        %v3270 = vld [vmem:[#allocation5] sm:$0x1]
        %v3272 = vlaneseq
        %v3273 = vshrl.u32 %v3272, 7
        %v3274 = vsub.s32 0, %v3273
        %v3275 = vrot.slane %v3270, %v3274
        %v3281 = vunpack.c.l.b16 %v3266
        %v3282 = vunpack.c.l.b16 %v3267
        %v3283 = vunpack.c.l.b16 %v3268
        %v3284 = vunpack.c.l.b16 %v3269
        %v3285 = vpack.c.b16 %v3282, %v3281
        %v3286 = vpack.c.b16 %v3284, %v3283
        %v3290 = vsel %vm1419, %v3265, 0
        %3292 = vmatprep.subr.bf16.mxu0 0
        %3293 = vmatpush1.bf16.msra.mxu0 %v3285
        %3294 = vmatprep.subr.bf16.mxu0 0
        %3295 = vmatpush1.bf16.msra.mxu0 %v3286
        %3296 = vmatprep.subr.bf16.mxu0 0
        %3297 = vmatpush1.bf16.msra.mxu0 0
        %3298 = vmatprep.subr.bf16.mxu0 0
        %3299 = vmatpush1.bf16.msra.mxu0 0
        %3300 = vmatprep.subr.bf16.mxu0 0
        %3301 = vmatpush1.bf16.msra.mxu0 0
        %3302 = vmatprep.subr.bf16.mxu0 0
        %3303 = vmatpush1.bf16.msra.mxu0 0
        %3304 = vmatprep.subr.bf16.mxu0 0
        %3305 = vmatpush1.bf16.msra.mxu0 0
        %3306 = vmatprep.subr.bf16.mxu0 0
        %3307 = vmatpush1.bf16.msra.mxu0 0
        %3308 = vmatprep.subr.bf16.mxu0 0
        %3309 = vmatpush1.bf16.msra.mxu0 0
        %3310 = vmatprep.subr.bf16.mxu0 0
        %3311 = vmatpush1.bf16.msra.mxu0 0
        %3312 = vmatprep.subr.bf16.mxu0 0
        %3313 = vmatpush1.bf16.msra.mxu0 0
        %3314 = vmatprep.subr.bf16.mxu0 0
        %3315 = vmatpush1.bf16.msra.mxu0 0
        %3316 = vmatprep.subr.bf16.mxu0 0
        %3317 = vmatpush1.bf16.msra.mxu0 0
        %3318 = vmatprep.subr.bf16.mxu0 0
        %3319 = vmatpush1.bf16.msra.mxu0 0
        %3320 = vmatprep.subr.bf16.mxu0 0
        %3321 = vmatpush1.bf16.msra.mxu0 0
        %3322 = vmatprep.subr.bf16.mxu0 0
        %3323 = vmatpush1.bf16.msra.mxu0 0
        %3324 = vmatprep.mubr.bf16.mxu0 0
        %3325 = vmatmul.mubr.bf16.gmra.mrb[0].mxu0 %v3290
        %v3326 = vpop.f32.mrb[0].mxu0
        %v3327 = vadd.f32 %v3275, %v3326
        %v3328 = vpop.f32.mrb[0].mxu0
        %v3329 = vpop.f32.mrb[0].mxu0
        %v3330 = vpop.f32.mrb[0].mxu0
        %3331 = vdwg.mxu0
        %v3332 = vpack.c.bf16 %v3260, %v3260
        %v3333 = vpack.c.bf16 %v3327, %v3327
        %v3334 = vld [vmem:[%s57] sm:$0xf]
        %v3335 = vld [vmem:[%s57 + $0x4] sm:$0xf]
        %v3336 = vld [vmem:[%s57 + $0x8] sm:$0xf]
        %v3337 = vld [vmem:[%s57 + $0xc] sm:$0xf]
        %v3339 = vsel %vm1496, %v3332, 0
        %v3342 = vsel %vm1496, %v3333, 0
        %3344 = vmatprep.subr.bf16.mxu0 0
        %3345 = vmatpush1.bf16.xpose.msra.mxu0 %v3342
        %3346 = vmatprep.subr.bf16.mxu0 0
        %3347 = vmatpush1.bf16.xpose.msra.mxu0 0
        %3348 = vmatprep.subr.bf16.mxu0 0
        %3349 = vmatpush1.bf16.xpose.msra.mxu0 0
        %3350 = vmatprep.subr.bf16.mxu0 0
        %3351 = vmatpush1.bf16.xpose.msra.mxu0 0
        %3352 = vmatprep.subr.bf16.mxu0 0
        %3353 = vmatpush1.bf16.xpose.msra.mxu0 0
        %3354 = vmatprep.subr.bf16.mxu0 0
        %3355 = vmatpush1.bf16.xpose.msra.mxu0 0
        %3356 = vmatprep.subr.bf16.mxu0 0
        %3357 = vmatpush1.bf16.xpose.msra.mxu0 0
        %3358 = vmatprep.subr.bf16.mxu0 0
        %3359 = vmatpush1.bf16.xpose.msra.mxu0 0
        %3360 = vmatprep.subr.bf16.mxu0 0
        %3361 = vmatpush1.bf16.xpose.msra.mxu0 0
        %3362 = vmatprep.subr.bf16.mxu0 0
        %3363 = vmatpush1.bf16.xpose.msra.mxu0 0
        %3364 = vmatprep.subr.bf16.mxu0 0
        %3365 = vmatpush1.bf16.xpose.msra.mxu0 0
        %3366 = vmatprep.subr.bf16.mxu0 0
        %3367 = vmatpush1.bf16.xpose.msra.mxu0 0
        %3368 = vmatprep.subr.bf16.mxu0 0
        %3369 = vmatpush1.bf16.xpose.msra.mxu0 0
        %3370 = vmatprep.subr.bf16.mxu0 0
        %3371 = vmatpush1.bf16.xpose.msra.mxu0 0
        %3372 = vmatprep.subr.bf16.mxu0 0
        %3373 = vmatpush1.bf16.xpose.msra.mxu0 0
        %3374 = vmatprep.subr.bf16.mxu0 0
        %3375 = vmatpush1.bf16.xpose.msra.mxu0 0
        %3376 = vmatprep.mubr.bf16.mxu0 0
        %3377 = vmatmul.mubr.bf16.gmra.mrb[0].mxu0 %v3339
        %v3378 = vpop.f32.mrb[0].mxu0
        %v3379 = vadd.f32 0.0, %v3378
        %v3380 = vpop.f32.mrb[0].mxu0
        %v3381 = vpop.f32.mrb[0].mxu0
        %v3382 = vpop.f32.mrb[0].mxu0
        %3383 = vdwg.mxu0
        %v3384 = vmul.f32 %v3379, 0.35355338
        %v3385 = vadd.f32 %v3384, %v1548
        %vm3386 = vcmask 59392
        %v3387 = vsel %vm3386, %v3385, -inf
        %3388 = vmax.xlane.f32.xlu0 %v3387
        %v3389 = vpop.xlane.xlu0 %3388
        %v3390 = vsub.f32 %v3385, %v3389
        %v3391 = vmul.f32 %v3390, 1.442695
        %v3392 = vpow.pop %v3391
        %v3393 = vsel %vm3386, %v3392, 0.0
        %3394 = vadd.xlane.f32.xlu0 %v3393
        %v3395 = vpop.xlane.xlu0 %3394
        %v3396 = vrcp.pop %v3395
        %v3397 = vmul.f32 %v3392, %v3396
        %v3398 = vpack.c.bf16 %v3397, %v3397
        %3400 = vrot.lane.b32.xlu0 %v3333, 96
        %v3401 = vpop.permute.xlu0 %3400
        %v3403 = vsel %vm1496, %v3398, 0
        %v3406 = vsel %vm1568, %v3401, 0
        %3408 = vmatprep.subr.bf16.mxu0 0
        %3409 = vmatpush1.bf16.msra.mxu0 %v3406
        %3410 = vmatprep.subr.bf16.mxu0 0
        %3411 = vmatpush1.bf16.msra.mxu0 0
        %3412 = vmatprep.subr.bf16.mxu0 0
        %3413 = vmatpush1.bf16.msra.mxu0 0
        %3414 = vmatprep.subr.bf16.mxu0 0
        %3415 = vmatpush1.bf16.msra.mxu0 0
        %3416 = vmatprep.subr.bf16.mxu0 0
        %3417 = vmatpush1.bf16.msra.mxu0 0
        %3418 = vmatprep.subr.bf16.mxu0 0
        %3419 = vmatpush1.bf16.msra.mxu0 0
        %3420 = vmatprep.subr.bf16.mxu0 0
        %3421 = vmatpush1.bf16.msra.mxu0 0
        %3422 = vmatprep.subr.bf16.mxu0 0
        %3423 = vmatpush1.bf16.msra.mxu0 0
        %3424 = vmatprep.subr.bf16.mxu0 0
        %3425 = vmatpush1.bf16.msra.mxu0 0
        %3426 = vmatprep.subr.bf16.mxu0 0
        %3427 = vmatpush1.bf16.msra.mxu0 0
        %3428 = vmatprep.subr.bf16.mxu0 0
        %3429 = vmatpush1.bf16.msra.mxu0 0
        %3430 = vmatprep.subr.bf16.mxu0 0
        %3431 = vmatpush1.bf16.msra.mxu0 0
        %3432 = vmatprep.subr.bf16.mxu0 0
        %3433 = vmatpush1.bf16.msra.mxu0 0
        %3434 = vmatprep.subr.bf16.mxu0 0
        %3435 = vmatpush1.bf16.msra.mxu0 0
        %3436 = vmatprep.subr.bf16.mxu0 0
        %3437 = vmatpush1.bf16.msra.mxu0 0
        %3438 = vmatprep.subr.bf16.mxu0 0
        %3439 = vmatpush1.bf16.msra.mxu0 0
        %3440 = vmatprep.mubr.bf16.mxu0 0
        %3441 = vmatmul.mubr.bf16.gmra.mrb[0].mxu0 %v3403
        %v3442 = vpop.f32.mrb[0].mxu0
        %v3443 = vadd.f32 0.0, %v3442
        %v3444 = vpop.f32.mrb[0].mxu0
        %v3445 = vpop.f32.mrb[0].mxu0
        %v3446 = vpop.f32.mrb[0].mxu0
        %3447 = vdwg.mxu0
        %v3448 = vpack.c.bf16 %v3443, %v3443
        %3450 = vrot.lane.b32.xlu0 %v3332, 120
        %v3451 = vpop.permute.xlu0 %3450
        %3452 = vrot.lane.b32.xlu0 %v3333, 120
        %v3453 = vpop.permute.xlu0 %3452
        %v3455 = vsel %vm1496, %v3451, 0
        %v3458 = vsel %vm1496, %v3453, 0
        %3460 = vmatprep.subr.bf16.mxu0 0
        %3461 = vmatpush1.bf16.xpose.msra.mxu0 %v3458
        %3462 = vmatprep.subr.bf16.mxu0 0
        %3463 = vmatpush1.bf16.xpose.msra.mxu0 0
        %3464 = vmatprep.subr.bf16.mxu0 0
        %3465 = vmatpush1.bf16.xpose.msra.mxu0 0
        %3466 = vmatprep.subr.bf16.mxu0 0
        %3467 = vmatpush1.bf16.xpose.msra.mxu0 0
        %3468 = vmatprep.subr.bf16.mxu0 0
        %3469 = vmatpush1.bf16.xpose.msra.mxu0 0
        %3470 = vmatprep.subr.bf16.mxu0 0
        %3471 = vmatpush1.bf16.xpose.msra.mxu0 0
        %3472 = vmatprep.subr.bf16.mxu0 0
        %3473 = vmatpush1.bf16.xpose.msra.mxu0 0
        %3474 = vmatprep.subr.bf16.mxu0 0
        %3475 = vmatpush1.bf16.xpose.msra.mxu0 0
        %3476 = vmatprep.subr.bf16.mxu0 0
        %3477 = vmatpush1.bf16.xpose.msra.mxu0 0
        %3478 = vmatprep.subr.bf16.mxu0 0
        %3479 = vmatpush1.bf16.xpose.msra.mxu0 0
        %3480 = vmatprep.subr.bf16.mxu0 0
        %3481 = vmatpush1.bf16.xpose.msra.mxu0 0
        %3482 = vmatprep.subr.bf16.mxu0 0
        %3483 = vmatpush1.bf16.xpose.msra.mxu0 0
        %3484 = vmatprep.subr.bf16.mxu0 0
        %3485 = vmatpush1.bf16.xpose.msra.mxu0 0
        %3486 = vmatprep.subr.bf16.mxu0 0
        %3487 = vmatpush1.bf16.xpose.msra.mxu0 0
        %3488 = vmatprep.subr.bf16.mxu0 0
        %3489 = vmatpush1.bf16.xpose.msra.mxu0 0
        %3490 = vmatprep.subr.bf16.mxu0 0
        %3491 = vmatpush1.bf16.xpose.msra.mxu0 0
        %3492 = vmatprep.mubr.bf16.mxu0 0
        %3493 = vmatmul.mubr.bf16.gmra.mrb[0].mxu0 %v3455
        %v3494 = vpop.f32.mrb[0].mxu0
        %v3495 = vadd.f32 0.0, %v3494
        %v3496 = vpop.f32.mrb[0].mxu0
        %v3497 = vpop.f32.mrb[0].mxu0
        %v3498 = vpop.f32.mrb[0].mxu0
        %3499 = vdwg.mxu0
        %v3500 = vmul.f32 %v3495, 0.35355338
        %v3501 = vadd.f32 %v3500, %v1548
        %v3502 = vsel %vm3386, %v3501, -inf
        %3503 = vmax.xlane.f32.xlu0 %v3502
        %v3504 = vpop.xlane.xlu0 %3503
        %v3505 = vsub.f32 %v3501, %v3504
        %v3506 = vmul.f32 %v3505, 1.442695
        %v3507 = vpow.pop %v3506
        %v3508 = vsel %vm3386, %v3507, 0.0
        %3509 = vadd.xlane.f32.xlu0 %v3508
        %v3510 = vpop.xlane.xlu0 %3509
        %v3511 = vrcp.pop %v3510
        %v3512 = vmul.f32 %v3507, %v3511
        %v3513 = vpack.c.bf16 %v3512, %v3512
        %3514 = vrot.lane.b32.xlu0 %v3333, 88
        %v3515 = vpop.permute.xlu0 %3514
        %v3517 = vsel %vm1496, %v3513, 0
        %v3520 = vsel %vm1568, %v3515, 0
        %3522 = vmatprep.subr.bf16.mxu0 0
        %3523 = vmatpush1.bf16.msra.mxu0 %v3520
        %3524 = vmatprep.subr.bf16.mxu0 0
        %3525 = vmatpush1.bf16.msra.mxu0 0
        %3526 = vmatprep.subr.bf16.mxu0 0
        %3527 = vmatpush1.bf16.msra.mxu0 0
        %3528 = vmatprep.subr.bf16.mxu0 0
        %3529 = vmatpush1.bf16.msra.mxu0 0
        %3530 = vmatprep.subr.bf16.mxu0 0
        %3531 = vmatpush1.bf16.msra.mxu0 0
        %3532 = vmatprep.subr.bf16.mxu0 0
        %3533 = vmatpush1.bf16.msra.mxu0 0
        %3534 = vmatprep.subr.bf16.mxu0 0
        %3535 = vmatpush1.bf16.msra.mxu0 0
        %3536 = vmatprep.subr.bf16.mxu0 0
        %3537 = vmatpush1.bf16.msra.mxu0 0
        %3538 = vmatprep.subr.bf16.mxu0 0
        %3539 = vmatpush1.bf16.msra.mxu0 0
        %3540 = vmatprep.subr.bf16.mxu0 0
        %3541 = vmatpush1.bf16.msra.mxu0 0
        %3542 = vmatprep.subr.bf16.mxu0 0
        %3543 = vmatpush1.bf16.msra.mxu0 0
        %3544 = vmatprep.subr.bf16.mxu0 0
        %3545 = vmatpush1.bf16.msra.mxu0 0
        %3546 = vmatprep.subr.bf16.mxu0 0
        %3547 = vmatpush1.bf16.msra.mxu0 0
        %3548 = vmatprep.subr.bf16.mxu0 0
        %3549 = vmatpush1.bf16.msra.mxu0 0
        %3550 = vmatprep.subr.bf16.mxu0 0
        %3551 = vmatpush1.bf16.msra.mxu0 0
        %3552 = vmatprep.subr.bf16.mxu0 0
        %3553 = vmatpush1.bf16.msra.mxu0 0
        %3554 = vmatprep.mubr.bf16.mxu0 0
        %3555 = vmatmul.mubr.bf16.gmra.mrb[0].mxu0 %v3517
        %v3556 = vpop.f32.mrb[0].mxu0
        %v3557 = vadd.f32 0.0, %v3556
        %v3558 = vpop.f32.mrb[0].mxu0
        %v3559 = vpop.f32.mrb[0].mxu0
        %v3560 = vpop.f32.mrb[0].mxu0
        %3561 = vdwg.mxu0
        %v3562 = vpack.c.bf16 %v3557, %v3557
        %v3564 = vsel %vm1496, %v3562, 0
        %v3567 = vsel %vm1568, %v3335, 0
        %3569 = vmatprep.subr.bf16.mxu0 0
        %3570 = vmatpush1.bf16.msra.mxu0 %v3567
        %3571 = vmatprep.subr.bf16.mxu0 0
        %3572 = vmatpush1.bf16.msra.mxu0 0
        %3573 = vmatprep.subr.bf16.mxu0 0
        %3574 = vmatpush1.bf16.msra.mxu0 0
        %3575 = vmatprep.subr.bf16.mxu0 0
        %3576 = vmatpush1.bf16.msra.mxu0 0
        %3577 = vmatprep.subr.bf16.mxu0 0
        %3578 = vmatpush1.bf16.msra.mxu0 0
        %3579 = vmatprep.subr.bf16.mxu0 0
        %3580 = vmatpush1.bf16.msra.mxu0 0
        %3581 = vmatprep.subr.bf16.mxu0 0
        %3582 = vmatpush1.bf16.msra.mxu0 0
        %3583 = vmatprep.subr.bf16.mxu0 0
        %3584 = vmatpush1.bf16.msra.mxu0 0
        %3585 = vmatprep.subr.bf16.mxu0 0
        %3586 = vmatpush1.bf16.msra.mxu0 0
        %3587 = vmatprep.subr.bf16.mxu0 0
        %3588 = vmatpush1.bf16.msra.mxu0 0
        %3589 = vmatprep.subr.bf16.mxu0 0
        %3590 = vmatpush1.bf16.msra.mxu0 0
        %3591 = vmatprep.subr.bf16.mxu0 0
        %3592 = vmatpush1.bf16.msra.mxu0 0
        %3593 = vmatprep.subr.bf16.mxu0 0
        %3594 = vmatpush1.bf16.msra.mxu0 0
        %3595 = vmatprep.subr.bf16.mxu0 0
        %3596 = vmatpush1.bf16.msra.mxu0 0
        %3597 = vmatprep.subr.bf16.mxu0 0
        %3598 = vmatpush1.bf16.msra.mxu0 0
        %3599 = vmatprep.subr.bf16.mxu0 0
        %3600 = vmatpush1.bf16.msra.mxu0 0
        %3601 = vmatprep.mubr.bf16.mxu0 0
        %3602 = vmatmul.mubr.bf16.gmra.mrb[0].mxu0 %v3564
        %v3603 = vpop.f32.mrb[0].mxu0
        %v3604 = vadd.f32 0.0, %v3603
        %v3605 = vpop.f32.mrb[0].mxu0
        %v3606 = vpop.f32.mrb[0].mxu0
        %v3607 = vpop.f32.mrb[0].mxu0
        %3608 = vdwg.mxu0
        %v3610 = vsel %vm1496, %v3448, 0
        %v3613 = vsel %vm1568, %v3334, 0
        %3615 = vmatprep.subr.bf16.mxu0 0
        %3616 = vmatpush1.bf16.msra.mxu0 %v3613
        %3617 = vmatprep.subr.bf16.mxu0 0
        %3618 = vmatpush1.bf16.msra.mxu0 0
        %3619 = vmatprep.subr.bf16.mxu0 0
        %3620 = vmatpush1.bf16.msra.mxu0 0
        %3621 = vmatprep.subr.bf16.mxu0 0
        %3622 = vmatpush1.bf16.msra.mxu0 0
        %3623 = vmatprep.subr.bf16.mxu0 0
        %3624 = vmatpush1.bf16.msra.mxu0 0
        %3625 = vmatprep.subr.bf16.mxu0 0
        %3626 = vmatpush1.bf16.msra.mxu0 0
        %3627 = vmatprep.subr.bf16.mxu0 0
        %3628 = vmatpush1.bf16.msra.mxu0 0
        %3629 = vmatprep.subr.bf16.mxu0 0
        %3630 = vmatpush1.bf16.msra.mxu0 0
        %3631 = vmatprep.subr.bf16.mxu0 0
        %3632 = vmatpush1.bf16.msra.mxu0 0
        %3633 = vmatprep.subr.bf16.mxu0 0
        %3634 = vmatpush1.bf16.msra.mxu0 0
        %3635 = vmatprep.subr.bf16.mxu0 0
        %3636 = vmatpush1.bf16.msra.mxu0 0
        %3637 = vmatprep.subr.bf16.mxu0 0
        %3638 = vmatpush1.bf16.msra.mxu0 0
        %3639 = vmatprep.subr.bf16.mxu0 0
        %3640 = vmatpush1.bf16.msra.mxu0 0
        %3641 = vmatprep.subr.bf16.mxu0 0
        %3642 = vmatpush1.bf16.msra.mxu0 0
        %3643 = vmatprep.subr.bf16.mxu0 0
        %3644 = vmatpush1.bf16.msra.mxu0 0
        %3645 = vmatprep.subr.bf16.mxu0 0
        %3646 = vmatpush1.bf16.msra.mxu0 0
        %3647 = vmatprep.mubr.bf16.mxu0 0
        %3648 = vmatmul.mubr.bf16.gmra.mrb[0].mxu0 %v3610
        %v3649 = vpop.f32.mrb[0].mxu0
        %v3650 = vadd.f32 %v3604, %v3649
        %v3651 = vpop.f32.mrb[0].mxu0
        %v3652 = vpop.f32.mrb[0].mxu0
        %v3653 = vpop.f32.mrb[0].mxu0
        %3654 = vdwg.mxu0
        %3655 = vrot.lane.b32.xlu0 %v3332, 112
        %v3656 = vpop.permute.xlu0 %3655
        %3657 = vrot.lane.b32.xlu0 %v3333, 112
        %v3658 = vpop.permute.xlu0 %3657
        %v3660 = vsel %vm1496, %v3656, 0
        %v3663 = vsel %vm1496, %v3658, 0
        %3665 = vmatprep.subr.bf16.mxu0 0
        %3666 = vmatpush1.bf16.xpose.msra.mxu0 %v3663
        %3667 = vmatprep.subr.bf16.mxu0 0
        %3668 = vmatpush1.bf16.xpose.msra.mxu0 0
        %3669 = vmatprep.subr.bf16.mxu0 0
        %3670 = vmatpush1.bf16.xpose.msra.mxu0 0
        %3671 = vmatprep.subr.bf16.mxu0 0
        %3672 = vmatpush1.bf16.xpose.msra.mxu0 0
        %3673 = vmatprep.subr.bf16.mxu0 0
        %3674 = vmatpush1.bf16.xpose.msra.mxu0 0
        %3675 = vmatprep.subr.bf16.mxu0 0
        %3676 = vmatpush1.bf16.xpose.msra.mxu0 0
        %3677 = vmatprep.subr.bf16.mxu0 0
        %3678 = vmatpush1.bf16.xpose.msra.mxu0 0
        %3679 = vmatprep.subr.bf16.mxu0 0
        %3680 = vmatpush1.bf16.xpose.msra.mxu0 0
        %3681 = vmatprep.subr.bf16.mxu0 0
        %3682 = vmatpush1.bf16.xpose.msra.mxu0 0
        %3683 = vmatprep.subr.bf16.mxu0 0
        %3684 = vmatpush1.bf16.xpose.msra.mxu0 0
        %3685 = vmatprep.subr.bf16.mxu0 0
        %3686 = vmatpush1.bf16.xpose.msra.mxu0 0
        %3687 = vmatprep.subr.bf16.mxu0 0
        %3688 = vmatpush1.bf16.xpose.msra.mxu0 0
        %3689 = vmatprep.subr.bf16.mxu0 0
        %3690 = vmatpush1.bf16.xpose.msra.mxu0 0
        %3691 = vmatprep.subr.bf16.mxu0 0
        %3692 = vmatpush1.bf16.xpose.msra.mxu0 0
        %3693 = vmatprep.subr.bf16.mxu0 0
        %3694 = vmatpush1.bf16.xpose.msra.mxu0 0
        %3695 = vmatprep.subr.bf16.mxu0 0
        %3696 = vmatpush1.bf16.xpose.msra.mxu0 0
        %3697 = vmatprep.mubr.bf16.mxu0 0
        %3698 = vmatmul.mubr.bf16.gmra.mrb[0].mxu0 %v3660
        %v3699 = vpop.f32.mrb[0].mxu0
        %v3700 = vadd.f32 0.0, %v3699
        %v3701 = vpop.f32.mrb[0].mxu0
        %v3702 = vpop.f32.mrb[0].mxu0
        %v3703 = vpop.f32.mrb[0].mxu0
        %3704 = vdwg.mxu0
        %v3705 = vmul.f32 %v3700, 0.35355338
        %v3706 = vadd.f32 %v3705, %v1548
        %v3707 = vsel %vm3386, %v3706, -inf
        %3708 = vmax.xlane.f32.xlu0 %v3707
        %v3709 = vpop.xlane.xlu0 %3708
        %v3710 = vsub.f32 %v3706, %v3709
        %v3711 = vmul.f32 %v3710, 1.442695
        %v3712 = vpow.pop %v3711
        %v3713 = vsel %vm3386, %v3712, 0.0
        %3714 = vadd.xlane.f32.xlu0 %v3713
        %v3715 = vpop.xlane.xlu0 %3714
        %v3716 = vrcp.pop %v3715
        %v3717 = vmul.f32 %v3712, %v3716
        %v3718 = vpack.c.bf16 %v3717, %v3717
        %3719 = vrot.lane.b32.xlu0 %v3333, 80
        %v3720 = vpop.permute.xlu0 %3719
        %v3722 = vsel %vm1496, %v3718, 0
        %v3725 = vsel %vm1568, %v3720, 0
        %3727 = vmatprep.subr.bf16.mxu0 0
        %3728 = vmatpush1.bf16.msra.mxu0 %v3725
        %3729 = vmatprep.subr.bf16.mxu0 0
        %3730 = vmatpush1.bf16.msra.mxu0 0
        %3731 = vmatprep.subr.bf16.mxu0 0
        %3732 = vmatpush1.bf16.msra.mxu0 0
        %3733 = vmatprep.subr.bf16.mxu0 0
        %3734 = vmatpush1.bf16.msra.mxu0 0
        %3735 = vmatprep.subr.bf16.mxu0 0
        %3736 = vmatpush1.bf16.msra.mxu0 0
        %3737 = vmatprep.subr.bf16.mxu0 0
        %3738 = vmatpush1.bf16.msra.mxu0 0
        %3739 = vmatprep.subr.bf16.mxu0 0
        %3740 = vmatpush1.bf16.msra.mxu0 0
        %3741 = vmatprep.subr.bf16.mxu0 0
        %3742 = vmatpush1.bf16.msra.mxu0 0
        %3743 = vmatprep.subr.bf16.mxu0 0
        %3744 = vmatpush1.bf16.msra.mxu0 0
        %3745 = vmatprep.subr.bf16.mxu0 0
        %3746 = vmatpush1.bf16.msra.mxu0 0
        %3747 = vmatprep.subr.bf16.mxu0 0
        %3748 = vmatpush1.bf16.msra.mxu0 0
        %3749 = vmatprep.subr.bf16.mxu0 0
        %3750 = vmatpush1.bf16.msra.mxu0 0
        %3751 = vmatprep.subr.bf16.mxu0 0
        %3752 = vmatpush1.bf16.msra.mxu0 0
        %3753 = vmatprep.subr.bf16.mxu0 0
        %3754 = vmatpush1.bf16.msra.mxu0 0
        %3755 = vmatprep.subr.bf16.mxu0 0
        %3756 = vmatpush1.bf16.msra.mxu0 0
        %3757 = vmatprep.subr.bf16.mxu0 0
        %3758 = vmatpush1.bf16.msra.mxu0 0
        %3759 = vmatprep.mubr.bf16.mxu0 0
        %3760 = vmatmul.mubr.bf16.gmra.mrb[0].mxu0 %v3722
        %v3761 = vpop.f32.mrb[0].mxu0
        %v3762 = vadd.f32 0.0, %v3761
        %v3763 = vpop.f32.mrb[0].mxu0
        %v3764 = vpop.f32.mrb[0].mxu0
        %v3765 = vpop.f32.mrb[0].mxu0
        %3766 = vdwg.mxu0
        %v3767 = vpack.c.bf16 %v3762, %v3762
        %v3769 = vsel %vm1496, %v3767, 0
        %v3772 = vsel %vm1568, %v3336, 0
        %3774 = vmatprep.subr.bf16.mxu0 0
        %3775 = vmatpush1.bf16.msra.mxu0 %v3772
        %3776 = vmatprep.subr.bf16.mxu0 0
        %3777 = vmatpush1.bf16.msra.mxu0 0
        %3778 = vmatprep.subr.bf16.mxu0 0
        %3779 = vmatpush1.bf16.msra.mxu0 0
        %3780 = vmatprep.subr.bf16.mxu0 0
        %3781 = vmatpush1.bf16.msra.mxu0 0
        %3782 = vmatprep.subr.bf16.mxu0 0
        %3783 = vmatpush1.bf16.msra.mxu0 0
        %3784 = vmatprep.subr.bf16.mxu0 0
        %3785 = vmatpush1.bf16.msra.mxu0 0
        %3786 = vmatprep.subr.bf16.mxu0 0
        %3787 = vmatpush1.bf16.msra.mxu0 0
        %3788 = vmatprep.subr.bf16.mxu0 0
        %3789 = vmatpush1.bf16.msra.mxu0 0
        %3790 = vmatprep.subr.bf16.mxu0 0
        %3791 = vmatpush1.bf16.msra.mxu0 0
        %3792 = vmatprep.subr.bf16.mxu0 0
        %3793 = vmatpush1.bf16.msra.mxu0 0
        %3794 = vmatprep.subr.bf16.mxu0 0
        %3795 = vmatpush1.bf16.msra.mxu0 0
        %3796 = vmatprep.subr.bf16.mxu0 0
        %3797 = vmatpush1.bf16.msra.mxu0 0
        %3798 = vmatprep.subr.bf16.mxu0 0
        %3799 = vmatpush1.bf16.msra.mxu0 0
        %3800 = vmatprep.subr.bf16.mxu0 0
        %3801 = vmatpush1.bf16.msra.mxu0 0
        %3802 = vmatprep.subr.bf16.mxu0 0
        %3803 = vmatpush1.bf16.msra.mxu0 0
        %3804 = vmatprep.subr.bf16.mxu0 0
        %3805 = vmatpush1.bf16.msra.mxu0 0
        %3806 = vmatprep.mubr.bf16.mxu0 0
        %3807 = vmatmul.mubr.bf16.gmra.mrb[0].mxu0 %v3769
        %v3808 = vpop.f32.mrb[0].mxu0
        %v3809 = vadd.f32 0.0, %v3808
        %v3810 = vpop.f32.mrb[0].mxu0
        %v3811 = vpop.f32.mrb[0].mxu0
        %v3812 = vpop.f32.mrb[0].mxu0
        %3813 = vdwg.mxu0
        %v3814 = vadd.f32 %v3650, %v3809
        %3815 = vrot.lane.b32.xlu0 %v3332, 104
        %v3816 = vpop.permute.xlu0 %3815
        %3817 = vrot.lane.b32.xlu0 %v3333, 104
        %v3818 = vpop.permute.xlu0 %3817
        %v3820 = vsel %vm1496, %v3816, 0
        %v3823 = vsel %vm1496, %v3818, 0
        %3825 = vmatprep.subr.bf16.mxu0 0
        %3826 = vmatpush1.bf16.xpose.msra.mxu0 %v3823
        %3827 = vmatprep.subr.bf16.mxu0 0
        %3828 = vmatpush1.bf16.xpose.msra.mxu0 0
        %3829 = vmatprep.subr.bf16.mxu0 0
        %3830 = vmatpush1.bf16.xpose.msra.mxu0 0
        %3831 = vmatprep.subr.bf16.mxu0 0
        %3832 = vmatpush1.bf16.xpose.msra.mxu0 0
        %3833 = vmatprep.subr.bf16.mxu0 0
        %3834 = vmatpush1.bf16.xpose.msra.mxu0 0
        %3835 = vmatprep.subr.bf16.mxu0 0
        %3836 = vmatpush1.bf16.xpose.msra.mxu0 0
        %3837 = vmatprep.subr.bf16.mxu0 0
        %3838 = vmatpush1.bf16.xpose.msra.mxu0 0
        %3839 = vmatprep.subr.bf16.mxu0 0
        %3840 = vmatpush1.bf16.xpose.msra.mxu0 0
        %3841 = vmatprep.subr.bf16.mxu0 0
        %3842 = vmatpush1.bf16.xpose.msra.mxu0 0
        %3843 = vmatprep.subr.bf16.mxu0 0
        %3844 = vmatpush1.bf16.xpose.msra.mxu0 0
        %3845 = vmatprep.subr.bf16.mxu0 0
        %3846 = vmatpush1.bf16.xpose.msra.mxu0 0
        %3847 = vmatprep.subr.bf16.mxu0 0
        %3848 = vmatpush1.bf16.xpose.msra.mxu0 0
        %3849 = vmatprep.subr.bf16.mxu0 0
        %3850 = vmatpush1.bf16.xpose.msra.mxu0 0
        %3851 = vmatprep.subr.bf16.mxu0 0
        %3852 = vmatpush1.bf16.xpose.msra.mxu0 0
        %3853 = vmatprep.subr.bf16.mxu0 0
        %3854 = vmatpush1.bf16.xpose.msra.mxu0 0
        %3855 = vmatprep.subr.bf16.mxu0 0
        %3856 = vmatpush1.bf16.xpose.msra.mxu0 0
        %3857 = vmatprep.mubr.bf16.mxu0 0
        %3858 = vmatmul.mubr.bf16.gmra.mrb[0].mxu0 %v3820
        %v3859 = vpop.f32.mrb[0].mxu0
        %v3860 = vadd.f32 0.0, %v3859
        %v3861 = vpop.f32.mrb[0].mxu0
        %v3862 = vpop.f32.mrb[0].mxu0
        %v3863 = vpop.f32.mrb[0].mxu0
        %3864 = vdwg.mxu0
        %v3865 = vmul.f32 %v3860, 0.35355338
        %v3866 = vadd.f32 %v3865, %v1548
        %v3867 = vsel %vm3386, %v3866, -inf
        %3868 = vmax.xlane.f32.xlu0 %v3867
        %v3869 = vpop.xlane.xlu0 %3868
        %v3870 = vsub.f32 %v3866, %v3869
        %v3871 = vmul.f32 %v3870, 1.442695
        %v3872 = vpow.pop %v3871
        %v3873 = vsel %vm3386, %v3872, 0.0
        %3874 = vadd.xlane.f32.xlu0 %v3873
        %v3875 = vpop.xlane.xlu0 %3874
        %v3876 = vrcp.pop %v3875
        %v3877 = vmul.f32 %v3872, %v3876
        %v3878 = vpack.c.bf16 %v3877, %v3877
        %3879 = vrot.lane.b32.xlu0 %v3333, 72
        %v3880 = vpop.permute.xlu0 %3879
        %v3882 = vsel %vm1496, %v3878, 0
        %v3885 = vsel %vm1568, %v3880, 0
        %3887 = vmatprep.subr.bf16.mxu0 0
        %3888 = vmatpush1.bf16.msra.mxu0 %v3885
        %3889 = vmatprep.subr.bf16.mxu0 0
        %3890 = vmatpush1.bf16.msra.mxu0 0
        %3891 = vmatprep.subr.bf16.mxu0 0
        %3892 = vmatpush1.bf16.msra.mxu0 0
        %3893 = vmatprep.subr.bf16.mxu0 0
        %3894 = vmatpush1.bf16.msra.mxu0 0
        %3895 = vmatprep.subr.bf16.mxu0 0
        %3896 = vmatpush1.bf16.msra.mxu0 0
        %3897 = vmatprep.subr.bf16.mxu0 0
        %3898 = vmatpush1.bf16.msra.mxu0 0
        %3899 = vmatprep.subr.bf16.mxu0 0
        %3900 = vmatpush1.bf16.msra.mxu0 0
        %3901 = vmatprep.subr.bf16.mxu0 0
        %3902 = vmatpush1.bf16.msra.mxu0 0
        %3903 = vmatprep.subr.bf16.mxu0 0
        %3904 = vmatpush1.bf16.msra.mxu0 0
        %3905 = vmatprep.subr.bf16.mxu0 0
        %3906 = vmatpush1.bf16.msra.mxu0 0
        %3907 = vmatprep.subr.bf16.mxu0 0
        %3908 = vmatpush1.bf16.msra.mxu0 0
        %3909 = vmatprep.subr.bf16.mxu0 0
        %3910 = vmatpush1.bf16.msra.mxu0 0
        %3911 = vmatprep.subr.bf16.mxu0 0
        %3912 = vmatpush1.bf16.msra.mxu0 0
        %3913 = vmatprep.subr.bf16.mxu0 0
        %3914 = vmatpush1.bf16.msra.mxu0 0
        %3915 = vmatprep.subr.bf16.mxu0 0
        %3916 = vmatpush1.bf16.msra.mxu0 0
        %3917 = vmatprep.subr.bf16.mxu0 0
        %3918 = vmatpush1.bf16.msra.mxu0 0
        %3919 = vmatprep.mubr.bf16.mxu0 0
        %3920 = vmatmul.mubr.bf16.gmra.mrb[0].mxu0 %v3882
        %v3921 = vpop.f32.mrb[0].mxu0
        %v3922 = vadd.f32 0.0, %v3921
        %v3923 = vpop.f32.mrb[0].mxu0
        %v3924 = vpop.f32.mrb[0].mxu0
        %v3925 = vpop.f32.mrb[0].mxu0
        %3926 = vdwg.mxu0
        %v3927 = vpack.c.bf16 %v3922, %v3922
        %v3929 = vsel %vm1496, %v3927, 0
        %v3932 = vsel %vm1568, %v3337, 0
        %3934 = vmatprep.subr.bf16.mxu0 0
        %3935 = vmatpush1.bf16.msra.mxu0 %v3932
        %3936 = vmatprep.subr.bf16.mxu0 0
        %3937 = vmatpush1.bf16.msra.mxu0 0
        %3938 = vmatprep.subr.bf16.mxu0 0
        %3939 = vmatpush1.bf16.msra.mxu0 0
        %3940 = vmatprep.subr.bf16.mxu0 0
        %3941 = vmatpush1.bf16.msra.mxu0 0
        %3942 = vmatprep.subr.bf16.mxu0 0
        %3943 = vmatpush1.bf16.msra.mxu0 0
        %3944 = vmatprep.subr.bf16.mxu0 0
        %3945 = vmatpush1.bf16.msra.mxu0 0
        %3946 = vmatprep.subr.bf16.mxu0 0
        %3947 = vmatpush1.bf16.msra.mxu0 0
        %3948 = vmatprep.subr.bf16.mxu0 0
        %3949 = vmatpush1.bf16.msra.mxu0 0
        %3950 = vmatprep.subr.bf16.mxu0 0
        %3951 = vmatpush1.bf16.msra.mxu0 0
        %3952 = vmatprep.subr.bf16.mxu0 0
        %3953 = vmatpush1.bf16.msra.mxu0 0
        %3954 = vmatprep.subr.bf16.mxu0 0
        %3955 = vmatpush1.bf16.msra.mxu0 0
        %3956 = vmatprep.subr.bf16.mxu0 0
        %3957 = vmatpush1.bf16.msra.mxu0 0
        %3958 = vmatprep.subr.bf16.mxu0 0
        %3959 = vmatpush1.bf16.msra.mxu0 0
        %3960 = vmatprep.subr.bf16.mxu0 0
        %3961 = vmatpush1.bf16.msra.mxu0 0
        %3962 = vmatprep.subr.bf16.mxu0 0
        %3963 = vmatpush1.bf16.msra.mxu0 0
        %3964 = vmatprep.subr.bf16.mxu0 0
        %3965 = vmatpush1.bf16.msra.mxu0 0
        %3966 = vmatprep.mubr.bf16.mxu0 0
        %3967 = vmatmul.mubr.bf16.gmra.mrb[0].mxu0 %v3929
        %v3968 = vpop.f32.mrb[0].mxu0
        %v3969 = vadd.f32 0.0, %v3968
        %v3970 = vpop.f32.mrb[0].mxu0
        %v3971 = vpop.f32.mrb[0].mxu0
        %v3972 = vpop.f32.mrb[0].mxu0
        %3973 = vdwg.mxu0
        %v3974 = vadd.f32 %v3814, %v3969
        %v3975 = vld [vmem:[#allocation7] sm:$0x1]
        %v3977 = vlaneseq
        %v3978 = vshrl.u32 %v3977, 7
        %v3979 = vsub.s32 0, %v3978
        %v3980 = vrot.slane %v3975, %v3979
        %v3982 = vadd.f32 %v3974, %v3980
        %v3983 = vadd.f32 %v3197, %v3982
        %v3984 = vsel %vm3168, %v3983, 0.0
        %3985 = vadd.xlane.f32.xlu0 %v3984
        %v3986 = vpop.xlane.xlu0 %3985
        %v3987 = vmul.f32 %v3986, %v2150
        %v3988 = vsub.f32 %v3983, %v3987
        %v3989 = vmul.f32 %v3988, %v3988
        %v3990 = vsel %vm3168, %v3989, 0.0
        %3991 = vadd.xlane.f32.xlu0 %v3990
        %v3992 = vpop.xlane.xlu0 %3991
        %v3993 = vmul.f32 %v3992, %v2150
        %v3994 = vadd.f32 %v3993, 1e-05
        %v3995 = vrsqrt.pop %v3994
        %v3996 = vmul.f32 %v3988, %v3995
        %v3997 = vld [vmem:[%s73] sm:$0x1]
        %v3999 = vlaneseq
        %v4000 = vshrl.u32 %v3999, 7
        %v4001 = vsub.s32 0, %v4000
        %v4002 = vrot.slane %v3997, %v4001
        %v4004 = vmul.f32 %v3996, %v4002
        %v4005 = vld [vmem:[%s75] sm:$0x1]
        %v4007 = vlaneseq
        %v4008 = vshrl.u32 %v4007, 7
        %v4009 = vsub.s32 0, %v4008
        %v4010 = vrot.slane %v4005, %v4009
        %v4012 = vadd.f32 %v4004, %v4010
        %v4013 = vpack.c.bf16 %v4012, %v4012
        %v4014 = vld [vmem:[%s61] sm:$0xf]
        %v4015 = vld [vmem:[%s61 + $0x4] sm:$0xf]
        %v4016 = vld [vmem:[%s61 + $0x8] sm:$0xf]
        %v4017 = vld [vmem:[%s61 + $0xc] sm:$0xf]
        %v4018 = vld [vmem:[#allocation8] sm:$0x1]
        %v4020 = vlaneseq
        %v4021 = vshrl.u32 %v4020, 7
        %v4022 = vsub.s32 0, %v4021
        %v4023 = vrot.slane %v4018, %v4022
        %v4029 = vunpack.c.l.b16 %v4014
        %v4030 = vunpack.c.l.b16 %v4015
        %v4031 = vunpack.c.l.b16 %v4016
        %v4032 = vunpack.c.l.b16 %v4017
        %v4033 = vpack.c.b16 %v4030, %v4029
        %v4034 = vpack.c.b16 %v4032, %v4031
        %v4038 = vsel %vm1419, %v4013, 0
        %4040 = vmatprep.subr.bf16.mxu0 0
        %4041 = vmatpush1.bf16.msra.mxu0 %v4033
        %4042 = vmatprep.subr.bf16.mxu0 0
        %4043 = vmatpush1.bf16.msra.mxu0 %v4034
        %4044 = vmatprep.subr.bf16.mxu0 0
        %4045 = vmatpush1.bf16.msra.mxu0 0
        %4046 = vmatprep.subr.bf16.mxu0 0
        %4047 = vmatpush1.bf16.msra.mxu0 0
        %4048 = vmatprep.subr.bf16.mxu0 0
        %4049 = vmatpush1.bf16.msra.mxu0 0
        %4050 = vmatprep.subr.bf16.mxu0 0
        %4051 = vmatpush1.bf16.msra.mxu0 0
        %4052 = vmatprep.subr.bf16.mxu0 0
        %4053 = vmatpush1.bf16.msra.mxu0 0
        %4054 = vmatprep.subr.bf16.mxu0 0
        %4055 = vmatpush1.bf16.msra.mxu0 0
        %4056 = vmatprep.subr.bf16.mxu0 0
        %4057 = vmatpush1.bf16.msra.mxu0 0
        %4058 = vmatprep.subr.bf16.mxu0 0
        %4059 = vmatpush1.bf16.msra.mxu0 0
        %4060 = vmatprep.subr.bf16.mxu0 0
        %4061 = vmatpush1.bf16.msra.mxu0 0
        %4062 = vmatprep.subr.bf16.mxu0 0
        %4063 = vmatpush1.bf16.msra.mxu0 0
        %4064 = vmatprep.subr.bf16.mxu0 0
        %4065 = vmatpush1.bf16.msra.mxu0 0
        %4066 = vmatprep.subr.bf16.mxu0 0
        %4067 = vmatpush1.bf16.msra.mxu0 0
        %4068 = vmatprep.subr.bf16.mxu0 0
        %4069 = vmatpush1.bf16.msra.mxu0 0
        %4070 = vmatprep.subr.bf16.mxu0 0
        %4071 = vmatpush1.bf16.msra.mxu0 0
        %4072 = vmatprep.mubr.bf16.mxu0 0
        %4073 = vmatmul.mubr.bf16.gmra.mrb[0].mxu0 %v4038
        %v4074 = vpop.f32.mrb[0].mxu0
        %v4075 = vadd.f32 %v4023, %v4074
        %v4076 = vpop.f32.mrb[0].mxu0
        %v4077 = vpop.f32.mrb[0].mxu0
        %v4078 = vpop.f32.mrb[0].mxu0
        %4079 = vdwg.mxu0
        %v4080 = vmax.f32 %v4075, 0.0
        %v4081 = vpack.c.bf16 %v4080, %v4080
        %v4082 = vld [vmem:[%s65] sm:$0xf]
        %v4083 = vld [vmem:[%s65 + $0x4] sm:$0xf]
        %v4084 = vld [vmem:[%s65 + $0x8] sm:$0xf]
        %v4085 = vld [vmem:[%s65 + $0xc] sm:$0xf]
        %v4086 = vld [vmem:[%s65 + $0x10] sm:$0xf]
        %v4087 = vld [vmem:[%s65 + $0x14] sm:$0xf]
        %v4088 = vld [vmem:[%s65 + $0x18] sm:$0xf]
        %v4089 = vld [vmem:[%s65 + $0x1c] sm:$0xf]
        %v4090 = vld [vmem:[%s65 + $0x20] sm:$0xf]
        %v4091 = vld [vmem:[%s65 + $0x24] sm:$0xf]
        %v4092 = vld [vmem:[%s65 + $0x28] sm:$0xf]
        %v4093 = vld [vmem:[%s65 + $0x2c] sm:$0xf]
        %v4094 = vld [vmem:[%s65 + $0x30] sm:$0xf]
        %v4095 = vld [vmem:[%s65 + $0x34] sm:$0xf]
        %v4096 = vld [vmem:[%s65 + $0x38] sm:$0xf]
        %v4097 = vld [vmem:[%s65 + $0x3c] sm:$0xf]
        %v4098 = vld [vmem:[%s67] sm:$0x1]
        %v4100 = vlaneseq
        %v4101 = vshrl.u32 %v4100, 7
        %v4102 = vsub.s32 0, %v4101
        %v4103 = vrot.slane %v4098, %v4102
        %v4121 = vunpack.c.l.b16 %v4082
        %v4122 = vunpack.c.l.b16 %v4083
        %v4123 = vunpack.c.l.b16 %v4084
        %v4124 = vunpack.c.l.b16 %v4085
        %v4125 = vunpack.c.l.b16 %v4086
        %v4126 = vunpack.c.l.b16 %v4087
        %v4127 = vunpack.c.l.b16 %v4088
        %v4128 = vunpack.c.l.b16 %v4089
        %v4129 = vunpack.c.l.b16 %v4090
        %v4130 = vunpack.c.l.b16 %v4091
        %v4131 = vunpack.c.l.b16 %v4092
        %v4132 = vunpack.c.l.b16 %v4093
        %v4133 = vunpack.c.l.b16 %v4094
        %v4134 = vunpack.c.l.b16 %v4095
        %v4135 = vunpack.c.l.b16 %v4096
        %v4136 = vunpack.c.l.b16 %v4097
        %v4137 = vpack.c.b16 %v4122, %v4121
        %v4138 = vpack.c.b16 %v4124, %v4123
        %v4139 = vpack.c.b16 %v4126, %v4125
        %v4140 = vpack.c.b16 %v4128, %v4127
        %v4141 = vpack.c.b16 %v4130, %v4129
        %v4142 = vpack.c.b16 %v4132, %v4131
        %v4143 = vpack.c.b16 %v4134, %v4133
        %v4144 = vpack.c.b16 %v4136, %v4135
        %4153 = vmatprep.subr.bf16.mxu0 0
        %4154 = vmatpush1.bf16.msra.mxu0 %v4137
        %4155 = vmatprep.subr.bf16.mxu0 0
        %4156 = vmatpush1.bf16.msra.mxu0 %v4138
        %4157 = vmatprep.subr.bf16.mxu0 0
        %4158 = vmatpush1.bf16.msra.mxu0 %v4139
        %4159 = vmatprep.subr.bf16.mxu0 0
        %4160 = vmatpush1.bf16.msra.mxu0 %v4140
        %4161 = vmatprep.subr.bf16.mxu0 0
        %4162 = vmatpush1.bf16.msra.mxu0 %v4141
        %4163 = vmatprep.subr.bf16.mxu0 0
        %4164 = vmatpush1.bf16.msra.mxu0 %v4142
        %4165 = vmatprep.subr.bf16.mxu0 0
        %4166 = vmatpush1.bf16.msra.mxu0 %v4143
        %4167 = vmatprep.subr.bf16.mxu0 0
        %4168 = vmatpush1.bf16.msra.mxu0 %v4144
        %4169 = vmatprep.subr.bf16.mxu0 0
        %4170 = vmatpush1.bf16.msra.mxu0 0
        %4171 = vmatprep.subr.bf16.mxu0 0
        %4172 = vmatpush1.bf16.msra.mxu0 0
        %4173 = vmatprep.subr.bf16.mxu0 0
        %4174 = vmatpush1.bf16.msra.mxu0 0
        %4175 = vmatprep.subr.bf16.mxu0 0
        %4176 = vmatpush1.bf16.msra.mxu0 0
        %4177 = vmatprep.subr.bf16.mxu0 0
        %4178 = vmatpush1.bf16.msra.mxu0 0
        %4179 = vmatprep.subr.bf16.mxu0 0
        %4180 = vmatpush1.bf16.msra.mxu0 0
        %4181 = vmatprep.subr.bf16.mxu0 0
        %4182 = vmatpush1.bf16.msra.mxu0 0
        %4183 = vmatprep.subr.bf16.mxu0 0
        %4184 = vmatpush1.bf16.msra.mxu0 0
        %4185 = vmatprep.mubr.bf16.mxu0 0
        %4186 = vmatmul.mubr.bf16.gmra.mrb[0].mxu0 %v4081
        %v4187 = vpop.f32.mrb[0].mxu0
        %v4188 = vadd.f32 %v4103, %v4187
        %v4189 = vpop.f32.mrb[0].mxu0
        %v4190 = vpop.f32.mrb[0].mxu0
        %v4191 = vpop.f32.mrb[0].mxu0
        %4192 = vdwg.mxu0
        %v4193 = vadd.f32 %v4012, %v4188
        %v4194 = vsel %vm3168, %v4193, 0.0
        %4195 = vadd.xlane.f32.xlu0 %v4194
        %v4196 = vpop.xlane.xlu0 %4195
        %v4197 = vmul.f32 %v4196, %v2150
        %v4198 = vsub.f32 %v4193, %v4197
        %v4199 = vmul.f32 %v4198, %v4198
        %v4200 = vsel %vm3168, %v4199, 0.0
        %4201 = vadd.xlane.f32.xlu0 %v4200
        %v4202 = vpop.xlane.xlu0 %4201
        %v4203 = vmul.f32 %v4202, %v2150
        %v4204 = vadd.f32 %v4203, 1e-05
        %v4205 = vrsqrt.pop %v4204
        %v4206 = vmul.f32 %v4198, %v4205
        %v4207 = vld [vmem:[%s77] sm:$0x1]
        %v4209 = vlaneseq
        %v4210 = vshrl.u32 %v4209, 7
        %v4211 = vsub.s32 0, %v4210
        %v4212 = vrot.slane %v4207, %v4211
        %v4214 = vmul.f32 %v4206, %v4212
        %v4215 = vld [vmem:[%s79] sm:$0x1]
        %v4217 = vlaneseq
        %v4218 = vshrl.u32 %v4217, 7
        %v4219 = vsub.s32 0, %v4218
        %v4220 = vrot.slane %v4215, %v4219
        %v4222 = vadd.f32 %v4214, %v4220
        %4223 = vst.msk [vmem:[%s1343] sm:$0x7] %vm3168, %v4222
        %s4224 = sand.u32 %s969, 1
        %s4225 = scalar_lea.sflag [#allocation4], %s4224
        %s4226 = sand.u32 %s969, 1
        %s4227 = smul.addr %s4226, 8
        %s4228 = scalar_lea.vmem [#allocation10], %s4227
        %p4229 = scmp.lt.s32.totalorder %s101, 1
        %s4230 = scalar_select %p4229, %s101, 1
        %s4231 = smul.addr %s4230, 4
        %s4232 = scalar_lea.vmem %s83, %s4231
        // Predicated region
        $region197: #{_lambda_.1} parent=179 // pred_check
          %p4233 = pneg %p979
        $region198: #{_lambda_.1} parent=179 // pred_check_branch
          %4235 = sbr.rel (%p4233) target = $region200
        $region199: #{_lambda_.1} parent=179 // pred_region
          %s4237 = ssub.s32 128, 128
          %4238 = vsyncadd %s4225, %s4237
          %s4239 = smul.addr %s101, 128
          %s4240 = scalar_lea.hbm %s81, %s4239
          %s4242 = sshll.u32 %s4228, 4
          %s4243 = int_to_ptr.vmem [resolvable:$true] %s4242
          %4245 = dma.vmem_to_hbm [thread:$0]  %s4243, 128, %s4240, %s4225
        $region200: #{_lambda_.1} parent=179 // pred_fallthru
          _
        // Predicated region
        $region201: #{_lambda_.1} parent=179 // pred_check
          %p4246 = pneg %p1005
        $region202: #{_lambda_.1} parent=179 // pred_check_branch
          %4248 = sbr.rel (%p4246) target = $region204
        $region203: #{_lambda_.1} parent=179 // pred_region
          _
        $region204: #{_lambda_.1} parent=179 // pred_fallthru
          _
      $region180: #{_lambda_.1} parent=5 // pred_fallthru
        _
      %p4249 = scmp.le.s32.totalorder 2, %s96
      // Predicated region
      $region205: #{_lambda_.1} parent=5 // pred_check
        %p4250 = pneg %p4249
      $region206: #{_lambda_.1} parent=5 // pred_check_branch
        %4252 = sbr.rel (%p4250) target = $region208
      $region207: #{_lambda_.1} parent=5 // pred_region
        %s4253 = ssub.s32 %s96, 2
        // Predicated region
        $region209: #{_lambda_.1} parent=207 // pred_check
          %p4254 = pneg %p985
        $region210: #{_lambda_.1} parent=207 // pred_check_branch
          %4256 = sbr.rel (%p4254) target = $region212
        $region211: #{_lambda_.1} parent=207 // pred_region
          %s4257 = sand.u32 %s970, 1
          %s4258 = scalar_lea.sflag [#allocation4], %s4257
          %s4259 = sand.u32 %s970, 1
          %s4260 = smul.addr %s4259, 8
          %s4261 = scalar_lea.vmem [#allocation10], %s4260
          %4262 = dma.done %s4258, 128
        $region212: #{_lambda_.1} parent=207 // pred_fallthru
          _
        // Predicated region
        $region213: #{_lambda_.1} parent=207 // pred_check
          %p4263 = pneg %p1011
        $region214: #{_lambda_.1} parent=207 // pred_check_branch
          %4265 = sbr.rel (%p4263) target = $region216
        $region215: #{_lambda_.1} parent=207 // pred_region
          %p4266 = scmp.lt.s32.totalorder %s102, 1
          %s4267 = scalar_select %p4266, %s102, 1
          %s4268 = smul.addr %s4267, 4
          %s4269 = scalar_lea.vmem %s83, %s4268
        $region216: #{_lambda_.1} parent=207 // pred_fallthru
          _
      $region208: #{_lambda_.1} parent=5 // pred_fallthru
        _
    $region6: #{_lambda_.1} parent=1 // loop_footer
      %s100 = sadd.s32 1, %s96
    $region7: #{_lambda_.1} parent=1 // loop_footer_branch
      %95 = sbr.rel target = $region3
    $region8: #{_lambda_.1} parent=1 // loop_exit
      _
    %4270 = vsyncpa [#allocation3], 1
    %s4271 = scalar_lea.sflag [#allocation3], 1
    %4272 = vsyncpa %s4271, 1
    %4273 = vsyncpa [#allocation6], 1
    %4274 = vsyncpa [#allocation9], 1
    %4275 = vsyncpa [#allocation4], 1
    %s4276 = scalar_lea.sflag [#allocation4], 1
    %4277 = vsyncpa %s4276, 1

</llo_original>
